<compile_context>
chip_gen: v7x
topology: tpu7x:2x2x1
jax: 0.10.0
libtpu: 0.0.40
codegen_flags: <defaults>
</compile_context>

<pallas_src>
import functools
import inspect

import jax
import jax.numpy as jnp
import numpy as np
from jax.experimental import pallas as pl
from jax.experimental.pallas import tpu as pltpu

BN_EPS = 1e-5
HIDDEN = 1000
OUT = 5
HP = 1024    # 1000 padded to lane multiple
OUTP = 128   # 5 padded to minimum lane width

# One-time, import-time capability probe (no dummy compile, no exception swallowing).
_SINGLE_BUFFER_OK = (
    hasattr(pl, "Buffered")
    and "pipeline_mode" in inspect.signature(pl.BlockSpec).parameters
)


def _round_up(n, m):
    return ((n + m - 1) // m) * m


@functools.lru_cache(maxsize=1)
def _is_v7x():
    devs = jax.devices()
    return bool(devs) and "v7" in devs[0].device_kind.lower()


# ----------------------------------------------------------------------------
# Kernel: fused 3-layer MLP (BN already folded into the Linears by the wrapper)
# ----------------------------------------------------------------------------
def _mlp_kernel(x_ref, w1_ref, b1_ref, w2_ref, b2_ref, w3_ref, b3_ref, o_ref):
    """(relu(relu(x @ w1 + b1) @ w2 + b2)) @ w3 + b3, f32 accumulation."""
    x = x_ref[...]
    h = jnp.dot(x, w1_ref[...], preferred_element_type=jnp.float32) + b1_ref[...]
    h = jnp.maximum(h, 0.0)

    h = h.astype(w2_ref.dtype)
    h = jnp.dot(h, w2_ref[...], preferred_element_type=jnp.float32) + b2_ref[...]
    h = jnp.maximum(h, 0.0)

    h = h.astype(w3_ref.dtype)
    o_ref[...] = (jnp.dot(h, w3_ref[...], preferred_element_type=jnp.float32)
                  + b3_ref[...]).astype(o_ref.dtype)


# ----------------------------------------------------------------------------
# One-time parameter preparation (hoisted out of the per-call hot path)
# ----------------------------------------------------------------------------
def _pad2d(a, rows, cols):
    pr, pc = rows - a.shape[0], cols - a.shape[1]
    if pr == 0 and pc == 0:
        return a
    return jnp.pad(a, ((0, pr), (0, pc)))


def _fold_bn(w, b, gamma, beta, mean, var):
    """Fold eval-mode BatchNorm1d into the preceding Linear (PyTorch (out,in) layout)."""
    scale = gamma * jax.lax.rsqrt(var + BN_EPS)           # per output feature
    w_f = w * scale[:, None]
    b_f = (b - mean) * scale + beta
    return w_f, b_f


def prepare_params(params, *, weight_dtype=jnp.bfloat16):
    """Fold BN, transpose to (in, out), pad feature dims, cast weights.

    Call once, reuse the returned dict for every forward call; the per-call
    path then contains only the pallas_call (plus activation padding).
    """
    din = params["w1"].shape[1]
    din_p = _round_up(din, 128)

    w1f, b1f = _fold_bn(params["w1"], params["b1"], params["bn1_gamma"],
                        params["bn1_beta"], params["bn1_mean"], params["bn1_var"])
    w2f, b2f = _fold_bn(params["w2"], params["b2"], params["bn2_gamma"],
                        params["bn2_beta"], params["bn2_mean"], params["bn2_var"])
    w3f, b3f = params["w3"], params["b3"]

    prep = dict(
        w1=_pad2d(w1f.T, din_p, HP).astype(weight_dtype),
        w2=_pad2d(w2f.T, HP, HP).astype(weight_dtype),
        w3=_pad2d(w3f.T, HP, OUTP).astype(weight_dtype),
        # Biases stay f32: they are added after the f32 accumulation.
        b1=_pad2d(b1f.reshape(1, -1), 1, HP).astype(jnp.float32),
        b2=_pad2d(b2f.reshape(1, -1), 1, HP).astype(jnp.float32),
        b3=_pad2d(b3f.reshape(1, -1), 1, OUTP).astype(jnp.float32),
    )
    return jax.device_put(prep)


# ----------------------------------------------------------------------------
# Batch tiling policy
# ----------------------------------------------------------------------------
def _choose_batch_tiling(batch, max_tile_b, *, min_tiles=1):
    """Remainder-aware tiling: tiles divide the (8-aligned) batch tightly."""
    max_tile_b = max(8, (max_tile_b // 8) * 8)
    bp = max(8, _round_up(batch, 8))
    n_tiles = max(min_tiles, -(-bp // max_tile_b))        # ceil division
    tile_b = _round_up(-(-bp // n_tiles), 8)
    return n_tiles * tile_b, tile_b


# ----------------------------------------------------------------------------
# Forward
# ----------------------------------------------------------------------------
@functools.partial(jax.jit, static_argnames=("tile_b", "padded_batch"))
def _forward_impl(x, prep, *, tile_b, padded_batch):
    din_p = prep["w1"].shape[0]
    wdt = prep["w1"].dtype
    xp = _pad2d(x, padded_batch, din_p).astype(wdt)

    const = lambda i: (0, 0)   # grid-invariant operands: fetched once, kept resident
    wkw = dict(pipeline_mode=pl.Buffered(1)) if _SINGLE_BUFFER_OK else {}

    # Static VMEM budget estimate -> vmem_limit in [32 MiB, 64 MiB] (v7x-safe).
    itemsize = jnp.dtype(wdt).itemsize
    weight_bytes = (prep["w1"].size + prep["w2"].size + prep["w3"].size) * itemsize
    est = weight_bytes * (1 if _SINGLE_BUFFER_OK else 2)
    est += 2 * tile_b * din_p * itemsize          # x tile, double-buffered
    est += 2 * tile_b * OUTP * 4                  # out tile, double-buffered
    est += 3 * tile_b * HP * 4                    # f32 intermediates headroom
    vmem_limit = min(max(32 << 20, int(est * 1.5)), 64 << 20)

    out_padded = pl.pallas_call(
        _mlp_kernel,
        out_shape=jax.ShapeDtypeStruct((padded_batch, OUTP), jnp.float32),
        grid_spec=pltpu.PrefetchScalarGridSpec(
            num_scalar_prefetch=0,
            grid=(padded_batch // tile_b,),
            in_specs=[
                pl.BlockSpec((tile_b, din_p), lambda i: (i, 0)),   # x tile
                pl.BlockSpec((din_p, HP), const, **wkw),           # w1 (BN-folded)
                pl.BlockSpec((1, HP), const, **wkw),               # b1
                pl.BlockSpec((HP, HP), const, **wkw),              # w2 (BN-folded)
                pl.BlockSpec((1, HP), const, **wkw),               # b2
                pl.BlockSpec((HP, OUTP), const, **wkw),            # w3
                pl.BlockSpec((1, OUTP), const, **wkw),             # b3
            ],
            out_specs=pl.BlockSpec((tile_b, OUTP), lambda i: (i, 0)),
        ),
        compiler_params=pltpu.CompilerParams(
            dimension_semantics=("parallel",),   # batch tiles shard across TCs (v7x)
            vmem_limit_bytes=vmem_limit,
        ),
    )(xp, prep["w1"], prep["b1"], prep["w2"], prep["b2"], prep["w3"], prep["b3"])

    return out_padded[:, :OUT]


def age_classify_forward(x, prep, *, max_tile_b=512):
    """Fused forward pass of AgeClassify (eval mode).

    x: (B, input_size) float32, any B >= 1 (rows are padded as needed).
    prep: output of prepare_params(params) — prepared once, reused per call.
    max_tile_b: batch tile cap (512 is safe on v5e/v6e/v7x for typical input_size).
    Returns: (B, 5) float32 logits.
    """
    B = x.shape[0]
    bp = max(8, _round_up(B, 8))
    # v7x has 2 TensorCores per chip: for mid/large batches force >= 2 grid steps
    # so the "parallel" batch axis actually shards across both cores.
    min_tiles = 2 if (_is_v7x() and bp >= 256) else 1
    padded_batch, tile_b = _choose_batch_tiling(B, max_tile_b, min_tiles=min_tiles)
    out = _forward_impl(x, prep, tile_b=tile_b, padded_batch=padded_batch)
    return out[:B]


# ----------------------------------------------------------------------------
# Synthetic parameters + plain-JAX reference (unfolded BN) for validation
# ----------------------------------------------------------------------------
def build_params(input_size, key):
    """Deterministic synthetic parameters with PyTorch shapes/init conventions."""
    ks = jax.random.split(key, 12)

    def linear(kw, kb, fan_in, fan_out):
        bound = 1.0 / np.sqrt(fan_in)
        w = jax.random.uniform(kw, (fan_out, fan_in), jnp.float32, -bound, bound)
        b = jax.random.uniform(kb, (fan_out,), jnp.float32, -bound, bound)
        return w, b

    w1, b1 = linear(ks[0], ks[1], input_size, HIDDEN)
    w2, b2 = linear(ks[2], ks[3], HIDDEN, HIDDEN)
    w3, b3 = linear(ks[4], ks[5], HIDDEN, OUT)

    # Non-trivial BN stats/affine so the BN path is actually exercised.
    return dict(
        w1=w1, b1=b1,
        bn1_gamma=1.0 + 0.1 * jax.random.normal(ks[6], (HIDDEN,), jnp.float32),
        bn1_beta=0.1 * jax.random.normal(ks[7], (HIDDEN,), jnp.float32),
        bn1_mean=0.05 * jax.random.normal(ks[8], (HIDDEN,), jnp.float32),
        bn1_var=1.0 + 0.1 * jax.random.uniform(ks[9], (HIDDEN,), jnp.float32),
        w2=w2, b2=b2,
        bn2_gamma=1.0 + 0.1 * jax.random.normal(ks[10], (HIDDEN,), jnp.float32),
        bn2_beta=0.1 * jax.random.normal(ks[11], (HIDDEN,), jnp.float32),
        bn2_mean=jnp.zeros((HIDDEN,), jnp.float32),
        bn2_var=jnp.ones((HIDDEN,), jnp.float32),
        w3=w3, b3=b3,
    )


def reference_forward(x, params):
    """Plain-JAX reference of the eval-mode PyTorch forward (unfolded BN)."""
    h = x @ params["w1"].T + params["b1"]
    h = (h - params["bn1_mean"]) / jnp.sqrt(params["bn1_var"] + BN_EPS)
    h = h * params["bn1_gamma"] + params["bn1_beta"]
    h = jnp.maximum(h, 0.0)
    h = h @ params["w2"].T + params["b2"]
    h = (h - params["bn2_mean"]) / jnp.sqrt(params["bn2_var"] + BN_EPS)
    h = h * params["bn2_gamma"] + params["bn2_beta"]
    h = jnp.maximum(h, 0.0)
    return h @ params["w3"].T + params["b3"]


if __name__ == "__main__":
    key = jax.random.PRNGKey(0)
    kp, kx = jax.random.split(key)

    input_size = 256
    batch = 8
    params = build_params(input_size, kp)
    x = jax.random.normal(kx, (batch, input_size), jnp.float32)
    ref = reference_forward(x, params)

    # Strict numerical check with f32 weights (same math as the module, BN folded).
    prep_f32 = prepare_params(params, weight_dtype=jnp.float32)
    out_f32 = jax.block_until_ready(age_classify_forward(x, prep_f32))
    assert out_f32.shape == (batch, OUT), out_f32.shape
    np.testing.assert_allclose(np.asarray(out_f32), np.asarray(ref),
                               rtol=1e-3, atol=1e-3)

    # Default fast path: bf16 weight/activation stream, f32 accumulation.
    # prepare_params is called ONCE and the result reused for every forward.
    prep = prepare_params(params)
    out_bf16 = jax.block_until_ready(age_classify_forward(x, prep))
    assert out_bf16.shape == (batch, OUT), out_bf16.shape
    np.testing.assert_allclose(np.asarray(out_bf16), np.asarray(ref),
                               rtol=5e-2, atol=5e-2)

    # Non-multiple batch size is handled via row padding + slicing.
    out_small = jax.block_until_ready(age_classify_forward(x[:5], prep))
    assert out_small.shape == (5, OUT), out_small.shape
    np.testing.assert_allclose(np.asarray(out_small), np.asarray(ref[:5]),
                               rtol=5e-2, atol=5e-2)

    # Remainder-aware multi-tile path: batch 260 with a 128-row cap tiles as
    # 3 x 88 rows (264 padded), not 512 rows as before.
    xb = jax.random.normal(jax.random.PRNGKey(1), (260, input_size), jnp.float32)
    refb = reference_forward(xb, params)
    outb = jax.block_until_ready(age_classify_forward(xb, prep, max_tile_b=128))
    assert outb.shape == (260, OUT), outb.shape
    np.testing.assert_allclose(np.asarray(outb), np.asarray(refb),
                               rtol=5e-2, atol=5e-2)

    print("KERNEL_OK")
</pallas_src>

<mosaic_0001>
module attributes {stable_mosaic.version = 11 : i64} {
  func.func @_mlp_kernel(%arg0: i32, %arg1: memref<8x256xf32, #tpu.memory_space<vmem>>, %arg2: memref<256x1024xf32, #tpu.memory_space<vmem>>, %arg3: memref<1x1024xf32, #tpu.memory_space<vmem>>, %arg4: memref<1024x1024xf32, #tpu.memory_space<vmem>>, %arg5: memref<1x1024xf32, #tpu.memory_space<vmem>>, %arg6: memref<1024x128xf32, #tpu.memory_space<vmem>>, %arg7: memref<1x128xf32, #tpu.memory_space<vmem>>, %arg8: memref<8x128xf32, #tpu.memory_space<vmem>>) attributes {dimension_semantics = [#tpu.dimension_semantics<parallel>], iteration_bounds = array<i64: 1>, scalar_prefetch = 0 : i64, scratch_operands = 0 : i64, tpu.core_type = #tpu.core_type<tc>, window_params = [{transform_indices = @transform_0, window_bounds = array<i64: 8, 256>}, {pipeline_mode = #tpu.pipeline_mode<synchronous>, transform_indices = @transform_1, window_bounds = array<i64: 256, 1024>}, {pipeline_mode = #tpu.pipeline_mode<synchronous>, transform_indices = @transform_2, window_bounds = array<i64: 1, 1024>}, {pipeline_mode = #tpu.pipeline_mode<synchronous>, transform_indices = @transform_3, window_bounds = array<i64: 1024, 1024>}, {pipeline_mode = #tpu.pipeline_mode<synchronous>, transform_indices = @transform_4, window_bounds = array<i64: 1, 1024>}, {pipeline_mode = #tpu.pipeline_mode<synchronous>, transform_indices = @transform_5, window_bounds = array<i64: 1024, 128>}, {pipeline_mode = #tpu.pipeline_mode<synchronous>, transform_indices = @transform_6, window_bounds = array<i64: 1, 128>}, {transform_indices = @transform_7, window_bounds = array<i64: 8, 128>}]} {
    %c0 = arith.constant 0 : index
    %c0_0 = arith.constant 0 : index
    %0 = vector.load %arg1[%c0, %c0_0] : memref<8x256xf32, #tpu.memory_space<vmem>>, vector<8x256xf32>
    %c0_1 = arith.constant 0 : index
    %c0_2 = arith.constant 0 : index
    %1 = vector.load %arg2[%c0_1, %c0_2] : memref<256x1024xf32, #tpu.memory_space<vmem>>, vector<256x1024xf32>
    %cst = arith.constant dense<0.000000e+00> : vector<8x1024xf32>
    %2 = tpu.matmul %0, %1, %cst {dimension_numbers = #tpu.dot_dimension_numbers<[1], [0], [0], [1], [0, 0, 1, 1], [], []>} : vector<8x256xf32>, vector<256x1024xf32>, vector<8x1024xf32> -> vector<8x1024xf32>
    %c0_3 = arith.constant 0 : index
    %c0_4 = arith.constant 0 : index
    %3 = vector.load %arg3[%c0_3, %c0_4] : memref<1x1024xf32, #tpu.memory_space<vmem>>, vector<1x1024xf32>
    %4 = vector.broadcast %3 : vector<1x1024xf32> to vector<8x1024xf32>
    %5 = arith.addf %2, %4 : vector<8x1024xf32>
    %cst_5 = arith.constant 0.000000e+00 : f32
    %6 = vector.broadcast %cst_5 : f32 to vector<8x1024xf32>
    %7 = arith.maximumf %5, %6 : vector<8x1024xf32>
    %c0_6 = arith.constant 0 : index
    %c0_7 = arith.constant 0 : index
    %8 = vector.load %arg4[%c0_6, %c0_7] : memref<1024x1024xf32, #tpu.memory_space<vmem>>, vector<1024x1024xf32>
    %cst_8 = arith.constant dense<0.000000e+00> : vector<8x1024xf32>
    %9 = tpu.matmul %7, %8, %cst_8 {dimension_numbers = #tpu.dot_dimension_numbers<[1], [0], [0], [1], [0, 0, 1, 1], [], []>} : vector<8x1024xf32>, vector<1024x1024xf32>, vector<8x1024xf32> -> vector<8x1024xf32>
    %c0_9 = arith.constant 0 : index
    %c0_10 = arith.constant 0 : index
    %10 = vector.load %arg5[%c0_9, %c0_10] : memref<1x1024xf32, #tpu.memory_space<vmem>>, vector<1x1024xf32>
    %11 = vector.broadcast %10 : vector<1x1024xf32> to vector<8x1024xf32>
    %12 = arith.addf %9, %11 : vector<8x1024xf32>
    %cst_11 = arith.constant 0.000000e+00 : f32
    %13 = vector.broadcast %cst_11 : f32 to vector<8x1024xf32>
    %14 = arith.maximumf %12, %13 : vector<8x1024xf32>
    %c0_12 = arith.constant 0 : index
    %c0_13 = arith.constant 0 : index
    %15 = vector.load %arg6[%c0_12, %c0_13] : memref<1024x128xf32, #tpu.memory_space<vmem>>, vector<1024x128xf32>
    %cst_14 = arith.constant dense<0.000000e+00> : vector<8x128xf32>
    %16 = tpu.matmul %14, %15, %cst_14 {dimension_numbers = #tpu.dot_dimension_numbers<[1], [0], [0], [1], [0, 0, 1, 1], [], []>} : vector<8x1024xf32>, vector<1024x128xf32>, vector<8x128xf32> -> vector<8x128xf32>
    %c0_15 = arith.constant 0 : index
    %c0_16 = arith.constant 0 : index
    %17 = vector.load %arg7[%c0_15, %c0_16] : memref<1x128xf32, #tpu.memory_space<vmem>>, vector<1x128xf32>
    %18 = vector.broadcast %17 : vector<1x128xf32> to vector<8x128xf32>
    %19 = arith.addf %16, %18 : vector<8x128xf32>
    %c0_17 = arith.constant 0 : index
    %c0_18 = arith.constant 0 : index
    %20 = vector.load %arg8[%c0_17, %c0_18] : memref<8x128xf32, #tpu.memory_space<vmem>>, vector<8x128xf32>
    tpu.vector_store %arg8[%c0_17, %c0_18], %19 {strides = array<i32>} : memref<8x128xf32, #tpu.memory_space<vmem>>, vector<8x128xf32>,
    return
  }
  func.func @transform_0(%arg0: i32) -> (i32, i32) {
    %c0_i32 = arith.constant 0 : i32
    %c0_i32_0 = arith.constant 0 : i32
    return %arg0, %c0_i32 : i32, i32
  }
  func.func @transform_1(%arg0: i32) -> (i32, i32) {
    %c0_i32 = arith.constant 0 : i32
    %c0_i32_0 = arith.constant 0 : i32
    %c0_i32_1 = arith.constant 0 : i32
    return %c0_i32, %c0_i32_0 : i32, i32
  }
  func.func @transform_2(%arg0: i32) -> (i32, i32) {
    %c0_i32 = arith.constant 0 : i32
    %c0_i32_0 = arith.constant 0 : i32
    %c0_i32_1 = arith.constant 0 : i32
    return %c0_i32, %c0_i32_0 : i32, i32
  }
  func.func @transform_3(%arg0: i32) -> (i32, i32) {
    %c0_i32 = arith.constant 0 : i32
    %c0_i32_0 = arith.constant 0 : i32
    %c0_i32_1 = arith.constant 0 : i32
    return %c0_i32, %c0_i32_0 : i32, i32
  }
  func.func @transform_4(%arg0: i32) -> (i32, i32) {
    %c0_i32 = arith.constant 0 : i32
    %c0_i32_0 = arith.constant 0 : i32
    %c0_i32_1 = arith.constant 0 : i32
    return %c0_i32, %c0_i32_0 : i32, i32
  }
  func.func @transform_5(%arg0: i32) -> (i32, i32) {
    %c0_i32 = arith.constant 0 : i32
    %c0_i32_0 = arith.constant 0 : i32
    %c0_i32_1 = arith.constant 0 : i32
    return %c0_i32, %c0_i32_0 : i32, i32
  }
  func.func @transform_6(%arg0: i32) -> (i32, i32) {
    %c0_i32 = arith.constant 0 : i32
    %c0_i32_0 = arith.constant 0 : i32
    %c0_i32_1 = arith.constant 0 : i32
    return %c0_i32, %c0_i32_0 : i32, i32
  }
  func.func @transform_7(%arg0: i32) -> (i32, i32) {
    %c0_i32 = arith.constant 0 : i32
    %c0_i32_0 = arith.constant 0 : i32
    return %arg0, %c0_i32 : i32, i32
  }
}

</mosaic_0001>

<llo_original>
// kernel: _forward_impl.1
$region0: #{_forward_impl.1}
  #allocation0 [shape = 'u32[]', space=smem, size = 0x4, offset = 0x4, fixed_abs, tag = 'smem constant byte address 0x4 - core index']
  #allocation1 [shape = 'u32[144,128]{1,0:T(1,128)}', space=vmem, size = 0x12000, scoped, tag = 'internal scratch']
  %s0 = inlined_call_operand.hbm [shape: f32[8,256], index: 0, kind: input, shape index: {}]
  %s1 = inlined_call_operand.hbm [shape: f32[256,1024], index: 1, kind: input, shape index: {}]
  %s2 = inlined_call_operand.hbm [shape: f32[1,1024], index: 2, kind: input, shape index: {}]
  %s3 = inlined_call_operand.hbm [shape: f32[1024,1024], index: 3, kind: input, shape index: {}]
  %s4 = inlined_call_operand.hbm [shape: f32[1,1024], index: 4, kind: input, shape index: {}]
  %s5 = inlined_call_operand.hbm [shape: f32[1024,128], index: 5, kind: input, shape index: {}]
  %s6 = inlined_call_operand.hbm [shape: f32[1,128], index: 6, kind: input, shape index: {}]
  %s7 = inlined_call_operand.hbm [shape: f32[8,128], index: 7, kind: output, shape index: {}]
  %s8 = sld [smem:[#allocation0]]
  $region66: #{_forward_impl.1} parent=0
    _
  %s10 = ssub.s32 1, %s8
  %s11 = scalar_select 0, %s10, %s8
  $region1: #{_forward_impl.1} parent=0
    #allocation2 [shape = 'u8[8192]{0}', space=vmem, size = 0x2000, scoped, tag = 'input window, operand 0, single buffered']
    #allocation3 [shape = 's32[1]{0}', space=sflag, size = 0x4, scoped, tag = 'scoped memory for _forward_impl.1']
    #allocation4 [shape = 's32[1]{0}', space=sflag, size = 0x4, scoped, tag = 'scoped memory for _forward_impl.1']
    #allocation5 [shape = 'u8[1048576]{0}', space=vmem, size = 0x100000, scoped, tag = 'input window, operand 1, single buffered']
    #allocation6 [shape = 's32[1]{0}', space=sflag, size = 0x4, scoped, tag = 'scoped memory for _forward_impl.1']
    #allocation7 [shape = 'u8[4096]{0}', space=vmem, size = 0x1000, scoped, tag = 'input window, operand 2, single buffered']
    #allocation8 [shape = 'u8[4194304]{0}', space=vmem, size = 0x400000, scoped, tag = 'input window, operand 3, single buffered']
    #allocation9 [shape = 's32[1]{0}', space=sflag, size = 0x4, scoped, tag = 'scoped memory for _forward_impl.1']
    #allocation10 [shape = 'u8[4096]{0}', space=vmem, size = 0x1000, scoped, tag = 'input window, operand 4, single buffered']
    #allocation11 [shape = 'u8[524288]{0}', space=vmem, size = 0x80000, scoped, tag = 'input window, operand 5, single buffered']
    #allocation12 [shape = 's32[1]{0}', space=sflag, size = 0x4, scoped, tag = 'scoped memory for _forward_impl.1']
    #allocation13 [shape = 'u8[512]{0}', space=vmem, size = 0x400, scoped, tag = 'input window, operand 6, single buffered']
    #allocation14 [shape = 'u8[4096]{0}', space=vmem, size = 0x1000, scoped, tag = 'output window, operand 0, single buffered']
    %12 = vsyncpa [#allocation3], 0
    %13 = vsyncpa [#allocation6], 0
    %14 = vsyncpa [#allocation9], 0
    %15 = vsyncpa [#allocation12], 0
    %16 = vsyncpa [#allocation4], 0
    // Predicated region
    $region2: #{_forward_impl.1} parent=1 // pred_check
      _
    $region3: #{_forward_impl.1} parent=1 // pred_check_branch
      %18 = sbr.rel (0) target = $region5
    $region4: #{_forward_impl.1} parent=1 // pred_region
      %s20 = ssub.s32 256, 256
      %21 = vsyncadd [#allocation3], %s20
      %s23 = sshll.u32 [#allocation2], 4
      %s24 = int_to_ptr.vmem [resolvable:$true] %s23
      %26 = dma.hbm_to_vmem [thread:$0]  %s0, 256, %s24, [#allocation3]
    $region5: #{_forward_impl.1} parent=1 // pred_fallthru
      _
    // Predicated region
    $region6: #{_forward_impl.1} parent=1 // pred_check
      _
    $region7: #{_forward_impl.1} parent=1 // pred_check_branch
      %28 = sbr.rel (0) target = $region9
    $region8: #{_forward_impl.1} parent=1 // pred_region
      %s30 = ssub.s32 32768, 32768
      %31 = vsyncadd [#allocation6], %s30
      %s32 = sshll.u32 [#allocation5], 4
      %s33 = int_to_ptr.vmem [resolvable:$true] %s32
      %38 = dma.hbm_to_vmem [thread:$0]  %s1, 32768, %s33, [#allocation6], 1024, 1024, 64
    $region9: #{_forward_impl.1} parent=1 // pred_fallthru
      _
    // Predicated region
    $region10: #{_forward_impl.1} parent=1 // pred_check
      _
    $region11: #{_forward_impl.1} parent=1 // pred_check_branch
      %40 = sbr.rel (0) target = $region13
    $region12: #{_forward_impl.1} parent=1 // pred_region
      %s42 = ssub.s32 128, 128
      %43 = vsyncadd [#allocation6], %s42
      %s45 = sshll.u32 [#allocation7], 4
      %s46 = int_to_ptr.vmem [resolvable:$true] %s45
      %48 = dma.hbm_to_vmem [thread:$0]  %s2, 128, %s46, [#allocation6]
    $region13: #{_forward_impl.1} parent=1 // pred_fallthru
      _
    // Predicated region
    $region14: #{_forward_impl.1} parent=1 // pred_check
      _
    $region15: #{_forward_impl.1} parent=1 // pred_check_branch
      %50 = sbr.rel (0) target = $region17
    $region16: #{_forward_impl.1} parent=1 // pred_region
      %s52 = ssub.s32 131072, 131072
      %53 = vsyncadd [#allocation9], %s52
      %s54 = sshll.u32 [#allocation8], 4
      %s55 = int_to_ptr.vmem [resolvable:$true] %s54
      %60 = dma.hbm_to_vmem [thread:$0]  %s3, 131072, %s55, [#allocation9], 1024, 1024, 64
    $region17: #{_forward_impl.1} parent=1 // pred_fallthru
      _
    // Predicated region
    $region18: #{_forward_impl.1} parent=1 // pred_check
      _
    $region19: #{_forward_impl.1} parent=1 // pred_check_branch
      %62 = sbr.rel (0) target = $region21
    $region20: #{_forward_impl.1} parent=1 // pred_region
      %s64 = ssub.s32 128, 128
      %65 = vsyncadd [#allocation9], %s64
      %s67 = sshll.u32 [#allocation10], 4
      %s68 = int_to_ptr.vmem [resolvable:$true] %s67
      %70 = dma.hbm_to_vmem [thread:$0]  %s4, 128, %s68, [#allocation9]
    $region21: #{_forward_impl.1} parent=1 // pred_fallthru
      _
    // Predicated region
    $region22: #{_forward_impl.1} parent=1 // pred_check
      _
    $region23: #{_forward_impl.1} parent=1 // pred_check_branch
      %72 = sbr.rel (0) target = $region25
    $region24: #{_forward_impl.1} parent=1 // pred_region
      %s74 = ssub.s32 16384, 16384
      %75 = vsyncadd [#allocation12], %s74
      %s76 = sshll.u32 [#allocation11], 4
      %s77 = int_to_ptr.vmem [resolvable:$true] %s76
      %82 = dma.hbm_to_vmem [thread:$0]  %s5, 16384, %s77, [#allocation12], 128, 128, 8
    $region25: #{_forward_impl.1} parent=1 // pred_fallthru
      _
    // Predicated region
    $region26: #{_forward_impl.1} parent=1 // pred_check
      _
    $region27: #{_forward_impl.1} parent=1 // pred_check_branch
      %84 = sbr.rel (0) target = $region29
    $region28: #{_forward_impl.1} parent=1 // pred_region
      %s86 = ssub.s32 16, 16
      %87 = vsyncadd [#allocation12], %s86
      %s89 = sshll.u32 [#allocation13], 4
      %s90 = int_to_ptr.vmem [resolvable:$true] %s89
      %92 = dma.hbm_to_vmem [thread:$0]  %s6, 16, %s90, [#allocation12]
    $region29: #{_forward_impl.1} parent=1 // pred_fallthru
      _
    // Predicated region
    $region30: #{_forward_impl.1} parent=1 // pred_check
      _
    $region31: #{_forward_impl.1} parent=1 // pred_check_branch
      %94 = sbr.rel (0) target = $region33
    $region32: #{_forward_impl.1} parent=1 // pred_region
      %95 = dma.done [#allocation3], 256
    $region33: #{_forward_impl.1} parent=1 // pred_fallthru
      _
    // Predicated region
    $region34: #{_forward_impl.1} parent=1 // pred_check
      _
    $region35: #{_forward_impl.1} parent=1 // pred_check_branch
      %97 = sbr.rel (0) target = $region37
    $region36: #{_forward_impl.1} parent=1 // pred_region
      %98 = dma.done [#allocation6], 32768
    $region37: #{_forward_impl.1} parent=1 // pred_fallthru
      _
    // Predicated region
    $region38: #{_forward_impl.1} parent=1 // pred_check
      _
    $region39: #{_forward_impl.1} parent=1 // pred_check_branch
      %100 = sbr.rel (0) target = $region41
    $region40: #{_forward_impl.1} parent=1 // pred_region
      %101 = dma.done [#allocation6], 128
    $region41: #{_forward_impl.1} parent=1 // pred_fallthru
      _
    // Predicated region
    $region42: #{_forward_impl.1} parent=1 // pred_check
      _
    $region43: #{_forward_impl.1} parent=1 // pred_check_branch
      %103 = sbr.rel (0) target = $region45
    $region44: #{_forward_impl.1} parent=1 // pred_region
      %104 = dma.done [#allocation9], 131072
    $region45: #{_forward_impl.1} parent=1 // pred_fallthru
      _
    // Predicated region
    $region46: #{_forward_impl.1} parent=1 // pred_check
      _
    $region47: #{_forward_impl.1} parent=1 // pred_check_branch
      %106 = sbr.rel (0) target = $region49
    $region48: #{_forward_impl.1} parent=1 // pred_region
      %107 = dma.done [#allocation9], 128
    $region49: #{_forward_impl.1} parent=1 // pred_fallthru
      _
    // Predicated region
    $region50: #{_forward_impl.1} parent=1 // pred_check
      _
    $region51: #{_forward_impl.1} parent=1 // pred_check_branch
      %109 = sbr.rel (0) target = $region53
    $region52: #{_forward_impl.1} parent=1 // pred_region
      %110 = dma.done [#allocation12], 16384
    $region53: #{_forward_impl.1} parent=1 // pred_fallthru
      _
    // Predicated region
    $region54: #{_forward_impl.1} parent=1 // pred_check
      _
    $region55: #{_forward_impl.1} parent=1 // pred_check_branch
      %112 = sbr.rel (0) target = $region57
    $region56: #{_forward_impl.1} parent=1 // pred_region
      %113 = dma.done [#allocation12], 16
    $region57: #{_forward_impl.1} parent=1 // pred_fallthru
      _
    %v114 = vld [vmem:[#allocation2] sm:$0xff]
    %v115 = vld [vmem:[#allocation2 + $0x8] sm:$0xff]
    %v116 = vld [vmem:[#allocation5] sm:$0xff]
    %v117 = vld [vmem:[#allocation5 + $0x8] sm:$0xff]
    %v118 = vld [vmem:[#allocation5 + $0x10] sm:$0xff]
    %v119 = vld [vmem:[#allocation5 + $0x18] sm:$0xff]
    %v120 = vld [vmem:[#allocation5 + $0x20] sm:$0xff]
    %v121 = vld [vmem:[#allocation5 + $0x28] sm:$0xff]
    %v122 = vld [vmem:[#allocation5 + $0x30] sm:$0xff]
    %v123 = vld [vmem:[#allocation5 + $0x38] sm:$0xff]
    %v124 = vld [vmem:[#allocation5 + $0x40] sm:$0xff]
    %v125 = vld [vmem:[#allocation5 + $0x48] sm:$0xff]
    %v126 = vld [vmem:[#allocation5 + $0x50] sm:$0xff]
    %v127 = vld [vmem:[#allocation5 + $0x58] sm:$0xff]
    %v128 = vld [vmem:[#allocation5 + $0x60] sm:$0xff]
    %v129 = vld [vmem:[#allocation5 + $0x68] sm:$0xff]
    %v130 = vld [vmem:[#allocation5 + $0x70] sm:$0xff]
    %v131 = vld [vmem:[#allocation5 + $0x78] sm:$0xff]
    %v132 = vld [vmem:[#allocation5 + $0x80] sm:$0xff]
    %v133 = vld [vmem:[#allocation5 + $0x88] sm:$0xff]
    %v134 = vld [vmem:[#allocation5 + $0x90] sm:$0xff]
    %v135 = vld [vmem:[#allocation5 + $0x98] sm:$0xff]
    %v136 = vld [vmem:[#allocation5 + $0xa0] sm:$0xff]
    %v137 = vld [vmem:[#allocation5 + $0xa8] sm:$0xff]
    %v138 = vld [vmem:[#allocation5 + $0xb0] sm:$0xff]
    %v139 = vld [vmem:[#allocation5 + $0xb8] sm:$0xff]
    %v140 = vld [vmem:[#allocation5 + $0xc0] sm:$0xff]
    %v141 = vld [vmem:[#allocation5 + $0xc8] sm:$0xff]
    %v142 = vld [vmem:[#allocation5 + $0xd0] sm:$0xff]
    %v143 = vld [vmem:[#allocation5 + $0xd8] sm:$0xff]
    %v144 = vld [vmem:[#allocation5 + $0xe0] sm:$0xff]
    %v145 = vld [vmem:[#allocation5 + $0xe8] sm:$0xff]
    %v146 = vld [vmem:[#allocation5 + $0xf0] sm:$0xff]
    %v147 = vld [vmem:[#allocation5 + $0xf8] sm:$0xff]
    %v148 = vld [vmem:[#allocation5 + $0x100] sm:$0xff]
    %v149 = vld [vmem:[#allocation5 + $0x108] sm:$0xff]
    %v150 = vld [vmem:[#allocation5 + $0x110] sm:$0xff]
    %v151 = vld [vmem:[#allocation5 + $0x118] sm:$0xff]
    %v152 = vld [vmem:[#allocation5 + $0x120] sm:$0xff]
    %v153 = vld [vmem:[#allocation5 + $0x128] sm:$0xff]
    %v154 = vld [vmem:[#allocation5 + $0x130] sm:$0xff]
    %v155 = vld [vmem:[#allocation5 + $0x138] sm:$0xff]
    %v156 = vld [vmem:[#allocation5 + $0x140] sm:$0xff]
    %v157 = vld [vmem:[#allocation5 + $0x148] sm:$0xff]
    %v158 = vld [vmem:[#allocation5 + $0x150] sm:$0xff]
    %v159 = vld [vmem:[#allocation5 + $0x158] sm:$0xff]
    %v160 = vld [vmem:[#allocation5 + $0x160] sm:$0xff]
    %v161 = vld [vmem:[#allocation5 + $0x168] sm:$0xff]
    %v162 = vld [vmem:[#allocation5 + $0x170] sm:$0xff]
    %v163 = vld [vmem:[#allocation5 + $0x178] sm:$0xff]
    %v164 = vld [vmem:[#allocation5 + $0x180] sm:$0xff]
    %v165 = vld [vmem:[#allocation5 + $0x188] sm:$0xff]
    %v166 = vld [vmem:[#allocation5 + $0x190] sm:$0xff]
    %v167 = vld [vmem:[#allocation5 + $0x198] sm:$0xff]
    %v168 = vld [vmem:[#allocation5 + $0x1a0] sm:$0xff]
    %v169 = vld [vmem:[#allocation5 + $0x1a8] sm:$0xff]
    %v170 = vld [vmem:[#allocation5 + $0x1b0] sm:$0xff]
    %v171 = vld [vmem:[#allocation5 + $0x1b8] sm:$0xff]
    %v172 = vld [vmem:[#allocation5 + $0x1c0] sm:$0xff]
    %v173 = vld [vmem:[#allocation5 + $0x1c8] sm:$0xff]
    %v174 = vld [vmem:[#allocation5 + $0x1d0] sm:$0xff]
    %v175 = vld [vmem:[#allocation5 + $0x1d8] sm:$0xff]
    %v176 = vld [vmem:[#allocation5 + $0x1e0] sm:$0xff]
    %v177 = vld [vmem:[#allocation5 + $0x1e8] sm:$0xff]
    %v178 = vld [vmem:[#allocation5 + $0x1f0] sm:$0xff]
    %v179 = vld [vmem:[#allocation5 + $0x1f8] sm:$0xff]
    %v180 = vld [vmem:[#allocation5 + $0x200] sm:$0xff]
    %v181 = vld [vmem:[#allocation5 + $0x208] sm:$0xff]
    %v182 = vld [vmem:[#allocation5 + $0x210] sm:$0xff]
    %v183 = vld [vmem:[#allocation5 + $0x218] sm:$0xff]
    %v184 = vld [vmem:[#allocation5 + $0x220] sm:$0xff]
    %v185 = vld [vmem:[#allocation5 + $0x228] sm:$0xff]
    %v186 = vld [vmem:[#allocation5 + $0x230] sm:$0xff]
    %v187 = vld [vmem:[#allocation5 + $0x238] sm:$0xff]
    %v188 = vld [vmem:[#allocation5 + $0x240] sm:$0xff]
    %v189 = vld [vmem:[#allocation5 + $0x248] sm:$0xff]
    %v190 = vld [vmem:[#allocation5 + $0x250] sm:$0xff]
    %v191 = vld [vmem:[#allocation5 + $0x258] sm:$0xff]
    %v192 = vld [vmem:[#allocation5 + $0x260] sm:$0xff]
    %v193 = vld [vmem:[#allocation5 + $0x268] sm:$0xff]
    %v194 = vld [vmem:[#allocation5 + $0x270] sm:$0xff]
    %v195 = vld [vmem:[#allocation5 + $0x278] sm:$0xff]
    %v196 = vld [vmem:[#allocation5 + $0x280] sm:$0xff]
    %v197 = vld [vmem:[#allocation5 + $0x288] sm:$0xff]
    %v198 = vld [vmem:[#allocation5 + $0x290] sm:$0xff]
    %v199 = vld [vmem:[#allocation5 + $0x298] sm:$0xff]
    %v200 = vld [vmem:[#allocation5 + $0x2a0] sm:$0xff]
    %v201 = vld [vmem:[#allocation5 + $0x2a8] sm:$0xff]
    %v202 = vld [vmem:[#allocation5 + $0x2b0] sm:$0xff]
    %v203 = vld [vmem:[#allocation5 + $0x2b8] sm:$0xff]
    %v204 = vld [vmem:[#allocation5 + $0x2c0] sm:$0xff]
    %v205 = vld [vmem:[#allocation5 + $0x2c8] sm:$0xff]
    %v206 = vld [vmem:[#allocation5 + $0x2d0] sm:$0xff]
    %v207 = vld [vmem:[#allocation5 + $0x2d8] sm:$0xff]
    %v208 = vld [vmem:[#allocation5 + $0x2e0] sm:$0xff]
    %v209 = vld [vmem:[#allocation5 + $0x2e8] sm:$0xff]
    %v210 = vld [vmem:[#allocation5 + $0x2f0] sm:$0xff]
    %v211 = vld [vmem:[#allocation5 + $0x2f8] sm:$0xff]
    %v212 = vld [vmem:[#allocation5 + $0x300] sm:$0xff]
    %v213 = vld [vmem:[#allocation5 + $0x308] sm:$0xff]
    %v214 = vld [vmem:[#allocation5 + $0x310] sm:$0xff]
    %v215 = vld [vmem:[#allocation5 + $0x318] sm:$0xff]
    %v216 = vld [vmem:[#allocation5 + $0x320] sm:$0xff]
    %v217 = vld [vmem:[#allocation5 + $0x328] sm:$0xff]
    %v218 = vld [vmem:[#allocation5 + $0x330] sm:$0xff]
    %v219 = vld [vmem:[#allocation5 + $0x338] sm:$0xff]
    %v220 = vld [vmem:[#allocation5 + $0x340] sm:$0xff]
    %v221 = vld [vmem:[#allocation5 + $0x348] sm:$0xff]
    %v222 = vld [vmem:[#allocation5 + $0x350] sm:$0xff]
    %v223 = vld [vmem:[#allocation5 + $0x358] sm:$0xff]
    %v224 = vld [vmem:[#allocation5 + $0x360] sm:$0xff]
    %v225 = vld [vmem:[#allocation5 + $0x368] sm:$0xff]
    %v226 = vld [vmem:[#allocation5 + $0x370] sm:$0xff]
    %v227 = vld [vmem:[#allocation5 + $0x378] sm:$0xff]
    %v228 = vld [vmem:[#allocation5 + $0x380] sm:$0xff]
    %v229 = vld [vmem:[#allocation5 + $0x388] sm:$0xff]
    %v230 = vld [vmem:[#allocation5 + $0x390] sm:$0xff]
    %v231 = vld [vmem:[#allocation5 + $0x398] sm:$0xff]
    %v232 = vld [vmem:[#allocation5 + $0x3a0] sm:$0xff]
    %v233 = vld [vmem:[#allocation5 + $0x3a8] sm:$0xff]
    %v234 = vld [vmem:[#allocation5 + $0x3b0] sm:$0xff]
    %v235 = vld [vmem:[#allocation5 + $0x3b8] sm:$0xff]
    %v236 = vld [vmem:[#allocation5 + $0x3c0] sm:$0xff]
    %v237 = vld [vmem:[#allocation5 + $0x3c8] sm:$0xff]
    %v238 = vld [vmem:[#allocation5 + $0x3d0] sm:$0xff]
    %v239 = vld [vmem:[#allocation5 + $0x3d8] sm:$0xff]
    %v240 = vld [vmem:[#allocation5 + $0x3e0] sm:$0xff]
    %v241 = vld [vmem:[#allocation5 + $0x3e8] sm:$0xff]
    %v242 = vld [vmem:[#allocation5 + $0x3f0] sm:$0xff]
    %v243 = vld [vmem:[#allocation5 + $0x3f8] sm:$0xff]
    %v244 = vld [vmem:[#allocation5 + $0x400] sm:$0xff]
    %v245 = vld [vmem:[#allocation5 + $0x408] sm:$0xff]
    %v246 = vld [vmem:[#allocation5 + $0x410] sm:$0xff]
    %v247 = vld [vmem:[#allocation5 + $0x418] sm:$0xff]
    %v248 = vld [vmem:[#allocation5 + $0x420] sm:$0xff]
    %v249 = vld [vmem:[#allocation5 + $0x428] sm:$0xff]
    %v250 = vld [vmem:[#allocation5 + $0x430] sm:$0xff]
    %v251 = vld [vmem:[#allocation5 + $0x438] sm:$0xff]
    %v252 = vld [vmem:[#allocation5 + $0x440] sm:$0xff]
    %v253 = vld [vmem:[#allocation5 + $0x448] sm:$0xff]
    %v254 = vld [vmem:[#allocation5 + $0x450] sm:$0xff]
    %v255 = vld [vmem:[#allocation5 + $0x458] sm:$0xff]
    %v256 = vld [vmem:[#allocation5 + $0x460] sm:$0xff]
    %v257 = vld [vmem:[#allocation5 + $0x468] sm:$0xff]
    %v258 = vld [vmem:[#allocation5 + $0x470] sm:$0xff]
    %v259 = vld [vmem:[#allocation5 + $0x478] sm:$0xff]
    %v260 = vld [vmem:[#allocation5 + $0x480] sm:$0xff]
    %v261 = vld [vmem:[#allocation5 + $0x488] sm:$0xff]
    %v262 = vld [vmem:[#allocation5 + $0x490] sm:$0xff]
    %v263 = vld [vmem:[#allocation5 + $0x498] sm:$0xff]
    %v264 = vld [vmem:[#allocation5 + $0x4a0] sm:$0xff]
    %v265 = vld [vmem:[#allocation5 + $0x4a8] sm:$0xff]
    %v266 = vld [vmem:[#allocation5 + $0x4b0] sm:$0xff]
    %v267 = vld [vmem:[#allocation5 + $0x4b8] sm:$0xff]
    %v268 = vld [vmem:[#allocation5 + $0x4c0] sm:$0xff]
    %v269 = vld [vmem:[#allocation5 + $0x4c8] sm:$0xff]
    %v270 = vld [vmem:[#allocation5 + $0x4d0] sm:$0xff]
    %v271 = vld [vmem:[#allocation5 + $0x4d8] sm:$0xff]
    %v272 = vld [vmem:[#allocation5 + $0x4e0] sm:$0xff]
    %v273 = vld [vmem:[#allocation5 + $0x4e8] sm:$0xff]
    %v274 = vld [vmem:[#allocation5 + $0x4f0] sm:$0xff]
    %v275 = vld [vmem:[#allocation5 + $0x4f8] sm:$0xff]
    %v276 = vld [vmem:[#allocation5 + $0x500] sm:$0xff]
    %v277 = vld [vmem:[#allocation5 + $0x508] sm:$0xff]
    %v278 = vld [vmem:[#allocation5 + $0x510] sm:$0xff]
    %v279 = vld [vmem:[#allocation5 + $0x518] sm:$0xff]
    %v280 = vld [vmem:[#allocation5 + $0x520] sm:$0xff]
    %v281 = vld [vmem:[#allocation5 + $0x528] sm:$0xff]
    %v282 = vld [vmem:[#allocation5 + $0x530] sm:$0xff]
    %v283 = vld [vmem:[#allocation5 + $0x538] sm:$0xff]
    %v284 = vld [vmem:[#allocation5 + $0x540] sm:$0xff]
    %v285 = vld [vmem:[#allocation5 + $0x548] sm:$0xff]
    %v286 = vld [vmem:[#allocation5 + $0x550] sm:$0xff]
    %v287 = vld [vmem:[#allocation5 + $0x558] sm:$0xff]
    %v288 = vld [vmem:[#allocation5 + $0x560] sm:$0xff]
    %v289 = vld [vmem:[#allocation5 + $0x568] sm:$0xff]
    %v290 = vld [vmem:[#allocation5 + $0x570] sm:$0xff]
    %v291 = vld [vmem:[#allocation5 + $0x578] sm:$0xff]
    %v292 = vld [vmem:[#allocation5 + $0x580] sm:$0xff]
    %v293 = vld [vmem:[#allocation5 + $0x588] sm:$0xff]
    %v294 = vld [vmem:[#allocation5 + $0x590] sm:$0xff]
    %v295 = vld [vmem:[#allocation5 + $0x598] sm:$0xff]
    %v296 = vld [vmem:[#allocation5 + $0x5a0] sm:$0xff]
    %v297 = vld [vmem:[#allocation5 + $0x5a8] sm:$0xff]
    %v298 = vld [vmem:[#allocation5 + $0x5b0] sm:$0xff]
    %v299 = vld [vmem:[#allocation5 + $0x5b8] sm:$0xff]
    %v300 = vld [vmem:[#allocation5 + $0x5c0] sm:$0xff]
    %v301 = vld [vmem:[#allocation5 + $0x5c8] sm:$0xff]
    %v302 = vld [vmem:[#allocation5 + $0x5d0] sm:$0xff]
    %v303 = vld [vmem:[#allocation5 + $0x5d8] sm:$0xff]
    %v304 = vld [vmem:[#allocation5 + $0x5e0] sm:$0xff]
    %v305 = vld [vmem:[#allocation5 + $0x5e8] sm:$0xff]
    %v306 = vld [vmem:[#allocation5 + $0x5f0] sm:$0xff]
    %v307 = vld [vmem:[#allocation5 + $0x5f8] sm:$0xff]
    %v308 = vld [vmem:[#allocation5 + $0x600] sm:$0xff]
    %v309 = vld [vmem:[#allocation5 + $0x608] sm:$0xff]
    %v310 = vld [vmem:[#allocation5 + $0x610] sm:$0xff]
    %v311 = vld [vmem:[#allocation5 + $0x618] sm:$0xff]
    %v312 = vld [vmem:[#allocation5 + $0x620] sm:$0xff]
    %v313 = vld [vmem:[#allocation5 + $0x628] sm:$0xff]
    %v314 = vld [vmem:[#allocation5 + $0x630] sm:$0xff]
    %v315 = vld [vmem:[#allocation5 + $0x638] sm:$0xff]
    %v316 = vld [vmem:[#allocation5 + $0x640] sm:$0xff]
    %v317 = vld [vmem:[#allocation5 + $0x648] sm:$0xff]
    %v318 = vld [vmem:[#allocation5 + $0x650] sm:$0xff]
    %v319 = vld [vmem:[#allocation5 + $0x658] sm:$0xff]
    %v320 = vld [vmem:[#allocation5 + $0x660] sm:$0xff]
    %v321 = vld [vmem:[#allocation5 + $0x668] sm:$0xff]
    %v322 = vld [vmem:[#allocation5 + $0x670] sm:$0xff]
    %v323 = vld [vmem:[#allocation5 + $0x678] sm:$0xff]
    %v324 = vld [vmem:[#allocation5 + $0x680] sm:$0xff]
    %v325 = vld [vmem:[#allocation5 + $0x688] sm:$0xff]
    %v326 = vld [vmem:[#allocation5 + $0x690] sm:$0xff]
    %v327 = vld [vmem:[#allocation5 + $0x698] sm:$0xff]
    %v328 = vld [vmem:[#allocation5 + $0x6a0] sm:$0xff]
    %v329 = vld [vmem:[#allocation5 + $0x6a8] sm:$0xff]
    %v330 = vld [vmem:[#allocation5 + $0x6b0] sm:$0xff]
    %v331 = vld [vmem:[#allocation5 + $0x6b8] sm:$0xff]
    %v332 = vld [vmem:[#allocation5 + $0x6c0] sm:$0xff]
    %v333 = vld [vmem:[#allocation5 + $0x6c8] sm:$0xff]
    %v334 = vld [vmem:[#allocation5 + $0x6d0] sm:$0xff]
    %v335 = vld [vmem:[#allocation5 + $0x6d8] sm:$0xff]
    %v336 = vld [vmem:[#allocation5 + $0x6e0] sm:$0xff]
    %v337 = vld [vmem:[#allocation5 + $0x6e8] sm:$0xff]
    %v338 = vld [vmem:[#allocation5 + $0x6f0] sm:$0xff]
    %v339 = vld [vmem:[#allocation5 + $0x6f8] sm:$0xff]
    %v340 = vld [vmem:[#allocation5 + $0x700] sm:$0xff]
    %v341 = vld [vmem:[#allocation5 + $0x708] sm:$0xff]
    %v342 = vld [vmem:[#allocation5 + $0x710] sm:$0xff]
    %v343 = vld [vmem:[#allocation5 + $0x718] sm:$0xff]
    %v344 = vld [vmem:[#allocation5 + $0x720] sm:$0xff]
    %v345 = vld [vmem:[#allocation5 + $0x728] sm:$0xff]
    %v346 = vld [vmem:[#allocation5 + $0x730] sm:$0xff]
    %v347 = vld [vmem:[#allocation5 + $0x738] sm:$0xff]
    %v348 = vld [vmem:[#allocation5 + $0x740] sm:$0xff]
    %v349 = vld [vmem:[#allocation5 + $0x748] sm:$0xff]
    %v350 = vld [vmem:[#allocation5 + $0x750] sm:$0xff]
    %v351 = vld [vmem:[#allocation5 + $0x758] sm:$0xff]
    %v352 = vld [vmem:[#allocation5 + $0x760] sm:$0xff]
    %v353 = vld [vmem:[#allocation5 + $0x768] sm:$0xff]
    %v354 = vld [vmem:[#allocation5 + $0x770] sm:$0xff]
    %v355 = vld [vmem:[#allocation5 + $0x778] sm:$0xff]
    %v356 = vld [vmem:[#allocation5 + $0x780] sm:$0xff]
    %v357 = vld [vmem:[#allocation5 + $0x788] sm:$0xff]
    %v358 = vld [vmem:[#allocation5 + $0x790] sm:$0xff]
    %v359 = vld [vmem:[#allocation5 + $0x798] sm:$0xff]
    %v360 = vld [vmem:[#allocation5 + $0x7a0] sm:$0xff]
    %v361 = vld [vmem:[#allocation5 + $0x7a8] sm:$0xff]
    %v362 = vld [vmem:[#allocation5 + $0x7b0] sm:$0xff]
    %v363 = vld [vmem:[#allocation5 + $0x7b8] sm:$0xff]
    %v364 = vld [vmem:[#allocation5 + $0x7c0] sm:$0xff]
    %v365 = vld [vmem:[#allocation5 + $0x7c8] sm:$0xff]
    %v366 = vld [vmem:[#allocation5 + $0x7d0] sm:$0xff]
    %v367 = vld [vmem:[#allocation5 + $0x7d8] sm:$0xff]
    %v368 = vld [vmem:[#allocation5 + $0x7e0] sm:$0xff]
    %v369 = vld [vmem:[#allocation5 + $0x7e8] sm:$0xff]
    %v370 = vld [vmem:[#allocation5 + $0x7f0] sm:$0xff]
    %v371 = vld [vmem:[#allocation5 + $0x7f8] sm:$0xff]
    %v372 = vld [vmem:[#allocation7] sm:$0xff]
    %v374 = vlaneseq
    %v375 = vshrl.u32 %v374, 7
    %v376 = vsub.s32 0, %v375
    %v377 = vrot.slane %v372, %v376
    %v378 = vlaneseq
    %v379 = vshrl.u32 %v378, 7
    %v380 = vsub.s32 1, %v379
    %v381 = vrot.slane %v372, %v380
    %v382 = vlaneseq
    %v383 = vshrl.u32 %v382, 7
    %v384 = vsub.s32 2, %v383
    %v385 = vrot.slane %v372, %v384
    %v386 = vlaneseq
    %v387 = vshrl.u32 %v386, 7
    %v388 = vsub.s32 3, %v387
    %v389 = vrot.slane %v372, %v388
    %v390 = vlaneseq
    %v391 = vshrl.u32 %v390, 7
    %v392 = vsub.s32 4, %v391
    %v393 = vrot.slane %v372, %v392
    %v394 = vlaneseq
    %v395 = vshrl.u32 %v394, 7
    %v396 = vsub.s32 5, %v395
    %v397 = vrot.slane %v372, %v396
    %v398 = vlaneseq
    %v399 = vshrl.u32 %v398, 7
    %v400 = vsub.s32 6, %v399
    %v401 = vrot.slane %v372, %v400
    %v402 = vlaneseq
    %v403 = vshrl.u32 %v402, 7
    %v404 = vsub.s32 7, %v403
    %v405 = vrot.slane %v372, %v404
    %414 = vmatprep.subr.mxu0 %v117
    %415 = vmatpush1.msra.mxu0 %v116
    %416 = vmatprep.subr.mxu0 %v125
    %417 = vmatpush1.msra.mxu0 %v124
    %418 = vmatprep.subr.mxu0 %v133
    %419 = vmatpush1.msra.mxu0 %v132
    %420 = vmatprep.subr.mxu0 %v141
    %421 = vmatpush1.msra.mxu0 %v140
    %422 = vmatprep.subr.mxu0 %v149
    %423 = vmatpush1.msra.mxu0 %v148
    %424 = vmatprep.subr.mxu0 %v157
    %425 = vmatpush1.msra.mxu0 %v156
    %426 = vmatprep.subr.mxu0 %v165
    %427 = vmatpush1.msra.mxu0 %v164
    %428 = vmatprep.subr.mxu0 %v173
    %429 = vmatpush1.msra.mxu0 %v172
    %430 = vmatprep.subr.mxu0 %v181
    %431 = vmatpush1.msra.mxu0 %v180
    %432 = vmatprep.subr.mxu0 %v189
    %433 = vmatpush1.msra.mxu0 %v188
    %434 = vmatprep.subr.mxu0 %v197
    %435 = vmatpush1.msra.mxu0 %v196
    %436 = vmatprep.subr.mxu0 %v205
    %437 = vmatpush1.msra.mxu0 %v204
    %438 = vmatprep.subr.mxu0 %v213
    %439 = vmatpush1.msra.mxu0 %v212
    %440 = vmatprep.subr.mxu0 %v221
    %441 = vmatpush1.msra.mxu0 %v220
    %442 = vmatprep.subr.mxu0 %v229
    %443 = vmatpush1.msra.mxu0 %v228
    %444 = vmatprep.subr.mxu0 %v237
    %445 = vmatpush1.msra.mxu0 %v236
    %446 = vmatprep.subr.mxu0 %v245
    %447 = vmatpush1.msra.mxu0 %v244
    %448 = vmatprep.subr.mxu0 %v253
    %449 = vmatpush1.msra.mxu0 %v252
    %450 = vmatprep.subr.mxu0 %v261
    %451 = vmatpush1.msra.mxu0 %v260
    %452 = vmatprep.subr.mxu0 %v269
    %453 = vmatpush1.msra.mxu0 %v268
    %454 = vmatprep.subr.mxu0 %v277
    %455 = vmatpush1.msra.mxu0 %v276
    %456 = vmatprep.subr.mxu0 %v285
    %457 = vmatpush1.msra.mxu0 %v284
    %458 = vmatprep.subr.mxu0 %v293
    %459 = vmatpush1.msra.mxu0 %v292
    %460 = vmatprep.subr.mxu0 %v301
    %461 = vmatpush1.msra.mxu0 %v300
    %462 = vmatprep.subr.mxu0 %v309
    %463 = vmatpush1.msra.mxu0 %v308
    %464 = vmatprep.subr.mxu0 %v317
    %465 = vmatpush1.msra.mxu0 %v316
    %466 = vmatprep.subr.mxu0 %v325
    %467 = vmatpush1.msra.mxu0 %v324
    %468 = vmatprep.subr.mxu0 %v333
    %469 = vmatpush1.msra.mxu0 %v332
    %470 = vmatprep.subr.mxu0 %v341
    %471 = vmatpush1.msra.mxu0 %v340
    %472 = vmatprep.subr.mxu0 %v349
    %473 = vmatpush1.msra.mxu0 %v348
    %474 = vmatprep.subr.mxu0 %v357
    %475 = vmatpush1.msra.mxu0 %v356
    %476 = vmatprep.subr.mxu0 %v365
    %477 = vmatpush1.msra.mxu0 %v364
    %478 = vmatprep.mubr.f32.mxu0 %v115
    %479 = vmatmul.mubr.f32.gmra.mrb[0].mxu0 %v114
    %v480 = vpop.f32.mrb[0].mxu0
    %v481 = vadd.f32 %v377, %v480
    %v482 = vpop.f32.mrb[0].mxu0
    %v483 = vadd.f32 %v381, %v482
    %484 = vdwg.mxu0
    %485 = vmatprep.subr.mxu0 %v119
    %486 = vmatpush1.msra.mxu0 %v118
    %487 = vmatprep.subr.mxu0 %v127
    %488 = vmatpush1.msra.mxu0 %v126
    %489 = vmatprep.subr.mxu0 %v135
    %490 = vmatpush1.msra.mxu0 %v134
    %491 = vmatprep.subr.mxu0 %v143
    %492 = vmatpush1.msra.mxu0 %v142
    %493 = vmatprep.subr.mxu0 %v151
    %494 = vmatpush1.msra.mxu0 %v150
    %495 = vmatprep.subr.mxu0 %v159
    %496 = vmatpush1.msra.mxu0 %v158
    %497 = vmatprep.subr.mxu0 %v167
    %498 = vmatpush1.msra.mxu0 %v166
    %499 = vmatprep.subr.mxu0 %v175
    %500 = vmatpush1.msra.mxu0 %v174
    %501 = vmatprep.subr.mxu0 %v183
    %502 = vmatpush1.msra.mxu0 %v182
    %503 = vmatprep.subr.mxu0 %v191
    %504 = vmatpush1.msra.mxu0 %v190
    %505 = vmatprep.subr.mxu0 %v199
    %506 = vmatpush1.msra.mxu0 %v198
    %507 = vmatprep.subr.mxu0 %v207
    %508 = vmatpush1.msra.mxu0 %v206
    %509 = vmatprep.subr.mxu0 %v215
    %510 = vmatpush1.msra.mxu0 %v214
    %511 = vmatprep.subr.mxu0 %v223
    %512 = vmatpush1.msra.mxu0 %v222
    %513 = vmatprep.subr.mxu0 %v231
    %514 = vmatpush1.msra.mxu0 %v230
    %515 = vmatprep.subr.mxu0 %v239
    %516 = vmatpush1.msra.mxu0 %v238
    %517 = vmatprep.subr.mxu0 %v247
    %518 = vmatpush1.msra.mxu0 %v246
    %519 = vmatprep.subr.mxu0 %v255
    %520 = vmatpush1.msra.mxu0 %v254
    %521 = vmatprep.subr.mxu0 %v263
    %522 = vmatpush1.msra.mxu0 %v262
    %523 = vmatprep.subr.mxu0 %v271
    %524 = vmatpush1.msra.mxu0 %v270
    %525 = vmatprep.subr.mxu0 %v279
    %526 = vmatpush1.msra.mxu0 %v278
    %527 = vmatprep.subr.mxu0 %v287
    %528 = vmatpush1.msra.mxu0 %v286
    %529 = vmatprep.subr.mxu0 %v295
    %530 = vmatpush1.msra.mxu0 %v294
    %531 = vmatprep.subr.mxu0 %v303
    %532 = vmatpush1.msra.mxu0 %v302
    %533 = vmatprep.subr.mxu0 %v311
    %534 = vmatpush1.msra.mxu0 %v310
    %535 = vmatprep.subr.mxu0 %v319
    %536 = vmatpush1.msra.mxu0 %v318
    %537 = vmatprep.subr.mxu0 %v327
    %538 = vmatpush1.msra.mxu0 %v326
    %539 = vmatprep.subr.mxu0 %v335
    %540 = vmatpush1.msra.mxu0 %v334
    %541 = vmatprep.subr.mxu0 %v343
    %542 = vmatpush1.msra.mxu0 %v342
    %543 = vmatprep.subr.mxu0 %v351
    %544 = vmatpush1.msra.mxu0 %v350
    %545 = vmatprep.subr.mxu0 %v359
    %546 = vmatpush1.msra.mxu0 %v358
    %547 = vmatprep.subr.mxu0 %v367
    %548 = vmatpush1.msra.mxu0 %v366
    %549 = vmatprep.mubr.f32.mxu0 %v115
    %550 = vmatmul.mubr.f32.gmra.mrb[0].mxu0 %v114
    %v551 = vpop.f32.mrb[0].mxu0
    %v552 = vadd.f32 %v385, %v551
    %v553 = vpop.f32.mrb[0].mxu0
    %v554 = vadd.f32 %v389, %v553
    %555 = vdwg.mxu0
    %556 = vmatprep.subr.mxu0 %v121
    %557 = vmatpush1.msra.mxu0 %v120
    %558 = vmatprep.subr.mxu0 %v129
    %559 = vmatpush1.msra.mxu0 %v128
    %560 = vmatprep.subr.mxu0 %v137
    %561 = vmatpush1.msra.mxu0 %v136
    %562 = vmatprep.subr.mxu0 %v145
    %563 = vmatpush1.msra.mxu0 %v144
    %564 = vmatprep.subr.mxu0 %v153
    %565 = vmatpush1.msra.mxu0 %v152
    %566 = vmatprep.subr.mxu0 %v161
    %567 = vmatpush1.msra.mxu0 %v160
    %568 = vmatprep.subr.mxu0 %v169
    %569 = vmatpush1.msra.mxu0 %v168
    %570 = vmatprep.subr.mxu0 %v177
    %571 = vmatpush1.msra.mxu0 %v176
    %572 = vmatprep.subr.mxu0 %v185
    %573 = vmatpush1.msra.mxu0 %v184
    %574 = vmatprep.subr.mxu0 %v193
    %575 = vmatpush1.msra.mxu0 %v192
    %576 = vmatprep.subr.mxu0 %v201
    %577 = vmatpush1.msra.mxu0 %v200
    %578 = vmatprep.subr.mxu0 %v209
    %579 = vmatpush1.msra.mxu0 %v208
    %580 = vmatprep.subr.mxu0 %v217
    %581 = vmatpush1.msra.mxu0 %v216
    %582 = vmatprep.subr.mxu0 %v225
    %583 = vmatpush1.msra.mxu0 %v224
    %584 = vmatprep.subr.mxu0 %v233
    %585 = vmatpush1.msra.mxu0 %v232
    %586 = vmatprep.subr.mxu0 %v241
    %587 = vmatpush1.msra.mxu0 %v240
    %588 = vmatprep.subr.mxu0 %v249
    %589 = vmatpush1.msra.mxu0 %v248
    %590 = vmatprep.subr.mxu0 %v257
    %591 = vmatpush1.msra.mxu0 %v256
    %592 = vmatprep.subr.mxu0 %v265
    %593 = vmatpush1.msra.mxu0 %v264
    %594 = vmatprep.subr.mxu0 %v273
    %595 = vmatpush1.msra.mxu0 %v272
    %596 = vmatprep.subr.mxu0 %v281
    %597 = vmatpush1.msra.mxu0 %v280
    %598 = vmatprep.subr.mxu0 %v289
    %599 = vmatpush1.msra.mxu0 %v288
    %600 = vmatprep.subr.mxu0 %v297
    %601 = vmatpush1.msra.mxu0 %v296
    %602 = vmatprep.subr.mxu0 %v305
    %603 = vmatpush1.msra.mxu0 %v304
    %604 = vmatprep.subr.mxu0 %v313
    %605 = vmatpush1.msra.mxu0 %v312
    %606 = vmatprep.subr.mxu0 %v321
    %607 = vmatpush1.msra.mxu0 %v320
    %608 = vmatprep.subr.mxu0 %v329
    %609 = vmatpush1.msra.mxu0 %v328
    %610 = vmatprep.subr.mxu0 %v337
    %611 = vmatpush1.msra.mxu0 %v336
    %612 = vmatprep.subr.mxu0 %v345
    %613 = vmatpush1.msra.mxu0 %v344
    %614 = vmatprep.subr.mxu0 %v353
    %615 = vmatpush1.msra.mxu0 %v352
    %616 = vmatprep.subr.mxu0 %v361
    %617 = vmatpush1.msra.mxu0 %v360
    %618 = vmatprep.subr.mxu0 %v369
    %619 = vmatpush1.msra.mxu0 %v368
    %620 = vmatprep.mubr.f32.mxu0 %v115
    %621 = vmatmul.mubr.f32.gmra.mrb[0].mxu0 %v114
    %v622 = vpop.f32.mrb[0].mxu0
    %v623 = vadd.f32 %v393, %v622
    %v624 = vpop.f32.mrb[0].mxu0
    %v625 = vadd.f32 %v397, %v624
    %626 = vdwg.mxu0
    %627 = vmatprep.subr.mxu0 %v123
    %628 = vmatpush1.msra.mxu0 %v122
    %629 = vmatprep.subr.mxu0 %v131
    %630 = vmatpush1.msra.mxu0 %v130
    %631 = vmatprep.subr.mxu0 %v139
    %632 = vmatpush1.msra.mxu0 %v138
    %633 = vmatprep.subr.mxu0 %v147
    %634 = vmatpush1.msra.mxu0 %v146
    %635 = vmatprep.subr.mxu0 %v155
    %636 = vmatpush1.msra.mxu0 %v154
    %637 = vmatprep.subr.mxu0 %v163
    %638 = vmatpush1.msra.mxu0 %v162
    %639 = vmatprep.subr.mxu0 %v171
    %640 = vmatpush1.msra.mxu0 %v170
    %641 = vmatprep.subr.mxu0 %v179
    %642 = vmatpush1.msra.mxu0 %v178
    %643 = vmatprep.subr.mxu0 %v187
    %644 = vmatpush1.msra.mxu0 %v186
    %645 = vmatprep.subr.mxu0 %v195
    %646 = vmatpush1.msra.mxu0 %v194
    %647 = vmatprep.subr.mxu0 %v203
    %648 = vmatpush1.msra.mxu0 %v202
    %649 = vmatprep.subr.mxu0 %v211
    %650 = vmatpush1.msra.mxu0 %v210
    %651 = vmatprep.subr.mxu0 %v219
    %652 = vmatpush1.msra.mxu0 %v218
    %653 = vmatprep.subr.mxu0 %v227
    %654 = vmatpush1.msra.mxu0 %v226
    %655 = vmatprep.subr.mxu0 %v235
    %656 = vmatpush1.msra.mxu0 %v234
    %657 = vmatprep.subr.mxu0 %v243
    %658 = vmatpush1.msra.mxu0 %v242
    %659 = vmatprep.subr.mxu0 %v251
    %660 = vmatpush1.msra.mxu0 %v250
    %661 = vmatprep.subr.mxu0 %v259
    %662 = vmatpush1.msra.mxu0 %v258
    %663 = vmatprep.subr.mxu0 %v267
    %664 = vmatpush1.msra.mxu0 %v266
    %665 = vmatprep.subr.mxu0 %v275
    %666 = vmatpush1.msra.mxu0 %v274
    %667 = vmatprep.subr.mxu0 %v283
    %668 = vmatpush1.msra.mxu0 %v282
    %669 = vmatprep.subr.mxu0 %v291
    %670 = vmatpush1.msra.mxu0 %v290
    %671 = vmatprep.subr.mxu0 %v299
    %672 = vmatpush1.msra.mxu0 %v298
    %673 = vmatprep.subr.mxu0 %v307
    %674 = vmatpush1.msra.mxu0 %v306
    %675 = vmatprep.subr.mxu0 %v315
    %676 = vmatpush1.msra.mxu0 %v314
    %677 = vmatprep.subr.mxu0 %v323
    %678 = vmatpush1.msra.mxu0 %v322
    %679 = vmatprep.subr.mxu0 %v331
    %680 = vmatpush1.msra.mxu0 %v330
    %681 = vmatprep.subr.mxu0 %v339
    %682 = vmatpush1.msra.mxu0 %v338
    %683 = vmatprep.subr.mxu0 %v347
    %684 = vmatpush1.msra.mxu0 %v346
    %685 = vmatprep.subr.mxu0 %v355
    %686 = vmatpush1.msra.mxu0 %v354
    %687 = vmatprep.subr.mxu0 %v363
    %688 = vmatpush1.msra.mxu0 %v362
    %689 = vmatprep.subr.mxu0 %v371
    %690 = vmatpush1.msra.mxu0 %v370
    %691 = vmatprep.mubr.f32.mxu0 %v115
    %692 = vmatmul.mubr.f32.gmra.mrb[0].mxu0 %v114
    %v693 = vpop.f32.mrb[0].mxu0
    %v694 = vadd.f32 %v401, %v693
    %v695 = vpop.f32.mrb[0].mxu0
    %v696 = vadd.f32 %v405, %v695
    %697 = vdwg.mxu0
    %v698 = vmax.f32 %v481, 0.0
    %v699 = vmax.f32 %v483, 0.0
    %v700 = vmax.f32 %v552, 0.0
    %v701 = vmax.f32 %v554, 0.0
    %v702 = vmax.f32 %v623, 0.0
    %v703 = vmax.f32 %v625, 0.0
    %v704 = vmax.f32 %v694, 0.0
    %v705 = vmax.f32 %v696, 0.0
    %v706 = vld [vmem:[#allocation8] sm:$0xff]
    %v707 = vld [vmem:[#allocation8 + $0x8] sm:$0xff]
    %v708 = vld [vmem:[#allocation8 + $0x10] sm:$0xff]
    %v709 = vld [vmem:[#allocation8 + $0x18] sm:$0xff]
    %v710 = vld [vmem:[#allocation8 + $0x20] sm:$0xff]
    %v711 = vld [vmem:[#allocation8 + $0x28] sm:$0xff]
    %v712 = vld [vmem:[#allocation8 + $0x30] sm:$0xff]
    %v713 = vld [vmem:[#allocation8 + $0x38] sm:$0xff]
    %v714 = vld [vmem:[#allocation8 + $0x40] sm:$0xff]
    %v715 = vld [vmem:[#allocation8 + $0x48] sm:$0xff]
    %v716 = vld [vmem:[#allocation8 + $0x50] sm:$0xff]
    %v717 = vld [vmem:[#allocation8 + $0x58] sm:$0xff]
    %v718 = vld [vmem:[#allocation8 + $0x60] sm:$0xff]
    %v719 = vld [vmem:[#allocation8 + $0x68] sm:$0xff]
    %v720 = vld [vmem:[#allocation8 + $0x70] sm:$0xff]
    %v721 = vld [vmem:[#allocation8 + $0x78] sm:$0xff]
    %v722 = vld [vmem:[#allocation8 + $0x80] sm:$0xff]
    %v723 = vld [vmem:[#allocation8 + $0x88] sm:$0xff]
    %v724 = vld [vmem:[#allocation8 + $0x90] sm:$0xff]
    %v725 = vld [vmem:[#allocation8 + $0x98] sm:$0xff]
    %v726 = vld [vmem:[#allocation8 + $0xa0] sm:$0xff]
    %v727 = vld [vmem:[#allocation8 + $0xa8] sm:$0xff]
    %v728 = vld [vmem:[#allocation8 + $0xb0] sm:$0xff]
    %v729 = vld [vmem:[#allocation8 + $0xb8] sm:$0xff]
    %v730 = vld [vmem:[#allocation8 + $0xc0] sm:$0xff]
    %v731 = vld [vmem:[#allocation8 + $0xc8] sm:$0xff]
    %v732 = vld [vmem:[#allocation8 + $0xd0] sm:$0xff]
    %v733 = vld [vmem:[#allocation8 + $0xd8] sm:$0xff]
    %v734 = vld [vmem:[#allocation8 + $0xe0] sm:$0xff]
    %v735 = vld [vmem:[#allocation8 + $0xe8] sm:$0xff]
    %v736 = vld [vmem:[#allocation8 + $0xf0] sm:$0xff]
    %v737 = vld [vmem:[#allocation8 + $0xf8] sm:$0xff]
    %v738 = vld [vmem:[#allocation8 + $0x100] sm:$0xff]
    %v739 = vld [vmem:[#allocation8 + $0x108] sm:$0xff]
    %v740 = vld [vmem:[#allocation8 + $0x110] sm:$0xff]
    %v741 = vld [vmem:[#allocation8 + $0x118] sm:$0xff]
    %v742 = vld [vmem:[#allocation8 + $0x120] sm:$0xff]
    %v743 = vld [vmem:[#allocation8 + $0x128] sm:$0xff]
    %v744 = vld [vmem:[#allocation8 + $0x130] sm:$0xff]
    %v745 = vld [vmem:[#allocation8 + $0x138] sm:$0xff]
    %v746 = vld [vmem:[#allocation8 + $0x140] sm:$0xff]
    %v747 = vld [vmem:[#allocation8 + $0x148] sm:$0xff]
    %v748 = vld [vmem:[#allocation8 + $0x150] sm:$0xff]
    %v749 = vld [vmem:[#allocation8 + $0x158] sm:$0xff]
    %v750 = vld [vmem:[#allocation8 + $0x160] sm:$0xff]
    %v751 = vld [vmem:[#allocation8 + $0x168] sm:$0xff]
    %v752 = vld [vmem:[#allocation8 + $0x170] sm:$0xff]
    %v753 = vld [vmem:[#allocation8 + $0x178] sm:$0xff]
    %v754 = vld [vmem:[#allocation8 + $0x180] sm:$0xff]
    %v755 = vld [vmem:[#allocation8 + $0x188] sm:$0xff]
    %v756 = vld [vmem:[#allocation8 + $0x190] sm:$0xff]
    %v757 = vld [vmem:[#allocation8 + $0x198] sm:$0xff]
    %v758 = vld [vmem:[#allocation8 + $0x1a0] sm:$0xff]
    %v759 = vld [vmem:[#allocation8 + $0x1a8] sm:$0xff]
    %v760 = vld [vmem:[#allocation8 + $0x1b0] sm:$0xff]
    %v761 = vld [vmem:[#allocation8 + $0x1b8] sm:$0xff]
    %v762 = vld [vmem:[#allocation8 + $0x1c0] sm:$0xff]
    %v763 = vld [vmem:[#allocation8 + $0x1c8] sm:$0xff]
    %v764 = vld [vmem:[#allocation8 + $0x1d0] sm:$0xff]
    %v765 = vld [vmem:[#allocation8 + $0x1d8] sm:$0xff]
    %v766 = vld [vmem:[#allocation8 + $0x1e0] sm:$0xff]
    %v767 = vld [vmem:[#allocation8 + $0x1e8] sm:$0xff]
    %v768 = vld [vmem:[#allocation8 + $0x1f0] sm:$0xff]
    %v769 = vld [vmem:[#allocation8 + $0x1f8] sm:$0xff]
    %v770 = vld [vmem:[#allocation8 + $0x200] sm:$0xff]
    %v771 = vld [vmem:[#allocation8 + $0x208] sm:$0xff]
    %v772 = vld [vmem:[#allocation8 + $0x210] sm:$0xff]
    %v773 = vld [vmem:[#allocation8 + $0x218] sm:$0xff]
    %v774 = vld [vmem:[#allocation8 + $0x220] sm:$0xff]
    %v775 = vld [vmem:[#allocation8 + $0x228] sm:$0xff]
    %v776 = vld [vmem:[#allocation8 + $0x230] sm:$0xff]
    %v777 = vld [vmem:[#allocation8 + $0x238] sm:$0xff]
    %v778 = vld [vmem:[#allocation8 + $0x240] sm:$0xff]
    %v779 = vld [vmem:[#allocation8 + $0x248] sm:$0xff]
    %v780 = vld [vmem:[#allocation8 + $0x250] sm:$0xff]
    %v781 = vld [vmem:[#allocation8 + $0x258] sm:$0xff]
    %v782 = vld [vmem:[#allocation8 + $0x260] sm:$0xff]
    %v783 = vld [vmem:[#allocation8 + $0x268] sm:$0xff]
    %v784 = vld [vmem:[#allocation8 + $0x270] sm:$0xff]
    %v785 = vld [vmem:[#allocation8 + $0x278] sm:$0xff]
    %v786 = vld [vmem:[#allocation8 + $0x280] sm:$0xff]
    %v787 = vld [vmem:[#allocation8 + $0x288] sm:$0xff]
    %v788 = vld [vmem:[#allocation8 + $0x290] sm:$0xff]
    %v789 = vld [vmem:[#allocation8 + $0x298] sm:$0xff]
    %v790 = vld [vmem:[#allocation8 + $0x2a0] sm:$0xff]
    %v791 = vld [vmem:[#allocation8 + $0x2a8] sm:$0xff]
    %v792 = vld [vmem:[#allocation8 + $0x2b0] sm:$0xff]
    %v793 = vld [vmem:[#allocation8 + $0x2b8] sm:$0xff]
    %v794 = vld [vmem:[#allocation8 + $0x2c0] sm:$0xff]
    %v795 = vld [vmem:[#allocation8 + $0x2c8] sm:$0xff]
    %v796 = vld [vmem:[#allocation8 + $0x2d0] sm:$0xff]
    %v797 = vld [vmem:[#allocation8 + $0x2d8] sm:$0xff]
    %v798 = vld [vmem:[#allocation8 + $0x2e0] sm:$0xff]
    %v799 = vld [vmem:[#allocation8 + $0x2e8] sm:$0xff]
    %v800 = vld [vmem:[#allocation8 + $0x2f0] sm:$0xff]
    %v801 = vld [vmem:[#allocation8 + $0x2f8] sm:$0xff]
    %v802 = vld [vmem:[#allocation8 + $0x300] sm:$0xff]
    %v803 = vld [vmem:[#allocation8 + $0x308] sm:$0xff]
    %v804 = vld [vmem:[#allocation8 + $0x310] sm:$0xff]
    %v805 = vld [vmem:[#allocation8 + $0x318] sm:$0xff]
    %v806 = vld [vmem:[#allocation8 + $0x320] sm:$0xff]
    %v807 = vld [vmem:[#allocation8 + $0x328] sm:$0xff]
    %v808 = vld [vmem:[#allocation8 + $0x330] sm:$0xff]
    %v809 = vld [vmem:[#allocation8 + $0x338] sm:$0xff]
    %v810 = vld [vmem:[#allocation8 + $0x340] sm:$0xff]
    %v811 = vld [vmem:[#allocation8 + $0x348] sm:$0xff]
    %v812 = vld [vmem:[#allocation8 + $0x350] sm:$0xff]
    %v813 = vld [vmem:[#allocation8 + $0x358] sm:$0xff]
    %v814 = vld [vmem:[#allocation8 + $0x360] sm:$0xff]
    %v815 = vld [vmem:[#allocation8 + $0x368] sm:$0xff]
    %v816 = vld [vmem:[#allocation8 + $0x370] sm:$0xff]
    %v817 = vld [vmem:[#allocation8 + $0x378] sm:$0xff]
    %v818 = vld [vmem:[#allocation8 + $0x380] sm:$0xff]
    %v819 = vld [vmem:[#allocation8 + $0x388] sm:$0xff]
    %v820 = vld [vmem:[#allocation8 + $0x390] sm:$0xff]
    %v821 = vld [vmem:[#allocation8 + $0x398] sm:$0xff]
    %v822 = vld [vmem:[#allocation8 + $0x3a0] sm:$0xff]
    %v823 = vld [vmem:[#allocation8 + $0x3a8] sm:$0xff]
    %v824 = vld [vmem:[#allocation8 + $0x3b0] sm:$0xff]
    %v825 = vld [vmem:[#allocation8 + $0x3b8] sm:$0xff]
    %v826 = vld [vmem:[#allocation8 + $0x3c0] sm:$0xff]
    %v827 = vld [vmem:[#allocation8 + $0x3c8] sm:$0xff]
    %v828 = vld [vmem:[#allocation8 + $0x3d0] sm:$0xff]
    %v829 = vld [vmem:[#allocation8 + $0x3d8] sm:$0xff]
    %v830 = vld [vmem:[#allocation8 + $0x3e0] sm:$0xff]
    %v831 = vld [vmem:[#allocation8 + $0x3e8] sm:$0xff]
    %v832 = vld [vmem:[#allocation8 + $0x3f0] sm:$0xff]
    %v833 = vld [vmem:[#allocation8 + $0x3f8] sm:$0xff]
    %v834 = vld [vmem:[#allocation8 + $0x400] sm:$0xff]
    %v835 = vld [vmem:[#allocation8 + $0x408] sm:$0xff]
    %v836 = vld [vmem:[#allocation8 + $0x410] sm:$0xff]
    %v837 = vld [vmem:[#allocation8 + $0x418] sm:$0xff]
    %v838 = vld [vmem:[#allocation8 + $0x420] sm:$0xff]
    %v839 = vld [vmem:[#allocation8 + $0x428] sm:$0xff]
    %v840 = vld [vmem:[#allocation8 + $0x430] sm:$0xff]
    %v841 = vld [vmem:[#allocation8 + $0x438] sm:$0xff]
    %v842 = vld [vmem:[#allocation8 + $0x440] sm:$0xff]
    %v843 = vld [vmem:[#allocation8 + $0x448] sm:$0xff]
    %v844 = vld [vmem:[#allocation8 + $0x450] sm:$0xff]
    %v845 = vld [vmem:[#allocation8 + $0x458] sm:$0xff]
    %v846 = vld [vmem:[#allocation8 + $0x460] sm:$0xff]
    %v847 = vld [vmem:[#allocation8 + $0x468] sm:$0xff]
    %v848 = vld [vmem:[#allocation8 + $0x470] sm:$0xff]
    %v849 = vld [vmem:[#allocation8 + $0x478] sm:$0xff]
    %v850 = vld [vmem:[#allocation8 + $0x480] sm:$0xff]
    %v851 = vld [vmem:[#allocation8 + $0x488] sm:$0xff]
    %v852 = vld [vmem:[#allocation8 + $0x490] sm:$0xff]
    %v853 = vld [vmem:[#allocation8 + $0x498] sm:$0xff]
    %v854 = vld [vmem:[#allocation8 + $0x4a0] sm:$0xff]
    %v855 = vld [vmem:[#allocation8 + $0x4a8] sm:$0xff]
    %v856 = vld [vmem:[#allocation8 + $0x4b0] sm:$0xff]
    %v857 = vld [vmem:[#allocation8 + $0x4b8] sm:$0xff]
    %v858 = vld [vmem:[#allocation8 + $0x4c0] sm:$0xff]
    %v859 = vld [vmem:[#allocation8 + $0x4c8] sm:$0xff]
    %v860 = vld [vmem:[#allocation8 + $0x4d0] sm:$0xff]
    %v861 = vld [vmem:[#allocation8 + $0x4d8] sm:$0xff]
    %v862 = vld [vmem:[#allocation8 + $0x4e0] sm:$0xff]
    %v863 = vld [vmem:[#allocation8 + $0x4e8] sm:$0xff]
    %v864 = vld [vmem:[#allocation8 + $0x4f0] sm:$0xff]
    %v865 = vld [vmem:[#allocation8 + $0x4f8] sm:$0xff]
    %v866 = vld [vmem:[#allocation8 + $0x500] sm:$0xff]
    %v867 = vld [vmem:[#allocation8 + $0x508] sm:$0xff]
    %v868 = vld [vmem:[#allocation8 + $0x510] sm:$0xff]
    %v869 = vld [vmem:[#allocation8 + $0x518] sm:$0xff]
    %v870 = vld [vmem:[#allocation8 + $0x520] sm:$0xff]
    %v871 = vld [vmem:[#allocation8 + $0x528] sm:$0xff]
    %v872 = vld [vmem:[#allocation8 + $0x530] sm:$0xff]
    %v873 = vld [vmem:[#allocation8 + $0x538] sm:$0xff]
    %v874 = vld [vmem:[#allocation8 + $0x540] sm:$0xff]
    %v875 = vld [vmem:[#allocation8 + $0x548] sm:$0xff]
    %v876 = vld [vmem:[#allocation8 + $0x550] sm:$0xff]
    %v877 = vld [vmem:[#allocation8 + $0x558] sm:$0xff]
    %v878 = vld [vmem:[#allocation8 + $0x560] sm:$0xff]
    %v879 = vld [vmem:[#allocation8 + $0x568] sm:$0xff]
    %v880 = vld [vmem:[#allocation8 + $0x570] sm:$0xff]
    %v881 = vld [vmem:[#allocation8 + $0x578] sm:$0xff]
    %v882 = vld [vmem:[#allocation8 + $0x580] sm:$0xff]
    %v883 = vld [vmem:[#allocation8 + $0x588] sm:$0xff]
    %v884 = vld [vmem:[#allocation8 + $0x590] sm:$0xff]
    %v885 = vld [vmem:[#allocation8 + $0x598] sm:$0xff]
    %v886 = vld [vmem:[#allocation8 + $0x5a0] sm:$0xff]
    %v887 = vld [vmem:[#allocation8 + $0x5a8] sm:$0xff]
    %v888 = vld [vmem:[#allocation8 + $0x5b0] sm:$0xff]
    %v889 = vld [vmem:[#allocation8 + $0x5b8] sm:$0xff]
    %v890 = vld [vmem:[#allocation8 + $0x5c0] sm:$0xff]
    %v891 = vld [vmem:[#allocation8 + $0x5c8] sm:$0xff]
    %v892 = vld [vmem:[#allocation8 + $0x5d0] sm:$0xff]
    %v893 = vld [vmem:[#allocation8 + $0x5d8] sm:$0xff]
    %v894 = vld [vmem:[#allocation8 + $0x5e0] sm:$0xff]
    %v895 = vld [vmem:[#allocation8 + $0x5e8] sm:$0xff]
    %v896 = vld [vmem:[#allocation8 + $0x5f0] sm:$0xff]
    %v897 = vld [vmem:[#allocation8 + $0x5f8] sm:$0xff]
    %v898 = vld [vmem:[#allocation8 + $0x600] sm:$0xff]
    %v899 = vld [vmem:[#allocation8 + $0x608] sm:$0xff]
    %v900 = vld [vmem:[#allocation8 + $0x610] sm:$0xff]
    %v901 = vld [vmem:[#allocation8 + $0x618] sm:$0xff]
    %v902 = vld [vmem:[#allocation8 + $0x620] sm:$0xff]
    %v903 = vld [vmem:[#allocation8 + $0x628] sm:$0xff]
    %v904 = vld [vmem:[#allocation8 + $0x630] sm:$0xff]
    %v905 = vld [vmem:[#allocation8 + $0x638] sm:$0xff]
    %v906 = vld [vmem:[#allocation8 + $0x640] sm:$0xff]
    %v907 = vld [vmem:[#allocation8 + $0x648] sm:$0xff]
    %v908 = vld [vmem:[#allocation8 + $0x650] sm:$0xff]
    %v909 = vld [vmem:[#allocation8 + $0x658] sm:$0xff]
    %v910 = vld [vmem:[#allocation8 + $0x660] sm:$0xff]
    %v911 = vld [vmem:[#allocation8 + $0x668] sm:$0xff]
    %v912 = vld [vmem:[#allocation8 + $0x670] sm:$0xff]
    %v913 = vld [vmem:[#allocation8 + $0x678] sm:$0xff]
    %v914 = vld [vmem:[#allocation8 + $0x680] sm:$0xff]
    %v915 = vld [vmem:[#allocation8 + $0x688] sm:$0xff]
    %v916 = vld [vmem:[#allocation8 + $0x690] sm:$0xff]
    %v917 = vld [vmem:[#allocation8 + $0x698] sm:$0xff]
    %v918 = vld [vmem:[#allocation8 + $0x6a0] sm:$0xff]
    %v919 = vld [vmem:[#allocation8 + $0x6a8] sm:$0xff]
    %v920 = vld [vmem:[#allocation8 + $0x6b0] sm:$0xff]
    %v921 = vld [vmem:[#allocation8 + $0x6b8] sm:$0xff]
    %v922 = vld [vmem:[#allocation8 + $0x6c0] sm:$0xff]
    %v923 = vld [vmem:[#allocation8 + $0x6c8] sm:$0xff]
    %v924 = vld [vmem:[#allocation8 + $0x6d0] sm:$0xff]
    %v925 = vld [vmem:[#allocation8 + $0x6d8] sm:$0xff]
    %v926 = vld [vmem:[#allocation8 + $0x6e0] sm:$0xff]
    %v927 = vld [vmem:[#allocation8 + $0x6e8] sm:$0xff]
    %v928 = vld [vmem:[#allocation8 + $0x6f0] sm:$0xff]
    %v929 = vld [vmem:[#allocation8 + $0x6f8] sm:$0xff]
    %v930 = vld [vmem:[#allocation8 + $0x700] sm:$0xff]
    %v931 = vld [vmem:[#allocation8 + $0x708] sm:$0xff]
    %v932 = vld [vmem:[#allocation8 + $0x710] sm:$0xff]
    %v933 = vld [vmem:[#allocation8 + $0x718] sm:$0xff]
    %v934 = vld [vmem:[#allocation8 + $0x720] sm:$0xff]
    %v935 = vld [vmem:[#allocation8 + $0x728] sm:$0xff]
    %v936 = vld [vmem:[#allocation8 + $0x730] sm:$0xff]
    %v937 = vld [vmem:[#allocation8 + $0x738] sm:$0xff]
    %v938 = vld [vmem:[#allocation8 + $0x740] sm:$0xff]
    %v939 = vld [vmem:[#allocation8 + $0x748] sm:$0xff]
    %v940 = vld [vmem:[#allocation8 + $0x750] sm:$0xff]
    %v941 = vld [vmem:[#allocation8 + $0x758] sm:$0xff]
    %v942 = vld [vmem:[#allocation8 + $0x760] sm:$0xff]
    %v943 = vld [vmem:[#allocation8 + $0x768] sm:$0xff]
    %v944 = vld [vmem:[#allocation8 + $0x770] sm:$0xff]
    %v945 = vld [vmem:[#allocation8 + $0x778] sm:$0xff]
    %v946 = vld [vmem:[#allocation8 + $0x780] sm:$0xff]
    %v947 = vld [vmem:[#allocation8 + $0x788] sm:$0xff]
    %v948 = vld [vmem:[#allocation8 + $0x790] sm:$0xff]
    %v949 = vld [vmem:[#allocation8 + $0x798] sm:$0xff]
    %v950 = vld [vmem:[#allocation8 + $0x7a0] sm:$0xff]
    %v951 = vld [vmem:[#allocation8 + $0x7a8] sm:$0xff]
    %v952 = vld [vmem:[#allocation8 + $0x7b0] sm:$0xff]
    %v953 = vld [vmem:[#allocation8 + $0x7b8] sm:$0xff]
    %v954 = vld [vmem:[#allocation8 + $0x7c0] sm:$0xff]
    %v955 = vld [vmem:[#allocation8 + $0x7c8] sm:$0xff]
    %v956 = vld [vmem:[#allocation8 + $0x7d0] sm:$0xff]
    %v957 = vld [vmem:[#allocation8 + $0x7d8] sm:$0xff]
    %v958 = vld [vmem:[#allocation8 + $0x7e0] sm:$0xff]
    %v959 = vld [vmem:[#allocation8 + $0x7e8] sm:$0xff]
    %v960 = vld [vmem:[#allocation8 + $0x7f0] sm:$0xff]
    %v961 = vld [vmem:[#allocation8 + $0x7f8] sm:$0xff]
    %v962 = vld [vmem:[#allocation8 + $0x800] sm:$0xff]
    %v963 = vld [vmem:[#allocation8 + $0x808] sm:$0xff]
    %v964 = vld [vmem:[#allocation8 + $0x810] sm:$0xff]
    %v965 = vld [vmem:[#allocation8 + $0x818] sm:$0xff]
    %v966 = vld [vmem:[#allocation8 + $0x820] sm:$0xff]
    %v967 = vld [vmem:[#allocation8 + $0x828] sm:$0xff]
    %v968 = vld [vmem:[#allocation8 + $0x830] sm:$0xff]
    %v969 = vld [vmem:[#allocation8 + $0x838] sm:$0xff]
    %v970 = vld [vmem:[#allocation8 + $0x840] sm:$0xff]
    %v971 = vld [vmem:[#allocation8 + $0x848] sm:$0xff]
    %v972 = vld [vmem:[#allocation8 + $0x850] sm:$0xff]
    %v973 = vld [vmem:[#allocation8 + $0x858] sm:$0xff]
    %v974 = vld [vmem:[#allocation8 + $0x860] sm:$0xff]
    %v975 = vld [vmem:[#allocation8 + $0x868] sm:$0xff]
    %v976 = vld [vmem:[#allocation8 + $0x870] sm:$0xff]
    %v977 = vld [vmem:[#allocation8 + $0x878] sm:$0xff]
    %v978 = vld [vmem:[#allocation8 + $0x880] sm:$0xff]
    %v979 = vld [vmem:[#allocation8 + $0x888] sm:$0xff]
    %v980 = vld [vmem:[#allocation8 + $0x890] sm:$0xff]
    %v981 = vld [vmem:[#allocation8 + $0x898] sm:$0xff]
    %v982 = vld [vmem:[#allocation8 + $0x8a0] sm:$0xff]
    %v983 = vld [vmem:[#allocation8 + $0x8a8] sm:$0xff]
    %v984 = vld [vmem:[#allocation8 + $0x8b0] sm:$0xff]
    %v985 = vld [vmem:[#allocation8 + $0x8b8] sm:$0xff]
    %v986 = vld [vmem:[#allocation8 + $0x8c0] sm:$0xff]
    %v987 = vld [vmem:[#allocation8 + $0x8c8] sm:$0xff]
    %v988 = vld [vmem:[#allocation8 + $0x8d0] sm:$0xff]
    %v989 = vld [vmem:[#allocation8 + $0x8d8] sm:$0xff]
    %v990 = vld [vmem:[#allocation8 + $0x8e0] sm:$0xff]
    %v991 = vld [vmem:[#allocation8 + $0x8e8] sm:$0xff]
    %v992 = vld [vmem:[#allocation8 + $0x8f0] sm:$0xff]
    %v993 = vld [vmem:[#allocation8 + $0x8f8] sm:$0xff]
    %v994 = vld [vmem:[#allocation8 + $0x900] sm:$0xff]
    %v995 = vld [vmem:[#allocation8 + $0x908] sm:$0xff]
    %v996 = vld [vmem:[#allocation8 + $0x910] sm:$0xff]
    %v997 = vld [vmem:[#allocation8 + $0x918] sm:$0xff]
    %v998 = vld [vmem:[#allocation8 + $0x920] sm:$0xff]
    %v999 = vld [vmem:[#allocation8 + $0x928] sm:$0xff]
    %v1000 = vld [vmem:[#allocation8 + $0x930] sm:$0xff]
    %v1001 = vld [vmem:[#allocation8 + $0x938] sm:$0xff]
    %v1002 = vld [vmem:[#allocation8 + $0x940] sm:$0xff]
    %v1003 = vld [vmem:[#allocation8 + $0x948] sm:$0xff]
    %v1004 = vld [vmem:[#allocation8 + $0x950] sm:$0xff]
    %v1005 = vld [vmem:[#allocation8 + $0x958] sm:$0xff]
    %v1006 = vld [vmem:[#allocation8 + $0x960] sm:$0xff]
    %v1007 = vld [vmem:[#allocation8 + $0x968] sm:$0xff]
    %v1008 = vld [vmem:[#allocation8 + $0x970] sm:$0xff]
    %v1009 = vld [vmem:[#allocation8 + $0x978] sm:$0xff]
    %v1010 = vld [vmem:[#allocation8 + $0x980] sm:$0xff]
    %v1011 = vld [vmem:[#allocation8 + $0x988] sm:$0xff]
    %v1012 = vld [vmem:[#allocation8 + $0x990] sm:$0xff]
    %v1013 = vld [vmem:[#allocation8 + $0x998] sm:$0xff]
    %v1014 = vld [vmem:[#allocation8 + $0x9a0] sm:$0xff]
    %v1015 = vld [vmem:[#allocation8 + $0x9a8] sm:$0xff]
    %v1016 = vld [vmem:[#allocation8 + $0x9b0] sm:$0xff]
    %v1017 = vld [vmem:[#allocation8 + $0x9b8] sm:$0xff]
    %v1018 = vld [vmem:[#allocation8 + $0x9c0] sm:$0xff]
    %v1019 = vld [vmem:[#allocation8 + $0x9c8] sm:$0xff]
    %v1020 = vld [vmem:[#allocation8 + $0x9d0] sm:$0xff]
    %v1021 = vld [vmem:[#allocation8 + $0x9d8] sm:$0xff]
    %v1022 = vld [vmem:[#allocation8 + $0x9e0] sm:$0xff]
    %v1023 = vld [vmem:[#allocation8 + $0x9e8] sm:$0xff]
    %v1024 = vld [vmem:[#allocation8 + $0x9f0] sm:$0xff]
    %v1025 = vld [vmem:[#allocation8 + $0x9f8] sm:$0xff]
    %v1026 = vld [vmem:[#allocation8 + $0xa00] sm:$0xff]
    %v1027 = vld [vmem:[#allocation8 + $0xa08] sm:$0xff]
    %v1028 = vld [vmem:[#allocation8 + $0xa10] sm:$0xff]
    %v1029 = vld [vmem:[#allocation8 + $0xa18] sm:$0xff]
    %v1030 = vld [vmem:[#allocation8 + $0xa20] sm:$0xff]
    %v1031 = vld [vmem:[#allocation8 + $0xa28] sm:$0xff]
    %v1032 = vld [vmem:[#allocation8 + $0xa30] sm:$0xff]
    %v1033 = vld [vmem:[#allocation8 + $0xa38] sm:$0xff]
    %v1034 = vld [vmem:[#allocation8 + $0xa40] sm:$0xff]
    %v1035 = vld [vmem:[#allocation8 + $0xa48] sm:$0xff]
    %v1036 = vld [vmem:[#allocation8 + $0xa50] sm:$0xff]
    %v1037 = vld [vmem:[#allocation8 + $0xa58] sm:$0xff]
    %v1038 = vld [vmem:[#allocation8 + $0xa60] sm:$0xff]
    %v1039 = vld [vmem:[#allocation8 + $0xa68] sm:$0xff]
    %v1040 = vld [vmem:[#allocation8 + $0xa70] sm:$0xff]
    %v1041 = vld [vmem:[#allocation8 + $0xa78] sm:$0xff]
    %v1042 = vld [vmem:[#allocation8 + $0xa80] sm:$0xff]
    %v1043 = vld [vmem:[#allocation8 + $0xa88] sm:$0xff]
    %v1044 = vld [vmem:[#allocation8 + $0xa90] sm:$0xff]
    %v1045 = vld [vmem:[#allocation8 + $0xa98] sm:$0xff]
    %v1046 = vld [vmem:[#allocation8 + $0xaa0] sm:$0xff]
    %v1047 = vld [vmem:[#allocation8 + $0xaa8] sm:$0xff]
    %v1048 = vld [vmem:[#allocation8 + $0xab0] sm:$0xff]
    %v1049 = vld [vmem:[#allocation8 + $0xab8] sm:$0xff]
    %v1050 = vld [vmem:[#allocation8 + $0xac0] sm:$0xff]
    %v1051 = vld [vmem:[#allocation8 + $0xac8] sm:$0xff]
    %v1052 = vld [vmem:[#allocation8 + $0xad0] sm:$0xff]
    %v1053 = vld [vmem:[#allocation8 + $0xad8] sm:$0xff]
    %v1054 = vld [vmem:[#allocation8 + $0xae0] sm:$0xff]
    %v1055 = vld [vmem:[#allocation8 + $0xae8] sm:$0xff]
    %v1056 = vld [vmem:[#allocation8 + $0xaf0] sm:$0xff]
    %v1057 = vld [vmem:[#allocation8 + $0xaf8] sm:$0xff]
    %v1058 = vld [vmem:[#allocation8 + $0xb00] sm:$0xff]
    %v1059 = vld [vmem:[#allocation8 + $0xb08] sm:$0xff]
    %v1060 = vld [vmem:[#allocation8 + $0xb10] sm:$0xff]
    %v1061 = vld [vmem:[#allocation8 + $0xb18] sm:$0xff]
    %v1062 = vld [vmem:[#allocation8 + $0xb20] sm:$0xff]
    %v1063 = vld [vmem:[#allocation8 + $0xb28] sm:$0xff]
    %v1064 = vld [vmem:[#allocation8 + $0xb30] sm:$0xff]
    %v1065 = vld [vmem:[#allocation8 + $0xb38] sm:$0xff]
    %v1066 = vld [vmem:[#allocation8 + $0xb40] sm:$0xff]
    %v1067 = vld [vmem:[#allocation8 + $0xb48] sm:$0xff]
    %v1068 = vld [vmem:[#allocation8 + $0xb50] sm:$0xff]
    %v1069 = vld [vmem:[#allocation8 + $0xb58] sm:$0xff]
    %v1070 = vld [vmem:[#allocation8 + $0xb60] sm:$0xff]
    %v1071 = vld [vmem:[#allocation8 + $0xb68] sm:$0xff]
    %v1072 = vld [vmem:[#allocation8 + $0xb70] sm:$0xff]
    %v1073 = vld [vmem:[#allocation8 + $0xb78] sm:$0xff]
    %v1074 = vld [vmem:[#allocation8 + $0xb80] sm:$0xff]
    %v1075 = vld [vmem:[#allocation8 + $0xb88] sm:$0xff]
    %v1076 = vld [vmem:[#allocation8 + $0xb90] sm:$0xff]
    %v1077 = vld [vmem:[#allocation8 + $0xb98] sm:$0xff]
    %v1078 = vld [vmem:[#allocation8 + $0xba0] sm:$0xff]
    %v1079 = vld [vmem:[#allocation8 + $0xba8] sm:$0xff]
    %v1080 = vld [vmem:[#allocation8 + $0xbb0] sm:$0xff]
    %v1081 = vld [vmem:[#allocation8 + $0xbb8] sm:$0xff]
    %v1082 = vld [vmem:[#allocation8 + $0xbc0] sm:$0xff]
    %v1083 = vld [vmem:[#allocation8 + $0xbc8] sm:$0xff]
    %v1084 = vld [vmem:[#allocation8 + $0xbd0] sm:$0xff]
    %v1085 = vld [vmem:[#allocation8 + $0xbd8] sm:$0xff]
    %v1086 = vld [vmem:[#allocation8 + $0xbe0] sm:$0xff]
    %v1087 = vld [vmem:[#allocation8 + $0xbe8] sm:$0xff]
    %v1088 = vld [vmem:[#allocation8 + $0xbf0] sm:$0xff]
    %v1089 = vld [vmem:[#allocation8 + $0xbf8] sm:$0xff]
    %v1090 = vld [vmem:[#allocation8 + $0xc00] sm:$0xff]
    %v1091 = vld [vmem:[#allocation8 + $0xc08] sm:$0xff]
    %v1092 = vld [vmem:[#allocation8 + $0xc10] sm:$0xff]
    %v1093 = vld [vmem:[#allocation8 + $0xc18] sm:$0xff]
    %v1094 = vld [vmem:[#allocation8 + $0xc20] sm:$0xff]
    %v1095 = vld [vmem:[#allocation8 + $0xc28] sm:$0xff]
    %v1096 = vld [vmem:[#allocation8 + $0xc30] sm:$0xff]
    %v1097 = vld [vmem:[#allocation8 + $0xc38] sm:$0xff]
    %v1098 = vld [vmem:[#allocation8 + $0xc40] sm:$0xff]
    %v1099 = vld [vmem:[#allocation8 + $0xc48] sm:$0xff]
    %v1100 = vld [vmem:[#allocation8 + $0xc50] sm:$0xff]
    %v1101 = vld [vmem:[#allocation8 + $0xc58] sm:$0xff]
    %v1102 = vld [vmem:[#allocation8 + $0xc60] sm:$0xff]
    %v1103 = vld [vmem:[#allocation8 + $0xc68] sm:$0xff]
    %v1104 = vld [vmem:[#allocation8 + $0xc70] sm:$0xff]
    %v1105 = vld [vmem:[#allocation8 + $0xc78] sm:$0xff]
    %v1106 = vld [vmem:[#allocation8 + $0xc80] sm:$0xff]
    %v1107 = vld [vmem:[#allocation8 + $0xc88] sm:$0xff]
    %v1108 = vld [vmem:[#allocation8 + $0xc90] sm:$0xff]
    %v1109 = vld [vmem:[#allocation8 + $0xc98] sm:$0xff]
    %v1110 = vld [vmem:[#allocation8 + $0xca0] sm:$0xff]
    %v1111 = vld [vmem:[#allocation8 + $0xca8] sm:$0xff]
    %v1112 = vld [vmem:[#allocation8 + $0xcb0] sm:$0xff]
    %v1113 = vld [vmem:[#allocation8 + $0xcb8] sm:$0xff]
    %v1114 = vld [vmem:[#allocation8 + $0xcc0] sm:$0xff]
    %v1115 = vld [vmem:[#allocation8 + $0xcc8] sm:$0xff]
    %v1116 = vld [vmem:[#allocation8 + $0xcd0] sm:$0xff]
    %v1117 = vld [vmem:[#allocation8 + $0xcd8] sm:$0xff]
    %v1118 = vld [vmem:[#allocation8 + $0xce0] sm:$0xff]
    %v1119 = vld [vmem:[#allocation8 + $0xce8] sm:$0xff]
    %v1120 = vld [vmem:[#allocation8 + $0xcf0] sm:$0xff]
    %v1121 = vld [vmem:[#allocation8 + $0xcf8] sm:$0xff]
    %v1122 = vld [vmem:[#allocation8 + $0xd00] sm:$0xff]
    %v1123 = vld [vmem:[#allocation8 + $0xd08] sm:$0xff]
    %v1124 = vld [vmem:[#allocation8 + $0xd10] sm:$0xff]
    %v1125 = vld [vmem:[#allocation8 + $0xd18] sm:$0xff]
    %v1126 = vld [vmem:[#allocation8 + $0xd20] sm:$0xff]
    %v1127 = vld [vmem:[#allocation8 + $0xd28] sm:$0xff]
    %v1128 = vld [vmem:[#allocation8 + $0xd30] sm:$0xff]
    %v1129 = vld [vmem:[#allocation8 + $0xd38] sm:$0xff]
    %v1130 = vld [vmem:[#allocation8 + $0xd40] sm:$0xff]
    %v1131 = vld [vmem:[#allocation8 + $0xd48] sm:$0xff]
    %v1132 = vld [vmem:[#allocation8 + $0xd50] sm:$0xff]
    %v1133 = vld [vmem:[#allocation8 + $0xd58] sm:$0xff]
    %v1134 = vld [vmem:[#allocation8 + $0xd60] sm:$0xff]
    %v1135 = vld [vmem:[#allocation8 + $0xd68] sm:$0xff]
    %v1136 = vld [vmem:[#allocation8 + $0xd70] sm:$0xff]
    %v1137 = vld [vmem:[#allocation8 + $0xd78] sm:$0xff]
    %v1138 = vld [vmem:[#allocation8 + $0xd80] sm:$0xff]
    %v1139 = vld [vmem:[#allocation8 + $0xd88] sm:$0xff]
    %v1140 = vld [vmem:[#allocation8 + $0xd90] sm:$0xff]
    %v1141 = vld [vmem:[#allocation8 + $0xd98] sm:$0xff]
    %v1142 = vld [vmem:[#allocation8 + $0xda0] sm:$0xff]
    %v1143 = vld [vmem:[#allocation8 + $0xda8] sm:$0xff]
    %v1144 = vld [vmem:[#allocation8 + $0xdb0] sm:$0xff]
    %v1145 = vld [vmem:[#allocation8 + $0xdb8] sm:$0xff]
    %v1146 = vld [vmem:[#allocation8 + $0xdc0] sm:$0xff]
    %v1147 = vld [vmem:[#allocation8 + $0xdc8] sm:$0xff]
    %v1148 = vld [vmem:[#allocation8 + $0xdd0] sm:$0xff]
    %v1149 = vld [vmem:[#allocation8 + $0xdd8] sm:$0xff]
    %v1150 = vld [vmem:[#allocation8 + $0xde0] sm:$0xff]
    %v1151 = vld [vmem:[#allocation8 + $0xde8] sm:$0xff]
    %v1152 = vld [vmem:[#allocation8 + $0xdf0] sm:$0xff]
    %v1153 = vld [vmem:[#allocation8 + $0xdf8] sm:$0xff]
    %v1154 = vld [vmem:[#allocation8 + $0xe00] sm:$0xff]
    %v1155 = vld [vmem:[#allocation8 + $0xe08] sm:$0xff]
    %v1156 = vld [vmem:[#allocation8 + $0xe10] sm:$0xff]
    %v1157 = vld [vmem:[#allocation8 + $0xe18] sm:$0xff]
    %v1158 = vld [vmem:[#allocation8 + $0xe20] sm:$0xff]
    %v1159 = vld [vmem:[#allocation8 + $0xe28] sm:$0xff]
    %v1160 = vld [vmem:[#allocation8 + $0xe30] sm:$0xff]
    %v1161 = vld [vmem:[#allocation8 + $0xe38] sm:$0xff]
    %v1162 = vld [vmem:[#allocation8 + $0xe40] sm:$0xff]
    %v1163 = vld [vmem:[#allocation8 + $0xe48] sm:$0xff]
    %v1164 = vld [vmem:[#allocation8 + $0xe50] sm:$0xff]
    %v1165 = vld [vmem:[#allocation8 + $0xe58] sm:$0xff]
    %v1166 = vld [vmem:[#allocation8 + $0xe60] sm:$0xff]
    %v1167 = vld [vmem:[#allocation8 + $0xe68] sm:$0xff]
    %v1168 = vld [vmem:[#allocation8 + $0xe70] sm:$0xff]
    %v1169 = vld [vmem:[#allocation8 + $0xe78] sm:$0xff]
    %v1170 = vld [vmem:[#allocation8 + $0xe80] sm:$0xff]
    %v1171 = vld [vmem:[#allocation8 + $0xe88] sm:$0xff]
    %v1172 = vld [vmem:[#allocation8 + $0xe90] sm:$0xff]
    %v1173 = vld [vmem:[#allocation8 + $0xe98] sm:$0xff]
    %v1174 = vld [vmem:[#allocation8 + $0xea0] sm:$0xff]
    %v1175 = vld [vmem:[#allocation8 + $0xea8] sm:$0xff]
    %v1176 = vld [vmem:[#allocation8 + $0xeb0] sm:$0xff]
    %v1177 = vld [vmem:[#allocation8 + $0xeb8] sm:$0xff]
    %v1178 = vld [vmem:[#allocation8 + $0xec0] sm:$0xff]
    %v1179 = vld [vmem:[#allocation8 + $0xec8] sm:$0xff]
    %v1180 = vld [vmem:[#allocation8 + $0xed0] sm:$0xff]
    %v1181 = vld [vmem:[#allocation8 + $0xed8] sm:$0xff]
    %v1182 = vld [vmem:[#allocation8 + $0xee0] sm:$0xff]
    %v1183 = vld [vmem:[#allocation8 + $0xee8] sm:$0xff]
    %v1184 = vld [vmem:[#allocation8 + $0xef0] sm:$0xff]
    %v1185 = vld [vmem:[#allocation8 + $0xef8] sm:$0xff]
    %v1186 = vld [vmem:[#allocation8 + $0xf00] sm:$0xff]
    %v1187 = vld [vmem:[#allocation8 + $0xf08] sm:$0xff]
    %v1188 = vld [vmem:[#allocation8 + $0xf10] sm:$0xff]
    %v1189 = vld [vmem:[#allocation8 + $0xf18] sm:$0xff]
    %v1190 = vld [vmem:[#allocation8 + $0xf20] sm:$0xff]
    %v1191 = vld [vmem:[#allocation8 + $0xf28] sm:$0xff]
    %v1192 = vld [vmem:[#allocation8 + $0xf30] sm:$0xff]
    %v1193 = vld [vmem:[#allocation8 + $0xf38] sm:$0xff]
    %v1194 = vld [vmem:[#allocation8 + $0xf40] sm:$0xff]
    %v1195 = vld [vmem:[#allocation8 + $0xf48] sm:$0xff]
    %v1196 = vld [vmem:[#allocation8 + $0xf50] sm:$0xff]
    %v1197 = vld [vmem:[#allocation8 + $0xf58] sm:$0xff]
    %v1198 = vld [vmem:[#allocation8 + $0xf60] sm:$0xff]
    %v1199 = vld [vmem:[#allocation8 + $0xf68] sm:$0xff]
    %v1200 = vld [vmem:[#allocation8 + $0xf70] sm:$0xff]
    %v1201 = vld [vmem:[#allocation8 + $0xf78] sm:$0xff]
    %v1202 = vld [vmem:[#allocation8 + $0xf80] sm:$0xff]
    %v1203 = vld [vmem:[#allocation8 + $0xf88] sm:$0xff]
    %v1204 = vld [vmem:[#allocation8 + $0xf90] sm:$0xff]
    %v1205 = vld [vmem:[#allocation8 + $0xf98] sm:$0xff]
    %v1206 = vld [vmem:[#allocation8 + $0xfa0] sm:$0xff]
    %v1207 = vld [vmem:[#allocation8 + $0xfa8] sm:$0xff]
    %v1208 = vld [vmem:[#allocation8 + $0xfb0] sm:$0xff]
    %v1209 = vld [vmem:[#allocation8 + $0xfb8] sm:$0xff]
    %v1210 = vld [vmem:[#allocation8 + $0xfc0] sm:$0xff]
    %v1211 = vld [vmem:[#allocation8 + $0xfc8] sm:$0xff]
    %v1212 = vld [vmem:[#allocation8 + $0xfd0] sm:$0xff]
    %v1213 = vld [vmem:[#allocation8 + $0xfd8] sm:$0xff]
    %v1214 = vld [vmem:[#allocation8 + $0xfe0] sm:$0xff]
    %v1215 = vld [vmem:[#allocation8 + $0xfe8] sm:$0xff]
    %v1216 = vld [vmem:[#allocation8 + $0xff0] sm:$0xff]
    %v1217 = vld [vmem:[#allocation8 + $0xff8] sm:$0xff]
    %v1218 = vld [vmem:[#allocation8 + $0x1000] sm:$0xff]
    %v1219 = vld [vmem:[#allocation8 + $0x1008] sm:$0xff]
    %v1220 = vld [vmem:[#allocation8 + $0x1010] sm:$0xff]
    %v1221 = vld [vmem:[#allocation8 + $0x1018] sm:$0xff]
    %v1222 = vld [vmem:[#allocation8 + $0x1020] sm:$0xff]
    %v1223 = vld [vmem:[#allocation8 + $0x1028] sm:$0xff]
    %v1224 = vld [vmem:[#allocation8 + $0x1030] sm:$0xff]
    %v1225 = vld [vmem:[#allocation8 + $0x1038] sm:$0xff]
    %v1226 = vld [vmem:[#allocation8 + $0x1040] sm:$0xff]
    %v1227 = vld [vmem:[#allocation8 + $0x1048] sm:$0xff]
    %v1228 = vld [vmem:[#allocation8 + $0x1050] sm:$0xff]
    %v1229 = vld [vmem:[#allocation8 + $0x1058] sm:$0xff]
    %v1230 = vld [vmem:[#allocation8 + $0x1060] sm:$0xff]
    %v1231 = vld [vmem:[#allocation8 + $0x1068] sm:$0xff]
    %v1232 = vld [vmem:[#allocation8 + $0x1070] sm:$0xff]
    %v1233 = vld [vmem:[#allocation8 + $0x1078] sm:$0xff]
    %v1234 = vld [vmem:[#allocation8 + $0x1080] sm:$0xff]
    %v1235 = vld [vmem:[#allocation8 + $0x1088] sm:$0xff]
    %v1236 = vld [vmem:[#allocation8 + $0x1090] sm:$0xff]
    %v1237 = vld [vmem:[#allocation8 + $0x1098] sm:$0xff]
    %v1238 = vld [vmem:[#allocation8 + $0x10a0] sm:$0xff]
    %v1239 = vld [vmem:[#allocation8 + $0x10a8] sm:$0xff]
    %v1240 = vld [vmem:[#allocation8 + $0x10b0] sm:$0xff]
    %v1241 = vld [vmem:[#allocation8 + $0x10b8] sm:$0xff]
    %v1242 = vld [vmem:[#allocation8 + $0x10c0] sm:$0xff]
    %v1243 = vld [vmem:[#allocation8 + $0x10c8] sm:$0xff]
    %v1244 = vld [vmem:[#allocation8 + $0x10d0] sm:$0xff]
    %v1245 = vld [vmem:[#allocation8 + $0x10d8] sm:$0xff]
    %v1246 = vld [vmem:[#allocation8 + $0x10e0] sm:$0xff]
    %v1247 = vld [vmem:[#allocation8 + $0x10e8] sm:$0xff]
    %v1248 = vld [vmem:[#allocation8 + $0x10f0] sm:$0xff]
    %v1249 = vld [vmem:[#allocation8 + $0x10f8] sm:$0xff]
    %v1250 = vld [vmem:[#allocation8 + $0x1100] sm:$0xff]
    %v1251 = vld [vmem:[#allocation8 + $0x1108] sm:$0xff]
    %v1252 = vld [vmem:[#allocation8 + $0x1110] sm:$0xff]
    %v1253 = vld [vmem:[#allocation8 + $0x1118] sm:$0xff]
    %v1254 = vld [vmem:[#allocation8 + $0x1120] sm:$0xff]
    %v1255 = vld [vmem:[#allocation8 + $0x1128] sm:$0xff]
    %v1256 = vld [vmem:[#allocation8 + $0x1130] sm:$0xff]
    %v1257 = vld [vmem:[#allocation8 + $0x1138] sm:$0xff]
    %v1258 = vld [vmem:[#allocation8 + $0x1140] sm:$0xff]
    %v1259 = vld [vmem:[#allocation8 + $0x1148] sm:$0xff]
    %v1260 = vld [vmem:[#allocation8 + $0x1150] sm:$0xff]
    %v1261 = vld [vmem:[#allocation8 + $0x1158] sm:$0xff]
    %v1262 = vld [vmem:[#allocation8 + $0x1160] sm:$0xff]
    %v1263 = vld [vmem:[#allocation8 + $0x1168] sm:$0xff]
    %v1264 = vld [vmem:[#allocation8 + $0x1170] sm:$0xff]
    %v1265 = vld [vmem:[#allocation8 + $0x1178] sm:$0xff]
    %v1266 = vld [vmem:[#allocation8 + $0x1180] sm:$0xff]
    %v1267 = vld [vmem:[#allocation8 + $0x1188] sm:$0xff]
    %v1268 = vld [vmem:[#allocation8 + $0x1190] sm:$0xff]
    %v1269 = vld [vmem:[#allocation8 + $0x1198] sm:$0xff]
    %v1270 = vld [vmem:[#allocation8 + $0x11a0] sm:$0xff]
    %v1271 = vld [vmem:[#allocation8 + $0x11a8] sm:$0xff]
    %v1272 = vld [vmem:[#allocation8 + $0x11b0] sm:$0xff]
    %v1273 = vld [vmem:[#allocation8 + $0x11b8] sm:$0xff]
    %v1274 = vld [vmem:[#allocation8 + $0x11c0] sm:$0xff]
    %v1275 = vld [vmem:[#allocation8 + $0x11c8] sm:$0xff]
    %v1276 = vld [vmem:[#allocation8 + $0x11d0] sm:$0xff]
    %v1277 = vld [vmem:[#allocation8 + $0x11d8] sm:$0xff]
    %v1278 = vld [vmem:[#allocation8 + $0x11e0] sm:$0xff]
    %v1279 = vld [vmem:[#allocation8 + $0x11e8] sm:$0xff]
    %v1280 = vld [vmem:[#allocation8 + $0x11f0] sm:$0xff]
    %v1281 = vld [vmem:[#allocation8 + $0x11f8] sm:$0xff]
    %v1282 = vld [vmem:[#allocation8 + $0x1200] sm:$0xff]
    %v1283 = vld [vmem:[#allocation8 + $0x1208] sm:$0xff]
    %v1284 = vld [vmem:[#allocation8 + $0x1210] sm:$0xff]
    %v1285 = vld [vmem:[#allocation8 + $0x1218] sm:$0xff]
    %v1286 = vld [vmem:[#allocation8 + $0x1220] sm:$0xff]
    %v1287 = vld [vmem:[#allocation8 + $0x1228] sm:$0xff]
    %v1288 = vld [vmem:[#allocation8 + $0x1230] sm:$0xff]
    %v1289 = vld [vmem:[#allocation8 + $0x1238] sm:$0xff]
    %v1290 = vld [vmem:[#allocation8 + $0x1240] sm:$0xff]
    %v1291 = vld [vmem:[#allocation8 + $0x1248] sm:$0xff]
    %v1292 = vld [vmem:[#allocation8 + $0x1250] sm:$0xff]
    %v1293 = vld [vmem:[#allocation8 + $0x1258] sm:$0xff]
    %v1294 = vld [vmem:[#allocation8 + $0x1260] sm:$0xff]
    %v1295 = vld [vmem:[#allocation8 + $0x1268] sm:$0xff]
    %v1296 = vld [vmem:[#allocation8 + $0x1270] sm:$0xff]
    %v1297 = vld [vmem:[#allocation8 + $0x1278] sm:$0xff]
    %v1298 = vld [vmem:[#allocation8 + $0x1280] sm:$0xff]
    %v1299 = vld [vmem:[#allocation8 + $0x1288] sm:$0xff]
    %v1300 = vld [vmem:[#allocation8 + $0x1290] sm:$0xff]
    %v1301 = vld [vmem:[#allocation8 + $0x1298] sm:$0xff]
    %v1302 = vld [vmem:[#allocation8 + $0x12a0] sm:$0xff]
    %v1303 = vld [vmem:[#allocation8 + $0x12a8] sm:$0xff]
    %v1304 = vld [vmem:[#allocation8 + $0x12b0] sm:$0xff]
    %v1305 = vld [vmem:[#allocation8 + $0x12b8] sm:$0xff]
    %v1306 = vld [vmem:[#allocation8 + $0x12c0] sm:$0xff]
    %v1307 = vld [vmem:[#allocation8 + $0x12c8] sm:$0xff]
    %v1308 = vld [vmem:[#allocation8 + $0x12d0] sm:$0xff]
    %v1309 = vld [vmem:[#allocation8 + $0x12d8] sm:$0xff]
    %v1310 = vld [vmem:[#allocation8 + $0x12e0] sm:$0xff]
    %v1311 = vld [vmem:[#allocation8 + $0x12e8] sm:$0xff]
    %v1312 = vld [vmem:[#allocation8 + $0x12f0] sm:$0xff]
    %v1313 = vld [vmem:[#allocation8 + $0x12f8] sm:$0xff]
    %v1314 = vld [vmem:[#allocation8 + $0x1300] sm:$0xff]
    %v1315 = vld [vmem:[#allocation8 + $0x1308] sm:$0xff]
    %v1316 = vld [vmem:[#allocation8 + $0x1310] sm:$0xff]
    %v1317 = vld [vmem:[#allocation8 + $0x1318] sm:$0xff]
    %v1318 = vld [vmem:[#allocation8 + $0x1320] sm:$0xff]
    %v1319 = vld [vmem:[#allocation8 + $0x1328] sm:$0xff]
    %v1320 = vld [vmem:[#allocation8 + $0x1330] sm:$0xff]
    %v1321 = vld [vmem:[#allocation8 + $0x1338] sm:$0xff]
    %v1322 = vld [vmem:[#allocation8 + $0x1340] sm:$0xff]
    %v1323 = vld [vmem:[#allocation8 + $0x1348] sm:$0xff]
    %v1324 = vld [vmem:[#allocation8 + $0x1350] sm:$0xff]
    %v1325 = vld [vmem:[#allocation8 + $0x1358] sm:$0xff]
    %v1326 = vld [vmem:[#allocation8 + $0x1360] sm:$0xff]
    %v1327 = vld [vmem:[#allocation8 + $0x1368] sm:$0xff]
    %v1328 = vld [vmem:[#allocation8 + $0x1370] sm:$0xff]
    %v1329 = vld [vmem:[#allocation8 + $0x1378] sm:$0xff]
    %v1330 = vld [vmem:[#allocation8 + $0x1380] sm:$0xff]
    %v1331 = vld [vmem:[#allocation8 + $0x1388] sm:$0xff]
    %v1332 = vld [vmem:[#allocation8 + $0x1390] sm:$0xff]
    %v1333 = vld [vmem:[#allocation8 + $0x1398] sm:$0xff]
    %v1334 = vld [vmem:[#allocation8 + $0x13a0] sm:$0xff]
    %v1335 = vld [vmem:[#allocation8 + $0x13a8] sm:$0xff]
    %v1336 = vld [vmem:[#allocation8 + $0x13b0] sm:$0xff]
    %v1337 = vld [vmem:[#allocation8 + $0x13b8] sm:$0xff]
    %v1338 = vld [vmem:[#allocation8 + $0x13c0] sm:$0xff]
    %v1339 = vld [vmem:[#allocation8 + $0x13c8] sm:$0xff]
    %v1340 = vld [vmem:[#allocation8 + $0x13d0] sm:$0xff]
    %v1341 = vld [vmem:[#allocation8 + $0x13d8] sm:$0xff]
    %v1342 = vld [vmem:[#allocation8 + $0x13e0] sm:$0xff]
    %v1343 = vld [vmem:[#allocation8 + $0x13e8] sm:$0xff]
    %v1344 = vld [vmem:[#allocation8 + $0x13f0] sm:$0xff]
    %v1345 = vld [vmem:[#allocation8 + $0x13f8] sm:$0xff]
    %v1346 = vld [vmem:[#allocation8 + $0x1400] sm:$0xff]
    %v1347 = vld [vmem:[#allocation8 + $0x1408] sm:$0xff]
    %v1348 = vld [vmem:[#allocation8 + $0x1410] sm:$0xff]
    %v1349 = vld [vmem:[#allocation8 + $0x1418] sm:$0xff]
    %v1350 = vld [vmem:[#allocation8 + $0x1420] sm:$0xff]
    %v1351 = vld [vmem:[#allocation8 + $0x1428] sm:$0xff]
    %v1352 = vld [vmem:[#allocation8 + $0x1430] sm:$0xff]
    %v1353 = vld [vmem:[#allocation8 + $0x1438] sm:$0xff]
    %v1354 = vld [vmem:[#allocation8 + $0x1440] sm:$0xff]
    %v1355 = vld [vmem:[#allocation8 + $0x1448] sm:$0xff]
    %v1356 = vld [vmem:[#allocation8 + $0x1450] sm:$0xff]
    %v1357 = vld [vmem:[#allocation8 + $0x1458] sm:$0xff]
    %v1358 = vld [vmem:[#allocation8 + $0x1460] sm:$0xff]
    %v1359 = vld [vmem:[#allocation8 + $0x1468] sm:$0xff]
    %v1360 = vld [vmem:[#allocation8 + $0x1470] sm:$0xff]
    %v1361 = vld [vmem:[#allocation8 + $0x1478] sm:$0xff]
    %v1362 = vld [vmem:[#allocation8 + $0x1480] sm:$0xff]
    %v1363 = vld [vmem:[#allocation8 + $0x1488] sm:$0xff]
    %v1364 = vld [vmem:[#allocation8 + $0x1490] sm:$0xff]
    %v1365 = vld [vmem:[#allocation8 + $0x1498] sm:$0xff]
    %v1366 = vld [vmem:[#allocation8 + $0x14a0] sm:$0xff]
    %v1367 = vld [vmem:[#allocation8 + $0x14a8] sm:$0xff]
    %v1368 = vld [vmem:[#allocation8 + $0x14b0] sm:$0xff]
    %v1369 = vld [vmem:[#allocation8 + $0x14b8] sm:$0xff]
    %v1370 = vld [vmem:[#allocation8 + $0x14c0] sm:$0xff]
    %v1371 = vld [vmem:[#allocation8 + $0x14c8] sm:$0xff]
    %v1372 = vld [vmem:[#allocation8 + $0x14d0] sm:$0xff]
    %v1373 = vld [vmem:[#allocation8 + $0x14d8] sm:$0xff]
    %v1374 = vld [vmem:[#allocation8 + $0x14e0] sm:$0xff]
    %v1375 = vld [vmem:[#allocation8 + $0x14e8] sm:$0xff]
    %v1376 = vld [vmem:[#allocation8 + $0x14f0] sm:$0xff]
    %v1377 = vld [vmem:[#allocation8 + $0x14f8] sm:$0xff]
    %v1378 = vld [vmem:[#allocation8 + $0x1500] sm:$0xff]
    %v1379 = vld [vmem:[#allocation8 + $0x1508] sm:$0xff]
    %v1380 = vld [vmem:[#allocation8 + $0x1510] sm:$0xff]
    %v1381 = vld [vmem:[#allocation8 + $0x1518] sm:$0xff]
    %v1382 = vld [vmem:[#allocation8 + $0x1520] sm:$0xff]
    %v1383 = vld [vmem:[#allocation8 + $0x1528] sm:$0xff]
    %v1384 = vld [vmem:[#allocation8 + $0x1530] sm:$0xff]
    %v1385 = vld [vmem:[#allocation8 + $0x1538] sm:$0xff]
    %v1386 = vld [vmem:[#allocation8 + $0x1540] sm:$0xff]
    %v1387 = vld [vmem:[#allocation8 + $0x1548] sm:$0xff]
    %v1388 = vld [vmem:[#allocation8 + $0x1550] sm:$0xff]
    %v1389 = vld [vmem:[#allocation8 + $0x1558] sm:$0xff]
    %v1390 = vld [vmem:[#allocation8 + $0x1560] sm:$0xff]
    %v1391 = vld [vmem:[#allocation8 + $0x1568] sm:$0xff]
    %v1392 = vld [vmem:[#allocation8 + $0x1570] sm:$0xff]
    %v1393 = vld [vmem:[#allocation8 + $0x1578] sm:$0xff]
    %v1394 = vld [vmem:[#allocation8 + $0x1580] sm:$0xff]
    %v1395 = vld [vmem:[#allocation8 + $0x1588] sm:$0xff]
    %v1396 = vld [vmem:[#allocation8 + $0x1590] sm:$0xff]
    %v1397 = vld [vmem:[#allocation8 + $0x1598] sm:$0xff]
    %v1398 = vld [vmem:[#allocation8 + $0x15a0] sm:$0xff]
    %v1399 = vld [vmem:[#allocation8 + $0x15a8] sm:$0xff]
    %v1400 = vld [vmem:[#allocation8 + $0x15b0] sm:$0xff]
    %v1401 = vld [vmem:[#allocation8 + $0x15b8] sm:$0xff]
    %v1402 = vld [vmem:[#allocation8 + $0x15c0] sm:$0xff]
    %v1403 = vld [vmem:[#allocation8 + $0x15c8] sm:$0xff]
    %v1404 = vld [vmem:[#allocation8 + $0x15d0] sm:$0xff]
    %v1405 = vld [vmem:[#allocation8 + $0x15d8] sm:$0xff]
    %v1406 = vld [vmem:[#allocation8 + $0x15e0] sm:$0xff]
    %v1407 = vld [vmem:[#allocation8 + $0x15e8] sm:$0xff]
    %v1408 = vld [vmem:[#allocation8 + $0x15f0] sm:$0xff]
    %v1409 = vld [vmem:[#allocation8 + $0x15f8] sm:$0xff]
    %v1410 = vld [vmem:[#allocation8 + $0x1600] sm:$0xff]
    %v1411 = vld [vmem:[#allocation8 + $0x1608] sm:$0xff]
    %v1412 = vld [vmem:[#allocation8 + $0x1610] sm:$0xff]
    %v1413 = vld [vmem:[#allocation8 + $0x1618] sm:$0xff]
    %v1414 = vld [vmem:[#allocation8 + $0x1620] sm:$0xff]
    %v1415 = vld [vmem:[#allocation8 + $0x1628] sm:$0xff]
    %v1416 = vld [vmem:[#allocation8 + $0x1630] sm:$0xff]
    %v1417 = vld [vmem:[#allocation8 + $0x1638] sm:$0xff]
    %v1418 = vld [vmem:[#allocation8 + $0x1640] sm:$0xff]
    %v1419 = vld [vmem:[#allocation8 + $0x1648] sm:$0xff]
    %v1420 = vld [vmem:[#allocation8 + $0x1650] sm:$0xff]
    %v1421 = vld [vmem:[#allocation8 + $0x1658] sm:$0xff]
    %v1422 = vld [vmem:[#allocation8 + $0x1660] sm:$0xff]
    %v1423 = vld [vmem:[#allocation8 + $0x1668] sm:$0xff]
    %v1424 = vld [vmem:[#allocation8 + $0x1670] sm:$0xff]
    %v1425 = vld [vmem:[#allocation8 + $0x1678] sm:$0xff]
    %v1426 = vld [vmem:[#allocation8 + $0x1680] sm:$0xff]
    %v1427 = vld [vmem:[#allocation8 + $0x1688] sm:$0xff]
    %v1428 = vld [vmem:[#allocation8 + $0x1690] sm:$0xff]
    %v1429 = vld [vmem:[#allocation8 + $0x1698] sm:$0xff]
    %v1430 = vld [vmem:[#allocation8 + $0x16a0] sm:$0xff]
    %v1431 = vld [vmem:[#allocation8 + $0x16a8] sm:$0xff]
    %v1432 = vld [vmem:[#allocation8 + $0x16b0] sm:$0xff]
    %v1433 = vld [vmem:[#allocation8 + $0x16b8] sm:$0xff]
    %v1434 = vld [vmem:[#allocation8 + $0x16c0] sm:$0xff]
    %v1435 = vld [vmem:[#allocation8 + $0x16c8] sm:$0xff]
    %v1436 = vld [vmem:[#allocation8 + $0x16d0] sm:$0xff]
    %v1437 = vld [vmem:[#allocation8 + $0x16d8] sm:$0xff]
    %v1438 = vld [vmem:[#allocation8 + $0x16e0] sm:$0xff]
    %v1439 = vld [vmem:[#allocation8 + $0x16e8] sm:$0xff]
    %v1440 = vld [vmem:[#allocation8 + $0x16f0] sm:$0xff]
    %v1441 = vld [vmem:[#allocation8 + $0x16f8] sm:$0xff]
    %v1442 = vld [vmem:[#allocation8 + $0x1700] sm:$0xff]
    %v1443 = vld [vmem:[#allocation8 + $0x1708] sm:$0xff]
    %v1444 = vld [vmem:[#allocation8 + $0x1710] sm:$0xff]
    %v1445 = vld [vmem:[#allocation8 + $0x1718] sm:$0xff]
    %v1446 = vld [vmem:[#allocation8 + $0x1720] sm:$0xff]
    %v1447 = vld [vmem:[#allocation8 + $0x1728] sm:$0xff]
    %v1448 = vld [vmem:[#allocation8 + $0x1730] sm:$0xff]
    %v1449 = vld [vmem:[#allocation8 + $0x1738] sm:$0xff]
    %v1450 = vld [vmem:[#allocation8 + $0x1740] sm:$0xff]
    %v1451 = vld [vmem:[#allocation8 + $0x1748] sm:$0xff]
    %v1452 = vld [vmem:[#allocation8 + $0x1750] sm:$0xff]
    %v1453 = vld [vmem:[#allocation8 + $0x1758] sm:$0xff]
    %v1454 = vld [vmem:[#allocation8 + $0x1760] sm:$0xff]
    %v1455 = vld [vmem:[#allocation8 + $0x1768] sm:$0xff]
    %v1456 = vld [vmem:[#allocation8 + $0x1770] sm:$0xff]
    %v1457 = vld [vmem:[#allocation8 + $0x1778] sm:$0xff]
    %v1458 = vld [vmem:[#allocation8 + $0x1780] sm:$0xff]
    %v1459 = vld [vmem:[#allocation8 + $0x1788] sm:$0xff]
    %v1460 = vld [vmem:[#allocation8 + $0x1790] sm:$0xff]
    %v1461 = vld [vmem:[#allocation8 + $0x1798] sm:$0xff]
    %v1462 = vld [vmem:[#allocation8 + $0x17a0] sm:$0xff]
    %v1463 = vld [vmem:[#allocation8 + $0x17a8] sm:$0xff]
    %v1464 = vld [vmem:[#allocation8 + $0x17b0] sm:$0xff]
    %v1465 = vld [vmem:[#allocation8 + $0x17b8] sm:$0xff]
    %v1466 = vld [vmem:[#allocation8 + $0x17c0] sm:$0xff]
    %v1467 = vld [vmem:[#allocation8 + $0x17c8] sm:$0xff]
    %v1468 = vld [vmem:[#allocation8 + $0x17d0] sm:$0xff]
    %v1469 = vld [vmem:[#allocation8 + $0x17d8] sm:$0xff]
    %v1470 = vld [vmem:[#allocation8 + $0x17e0] sm:$0xff]
    %v1471 = vld [vmem:[#allocation8 + $0x17e8] sm:$0xff]
    %v1472 = vld [vmem:[#allocation8 + $0x17f0] sm:$0xff]
    %v1473 = vld [vmem:[#allocation8 + $0x17f8] sm:$0xff]
    %v1474 = vld [vmem:[#allocation8 + $0x1800] sm:$0xff]
    %v1475 = vld [vmem:[#allocation8 + $0x1808] sm:$0xff]
    %v1476 = vld [vmem:[#allocation8 + $0x1810] sm:$0xff]
    %v1477 = vld [vmem:[#allocation8 + $0x1818] sm:$0xff]
    %v1478 = vld [vmem:[#allocation8 + $0x1820] sm:$0xff]
    %v1479 = vld [vmem:[#allocation8 + $0x1828] sm:$0xff]
    %v1480 = vld [vmem:[#allocation8 + $0x1830] sm:$0xff]
    %v1481 = vld [vmem:[#allocation8 + $0x1838] sm:$0xff]
    %v1482 = vld [vmem:[#allocation8 + $0x1840] sm:$0xff]
    %v1483 = vld [vmem:[#allocation8 + $0x1848] sm:$0xff]
    %v1484 = vld [vmem:[#allocation8 + $0x1850] sm:$0xff]
    %v1485 = vld [vmem:[#allocation8 + $0x1858] sm:$0xff]
    %v1486 = vld [vmem:[#allocation8 + $0x1860] sm:$0xff]
    %v1487 = vld [vmem:[#allocation8 + $0x1868] sm:$0xff]
    %v1488 = vld [vmem:[#allocation8 + $0x1870] sm:$0xff]
    %v1489 = vld [vmem:[#allocation8 + $0x1878] sm:$0xff]
    %v1490 = vld [vmem:[#allocation8 + $0x1880] sm:$0xff]
    %v1491 = vld [vmem:[#allocation8 + $0x1888] sm:$0xff]
    %v1492 = vld [vmem:[#allocation8 + $0x1890] sm:$0xff]
    %v1493 = vld [vmem:[#allocation8 + $0x1898] sm:$0xff]
    %v1494 = vld [vmem:[#allocation8 + $0x18a0] sm:$0xff]
    %v1495 = vld [vmem:[#allocation8 + $0x18a8] sm:$0xff]
    %v1496 = vld [vmem:[#allocation8 + $0x18b0] sm:$0xff]
    %v1497 = vld [vmem:[#allocation8 + $0x18b8] sm:$0xff]
    %v1498 = vld [vmem:[#allocation8 + $0x18c0] sm:$0xff]
    %v1499 = vld [vmem:[#allocation8 + $0x18c8] sm:$0xff]
    %v1500 = vld [vmem:[#allocation8 + $0x18d0] sm:$0xff]
    %v1501 = vld [vmem:[#allocation8 + $0x18d8] sm:$0xff]
    %v1502 = vld [vmem:[#allocation8 + $0x18e0] sm:$0xff]
    %v1503 = vld [vmem:[#allocation8 + $0x18e8] sm:$0xff]
    %v1504 = vld [vmem:[#allocation8 + $0x18f0] sm:$0xff]
    %v1505 = vld [vmem:[#allocation8 + $0x18f8] sm:$0xff]
    %v1506 = vld [vmem:[#allocation8 + $0x1900] sm:$0xff]
    %v1507 = vld [vmem:[#allocation8 + $0x1908] sm:$0xff]
    %v1508 = vld [vmem:[#allocation8 + $0x1910] sm:$0xff]
    %v1509 = vld [vmem:[#allocation8 + $0x1918] sm:$0xff]
    %v1510 = vld [vmem:[#allocation8 + $0x1920] sm:$0xff]
    %v1511 = vld [vmem:[#allocation8 + $0x1928] sm:$0xff]
    %v1512 = vld [vmem:[#allocation8 + $0x1930] sm:$0xff]
    %v1513 = vld [vmem:[#allocation8 + $0x1938] sm:$0xff]
    %v1514 = vld [vmem:[#allocation8 + $0x1940] sm:$0xff]
    %v1515 = vld [vmem:[#allocation8 + $0x1948] sm:$0xff]
    %v1516 = vld [vmem:[#allocation8 + $0x1950] sm:$0xff]
    %v1517 = vld [vmem:[#allocation8 + $0x1958] sm:$0xff]
    %v1518 = vld [vmem:[#allocation8 + $0x1960] sm:$0xff]
    %v1519 = vld [vmem:[#allocation8 + $0x1968] sm:$0xff]
    %v1520 = vld [vmem:[#allocation8 + $0x1970] sm:$0xff]
    %v1521 = vld [vmem:[#allocation8 + $0x1978] sm:$0xff]
    %v1522 = vld [vmem:[#allocation8 + $0x1980] sm:$0xff]
    %v1523 = vld [vmem:[#allocation8 + $0x1988] sm:$0xff]
    %v1524 = vld [vmem:[#allocation8 + $0x1990] sm:$0xff]
    %v1525 = vld [vmem:[#allocation8 + $0x1998] sm:$0xff]
    %v1526 = vld [vmem:[#allocation8 + $0x19a0] sm:$0xff]
    %v1527 = vld [vmem:[#allocation8 + $0x19a8] sm:$0xff]
    %v1528 = vld [vmem:[#allocation8 + $0x19b0] sm:$0xff]
    %v1529 = vld [vmem:[#allocation8 + $0x19b8] sm:$0xff]
    %v1530 = vld [vmem:[#allocation8 + $0x19c0] sm:$0xff]
    %v1531 = vld [vmem:[#allocation8 + $0x19c8] sm:$0xff]
    %v1532 = vld [vmem:[#allocation8 + $0x19d0] sm:$0xff]
    %v1533 = vld [vmem:[#allocation8 + $0x19d8] sm:$0xff]
    %v1534 = vld [vmem:[#allocation8 + $0x19e0] sm:$0xff]
    %v1535 = vld [vmem:[#allocation8 + $0x19e8] sm:$0xff]
    %v1536 = vld [vmem:[#allocation8 + $0x19f0] sm:$0xff]
    %v1537 = vld [vmem:[#allocation8 + $0x19f8] sm:$0xff]
    %v1538 = vld [vmem:[#allocation8 + $0x1a00] sm:$0xff]
    %v1539 = vld [vmem:[#allocation8 + $0x1a08] sm:$0xff]
    %v1540 = vld [vmem:[#allocation8 + $0x1a10] sm:$0xff]
    %v1541 = vld [vmem:[#allocation8 + $0x1a18] sm:$0xff]
    %v1542 = vld [vmem:[#allocation8 + $0x1a20] sm:$0xff]
    %v1543 = vld [vmem:[#allocation8 + $0x1a28] sm:$0xff]
    %v1544 = vld [vmem:[#allocation8 + $0x1a30] sm:$0xff]
    %v1545 = vld [vmem:[#allocation8 + $0x1a38] sm:$0xff]
    %v1546 = vld [vmem:[#allocation8 + $0x1a40] sm:$0xff]
    %v1547 = vld [vmem:[#allocation8 + $0x1a48] sm:$0xff]
    %v1548 = vld [vmem:[#allocation8 + $0x1a50] sm:$0xff]
    %v1549 = vld [vmem:[#allocation8 + $0x1a58] sm:$0xff]
    %v1550 = vld [vmem:[#allocation8 + $0x1a60] sm:$0xff]
    %v1551 = vld [vmem:[#allocation8 + $0x1a68] sm:$0xff]
    %v1552 = vld [vmem:[#allocation8 + $0x1a70] sm:$0xff]
    %v1553 = vld [vmem:[#allocation8 + $0x1a78] sm:$0xff]
    %v1554 = vld [vmem:[#allocation8 + $0x1a80] sm:$0xff]
    %v1555 = vld [vmem:[#allocation8 + $0x1a88] sm:$0xff]
    %v1556 = vld [vmem:[#allocation8 + $0x1a90] sm:$0xff]
    %v1557 = vld [vmem:[#allocation8 + $0x1a98] sm:$0xff]
    %v1558 = vld [vmem:[#allocation8 + $0x1aa0] sm:$0xff]
    %v1559 = vld [vmem:[#allocation8 + $0x1aa8] sm:$0xff]
    %v1560 = vld [vmem:[#allocation8 + $0x1ab0] sm:$0xff]
    %v1561 = vld [vmem:[#allocation8 + $0x1ab8] sm:$0xff]
    %v1562 = vld [vmem:[#allocation8 + $0x1ac0] sm:$0xff]
    %v1563 = vld [vmem:[#allocation8 + $0x1ac8] sm:$0xff]
    %v1564 = vld [vmem:[#allocation8 + $0x1ad0] sm:$0xff]
    %v1565 = vld [vmem:[#allocation8 + $0x1ad8] sm:$0xff]
    %v1566 = vld [vmem:[#allocation8 + $0x1ae0] sm:$0xff]
    %v1567 = vld [vmem:[#allocation8 + $0x1ae8] sm:$0xff]
    %v1568 = vld [vmem:[#allocation8 + $0x1af0] sm:$0xff]
    %v1569 = vld [vmem:[#allocation8 + $0x1af8] sm:$0xff]
    %v1570 = vld [vmem:[#allocation8 + $0x1b00] sm:$0xff]
    %v1571 = vld [vmem:[#allocation8 + $0x1b08] sm:$0xff]
    %v1572 = vld [vmem:[#allocation8 + $0x1b10] sm:$0xff]
    %v1573 = vld [vmem:[#allocation8 + $0x1b18] sm:$0xff]
    %v1574 = vld [vmem:[#allocation8 + $0x1b20] sm:$0xff]
    %v1575 = vld [vmem:[#allocation8 + $0x1b28] sm:$0xff]
    %v1576 = vld [vmem:[#allocation8 + $0x1b30] sm:$0xff]
    %v1577 = vld [vmem:[#allocation8 + $0x1b38] sm:$0xff]
    %v1578 = vld [vmem:[#allocation8 + $0x1b40] sm:$0xff]
    %v1579 = vld [vmem:[#allocation8 + $0x1b48] sm:$0xff]
    %v1580 = vld [vmem:[#allocation8 + $0x1b50] sm:$0xff]
    %v1581 = vld [vmem:[#allocation8 + $0x1b58] sm:$0xff]
    %v1582 = vld [vmem:[#allocation8 + $0x1b60] sm:$0xff]
    %v1583 = vld [vmem:[#allocation8 + $0x1b68] sm:$0xff]
    %v1584 = vld [vmem:[#allocation8 + $0x1b70] sm:$0xff]
    %v1585 = vld [vmem:[#allocation8 + $0x1b78] sm:$0xff]
    %v1586 = vld [vmem:[#allocation8 + $0x1b80] sm:$0xff]
    %v1587 = vld [vmem:[#allocation8 + $0x1b88] sm:$0xff]
    %v1588 = vld [vmem:[#allocation8 + $0x1b90] sm:$0xff]
    %v1589 = vld [vmem:[#allocation8 + $0x1b98] sm:$0xff]
    %v1590 = vld [vmem:[#allocation8 + $0x1ba0] sm:$0xff]
    %v1591 = vld [vmem:[#allocation8 + $0x1ba8] sm:$0xff]
    %v1592 = vld [vmem:[#allocation8 + $0x1bb0] sm:$0xff]
    %v1593 = vld [vmem:[#allocation8 + $0x1bb8] sm:$0xff]
    %v1594 = vld [vmem:[#allocation8 + $0x1bc0] sm:$0xff]
    %v1595 = vld [vmem:[#allocation8 + $0x1bc8] sm:$0xff]
    %v1596 = vld [vmem:[#allocation8 + $0x1bd0] sm:$0xff]
    %v1597 = vld [vmem:[#allocation8 + $0x1bd8] sm:$0xff]
    %v1598 = vld [vmem:[#allocation8 + $0x1be0] sm:$0xff]
    %v1599 = vld [vmem:[#allocation8 + $0x1be8] sm:$0xff]
    %v1600 = vld [vmem:[#allocation8 + $0x1bf0] sm:$0xff]
    %v1601 = vld [vmem:[#allocation8 + $0x1bf8] sm:$0xff]
    %v1602 = vld [vmem:[#allocation8 + $0x1c00] sm:$0xff]
    %v1603 = vld [vmem:[#allocation8 + $0x1c08] sm:$0xff]
    %v1604 = vld [vmem:[#allocation8 + $0x1c10] sm:$0xff]
    %v1605 = vld [vmem:[#allocation8 + $0x1c18] sm:$0xff]
    %v1606 = vld [vmem:[#allocation8 + $0x1c20] sm:$0xff]
    %v1607 = vld [vmem:[#allocation8 + $0x1c28] sm:$0xff]
    %v1608 = vld [vmem:[#allocation8 + $0x1c30] sm:$0xff]
    %v1609 = vld [vmem:[#allocation8 + $0x1c38] sm:$0xff]
    %v1610 = vld [vmem:[#allocation8 + $0x1c40] sm:$0xff]
    %v1611 = vld [vmem:[#allocation8 + $0x1c48] sm:$0xff]
    %v1612 = vld [vmem:[#allocation8 + $0x1c50] sm:$0xff]
    %v1613 = vld [vmem:[#allocation8 + $0x1c58] sm:$0xff]
    %v1614 = vld [vmem:[#allocation8 + $0x1c60] sm:$0xff]
    %v1615 = vld [vmem:[#allocation8 + $0x1c68] sm:$0xff]
    %v1616 = vld [vmem:[#allocation8 + $0x1c70] sm:$0xff]
    %v1617 = vld [vmem:[#allocation8 + $0x1c78] sm:$0xff]
    %v1618 = vld [vmem:[#allocation8 + $0x1c80] sm:$0xff]
    %v1619 = vld [vmem:[#allocation8 + $0x1c88] sm:$0xff]
    %v1620 = vld [vmem:[#allocation8 + $0x1c90] sm:$0xff]
    %v1621 = vld [vmem:[#allocation8 + $0x1c98] sm:$0xff]
    %v1622 = vld [vmem:[#allocation8 + $0x1ca0] sm:$0xff]
    %v1623 = vld [vmem:[#allocation8 + $0x1ca8] sm:$0xff]
    %v1624 = vld [vmem:[#allocation8 + $0x1cb0] sm:$0xff]
    %v1625 = vld [vmem:[#allocation8 + $0x1cb8] sm:$0xff]
    %v1626 = vld [vmem:[#allocation8 + $0x1cc0] sm:$0xff]
    %v1627 = vld [vmem:[#allocation8 + $0x1cc8] sm:$0xff]
    %v1628 = vld [vmem:[#allocation8 + $0x1cd0] sm:$0xff]
    %v1629 = vld [vmem:[#allocation8 + $0x1cd8] sm:$0xff]
    %v1630 = vld [vmem:[#allocation8 + $0x1ce0] sm:$0xff]
    %v1631 = vld [vmem:[#allocation8 + $0x1ce8] sm:$0xff]
    %v1632 = vld [vmem:[#allocation8 + $0x1cf0] sm:$0xff]
    %v1633 = vld [vmem:[#allocation8 + $0x1cf8] sm:$0xff]
    %v1634 = vld [vmem:[#allocation8 + $0x1d00] sm:$0xff]
    %v1635 = vld [vmem:[#allocation8 + $0x1d08] sm:$0xff]
    %v1636 = vld [vmem:[#allocation8 + $0x1d10] sm:$0xff]
    %v1637 = vld [vmem:[#allocation8 + $0x1d18] sm:$0xff]
    %v1638 = vld [vmem:[#allocation8 + $0x1d20] sm:$0xff]
    %v1639 = vld [vmem:[#allocation8 + $0x1d28] sm:$0xff]
    %v1640 = vld [vmem:[#allocation8 + $0x1d30] sm:$0xff]
    %v1641 = vld [vmem:[#allocation8 + $0x1d38] sm:$0xff]
    %v1642 = vld [vmem:[#allocation8 + $0x1d40] sm:$0xff]
    %v1643 = vld [vmem:[#allocation8 + $0x1d48] sm:$0xff]
    %v1644 = vld [vmem:[#allocation8 + $0x1d50] sm:$0xff]
    %v1645 = vld [vmem:[#allocation8 + $0x1d58] sm:$0xff]
    %v1646 = vld [vmem:[#allocation8 + $0x1d60] sm:$0xff]
    %v1647 = vld [vmem:[#allocation8 + $0x1d68] sm:$0xff]
    %v1648 = vld [vmem:[#allocation8 + $0x1d70] sm:$0xff]
    %v1649 = vld [vmem:[#allocation8 + $0x1d78] sm:$0xff]
    %v1650 = vld [vmem:[#allocation8 + $0x1d80] sm:$0xff]
    %v1651 = vld [vmem:[#allocation8 + $0x1d88] sm:$0xff]
    %v1652 = vld [vmem:[#allocation8 + $0x1d90] sm:$0xff]
    %v1653 = vld [vmem:[#allocation8 + $0x1d98] sm:$0xff]
    %v1654 = vld [vmem:[#allocation8 + $0x1da0] sm:$0xff]
    %v1655 = vld [vmem:[#allocation8 + $0x1da8] sm:$0xff]
    %v1656 = vld [vmem:[#allocation8 + $0x1db0] sm:$0xff]
    %v1657 = vld [vmem:[#allocation8 + $0x1db8] sm:$0xff]
    %v1658 = vld [vmem:[#allocation8 + $0x1dc0] sm:$0xff]
    %v1659 = vld [vmem:[#allocation8 + $0x1dc8] sm:$0xff]
    %v1660 = vld [vmem:[#allocation8 + $0x1dd0] sm:$0xff]
    %v1661 = vld [vmem:[#allocation8 + $0x1dd8] sm:$0xff]
    %v1662 = vld [vmem:[#allocation8 + $0x1de0] sm:$0xff]
    %v1663 = vld [vmem:[#allocation8 + $0x1de8] sm:$0xff]
    %v1664 = vld [vmem:[#allocation8 + $0x1df0] sm:$0xff]
    %v1665 = vld [vmem:[#allocation8 + $0x1df8] sm:$0xff]
    %v1666 = vld [vmem:[#allocation8 + $0x1e00] sm:$0xff]
    %v1667 = vld [vmem:[#allocation8 + $0x1e08] sm:$0xff]
    %v1668 = vld [vmem:[#allocation8 + $0x1e10] sm:$0xff]
    %v1669 = vld [vmem:[#allocation8 + $0x1e18] sm:$0xff]
    %v1670 = vld [vmem:[#allocation8 + $0x1e20] sm:$0xff]
    %v1671 = vld [vmem:[#allocation8 + $0x1e28] sm:$0xff]
    %v1672 = vld [vmem:[#allocation8 + $0x1e30] sm:$0xff]
    %v1673 = vld [vmem:[#allocation8 + $0x1e38] sm:$0xff]
    %v1674 = vld [vmem:[#allocation8 + $0x1e40] sm:$0xff]
    %v1675 = vld [vmem:[#allocation8 + $0x1e48] sm:$0xff]
    %v1676 = vld [vmem:[#allocation8 + $0x1e50] sm:$0xff]
    %v1677 = vld [vmem:[#allocation8 + $0x1e58] sm:$0xff]
    %v1678 = vld [vmem:[#allocation8 + $0x1e60] sm:$0xff]
    %v1679 = vld [vmem:[#allocation8 + $0x1e68] sm:$0xff]
    %v1680 = vld [vmem:[#allocation8 + $0x1e70] sm:$0xff]
    %v1681 = vld [vmem:[#allocation8 + $0x1e78] sm:$0xff]
    %v1682 = vld [vmem:[#allocation8 + $0x1e80] sm:$0xff]
    %v1683 = vld [vmem:[#allocation8 + $0x1e88] sm:$0xff]
    %v1684 = vld [vmem:[#allocation8 + $0x1e90] sm:$0xff]
    %v1685 = vld [vmem:[#allocation8 + $0x1e98] sm:$0xff]
    %v1686 = vld [vmem:[#allocation8 + $0x1ea0] sm:$0xff]
    %v1687 = vld [vmem:[#allocation8 + $0x1ea8] sm:$0xff]
    %v1688 = vld [vmem:[#allocation8 + $0x1eb0] sm:$0xff]
    %v1689 = vld [vmem:[#allocation8 + $0x1eb8] sm:$0xff]
    %v1690 = vld [vmem:[#allocation8 + $0x1ec0] sm:$0xff]
    %v1691 = vld [vmem:[#allocation8 + $0x1ec8] sm:$0xff]
    %v1692 = vld [vmem:[#allocation8 + $0x1ed0] sm:$0xff]
    %v1693 = vld [vmem:[#allocation8 + $0x1ed8] sm:$0xff]
    %v1694 = vld [vmem:[#allocation8 + $0x1ee0] sm:$0xff]
    %v1695 = vld [vmem:[#allocation8 + $0x1ee8] sm:$0xff]
    %v1696 = vld [vmem:[#allocation8 + $0x1ef0] sm:$0xff]
    %v1697 = vld [vmem:[#allocation8 + $0x1ef8] sm:$0xff]
    %v1698 = vld [vmem:[#allocation8 + $0x1f00] sm:$0xff]
    %v1699 = vld [vmem:[#allocation8 + $0x1f08] sm:$0xff]
    %v1700 = vld [vmem:[#allocation8 + $0x1f10] sm:$0xff]
    %v1701 = vld [vmem:[#allocation8 + $0x1f18] sm:$0xff]
    %v1702 = vld [vmem:[#allocation8 + $0x1f20] sm:$0xff]
    %v1703 = vld [vmem:[#allocation8 + $0x1f28] sm:$0xff]
    %v1704 = vld [vmem:[#allocation8 + $0x1f30] sm:$0xff]
    %v1705 = vld [vmem:[#allocation8 + $0x1f38] sm:$0xff]
    %v1706 = vld [vmem:[#allocation8 + $0x1f40] sm:$0xff]
    %v1707 = vld [vmem:[#allocation8 + $0x1f48] sm:$0xff]
    %v1708 = vld [vmem:[#allocation8 + $0x1f50] sm:$0xff]
    %v1709 = vld [vmem:[#allocation8 + $0x1f58] sm:$0xff]
    %v1710 = vld [vmem:[#allocation8 + $0x1f60] sm:$0xff]
    %v1711 = vld [vmem:[#allocation8 + $0x1f68] sm:$0xff]
    %v1712 = vld [vmem:[#allocation8 + $0x1f70] sm:$0xff]
    %v1713 = vld [vmem:[#allocation8 + $0x1f78] sm:$0xff]
    %v1714 = vld [vmem:[#allocation8 + $0x1f80] sm:$0xff]
    %v1715 = vld [vmem:[#allocation8 + $0x1f88] sm:$0xff]
    %v1716 = vld [vmem:[#allocation8 + $0x1f90] sm:$0xff]
    %v1717 = vld [vmem:[#allocation8 + $0x1f98] sm:$0xff]
    %v1718 = vld [vmem:[#allocation8 + $0x1fa0] sm:$0xff]
    %v1719 = vld [vmem:[#allocation8 + $0x1fa8] sm:$0xff]
    %v1720 = vld [vmem:[#allocation8 + $0x1fb0] sm:$0xff]
    %v1721 = vld [vmem:[#allocation8 + $0x1fb8] sm:$0xff]
    %v1722 = vld [vmem:[#allocation8 + $0x1fc0] sm:$0xff]
    %v1723 = vld [vmem:[#allocation8 + $0x1fc8] sm:$0xff]
    %v1724 = vld [vmem:[#allocation8 + $0x1fd0] sm:$0xff]
    %v1725 = vld [vmem:[#allocation8 + $0x1fd8] sm:$0xff]
    %v1726 = vld [vmem:[#allocation8 + $0x1fe0] sm:$0xff]
    %v1727 = vld [vmem:[#allocation8 + $0x1fe8] sm:$0xff]
    %v1728 = vld [vmem:[#allocation8 + $0x1ff0] sm:$0xff]
    %v1729 = vld [vmem:[#allocation8 + $0x1ff8] sm:$0xff]
    %v1730 = vld [vmem:[#allocation10] sm:$0xff]
    %v1732 = vlaneseq
    %v1733 = vshrl.u32 %v1732, 7
    %v1734 = vsub.s32 0, %v1733
    %v1735 = vrot.slane %v1730, %v1734
    %v1736 = vlaneseq
    %v1737 = vshrl.u32 %v1736, 7
    %v1738 = vsub.s32 1, %v1737
    %v1739 = vrot.slane %v1730, %v1738
    %v1740 = vlaneseq
    %v1741 = vshrl.u32 %v1740, 7
    %v1742 = vsub.s32 2, %v1741
    %v1743 = vrot.slane %v1730, %v1742
    %v1744 = vlaneseq
    %v1745 = vshrl.u32 %v1744, 7
    %v1746 = vsub.s32 3, %v1745
    %v1747 = vrot.slane %v1730, %v1746
    %v1748 = vlaneseq
    %v1749 = vshrl.u32 %v1748, 7
    %v1750 = vsub.s32 4, %v1749
    %v1751 = vrot.slane %v1730, %v1750
    %v1752 = vlaneseq
    %v1753 = vshrl.u32 %v1752, 7
    %v1754 = vsub.s32 5, %v1753
    %v1755 = vrot.slane %v1730, %v1754
    %v1756 = vlaneseq
    %v1757 = vshrl.u32 %v1756, 7
    %v1758 = vsub.s32 6, %v1757
    %v1759 = vrot.slane %v1730, %v1758
    %v1760 = vlaneseq
    %v1761 = vshrl.u32 %v1760, 7
    %v1762 = vsub.s32 7, %v1761
    %v1763 = vrot.slane %v1730, %v1762
    %1772 = vmatprep.subr.mxu0 %v707
    %1773 = vmatpush1.msra.mxu0 %v706
    %1774 = vmatprep.subr.mxu0 %v715
    %1775 = vmatpush1.msra.mxu0 %v714
    %1776 = vmatprep.subr.mxu0 %v723
    %1777 = vmatpush1.msra.mxu0 %v722
    %1778 = vmatprep.subr.mxu0 %v731
    %1779 = vmatpush1.msra.mxu0 %v730
    %1780 = vmatprep.subr.mxu0 %v739
    %1781 = vmatpush1.msra.mxu0 %v738
    %1782 = vmatprep.subr.mxu0 %v747
    %1783 = vmatpush1.msra.mxu0 %v746
    %1784 = vmatprep.subr.mxu0 %v755
    %1785 = vmatpush1.msra.mxu0 %v754
    %1786 = vmatprep.subr.mxu0 %v763
    %1787 = vmatpush1.msra.mxu0 %v762
    %1788 = vmatprep.subr.mxu0 %v771
    %1789 = vmatpush1.msra.mxu0 %v770
    %1790 = vmatprep.subr.mxu0 %v779
    %1791 = vmatpush1.msra.mxu0 %v778
    %1792 = vmatprep.subr.mxu0 %v787
    %1793 = vmatpush1.msra.mxu0 %v786
    %1794 = vmatprep.subr.mxu0 %v795
    %1795 = vmatpush1.msra.mxu0 %v794
    %1796 = vmatprep.subr.mxu0 %v803
    %1797 = vmatpush1.msra.mxu0 %v802
    %1798 = vmatprep.subr.mxu0 %v811
    %1799 = vmatpush1.msra.mxu0 %v810
    %1800 = vmatprep.subr.mxu0 %v819
    %1801 = vmatpush1.msra.mxu0 %v818
    %1802 = vmatprep.subr.mxu0 %v827
    %1803 = vmatpush1.msra.mxu0 %v826
    %1804 = vmatprep.subr.mxu0 %v835
    %1805 = vmatpush1.msra.mxu0 %v834
    %1806 = vmatprep.subr.mxu0 %v843
    %1807 = vmatpush1.msra.mxu0 %v842
    %1808 = vmatprep.subr.mxu0 %v851
    %1809 = vmatpush1.msra.mxu0 %v850
    %1810 = vmatprep.subr.mxu0 %v859
    %1811 = vmatpush1.msra.mxu0 %v858
    %1812 = vmatprep.subr.mxu0 %v867
    %1813 = vmatpush1.msra.mxu0 %v866
    %1814 = vmatprep.subr.mxu0 %v875
    %1815 = vmatpush1.msra.mxu0 %v874
    %1816 = vmatprep.subr.mxu0 %v883
    %1817 = vmatpush1.msra.mxu0 %v882
    %1818 = vmatprep.subr.mxu0 %v891
    %1819 = vmatpush1.msra.mxu0 %v890
    %1820 = vmatprep.subr.mxu0 %v899
    %1821 = vmatpush1.msra.mxu0 %v898
    %1822 = vmatprep.subr.mxu0 %v907
    %1823 = vmatpush1.msra.mxu0 %v906
    %1824 = vmatprep.subr.mxu0 %v915
    %1825 = vmatpush1.msra.mxu0 %v914
    %1826 = vmatprep.subr.mxu0 %v923
    %1827 = vmatpush1.msra.mxu0 %v922
    %1828 = vmatprep.subr.mxu0 %v931
    %1829 = vmatpush1.msra.mxu0 %v930
    %1830 = vmatprep.subr.mxu0 %v939
    %1831 = vmatpush1.msra.mxu0 %v938
    %1832 = vmatprep.subr.mxu0 %v947
    %1833 = vmatpush1.msra.mxu0 %v946
    %1834 = vmatprep.subr.mxu0 %v955
    %1835 = vmatpush1.msra.mxu0 %v954
    %1836 = vmatprep.mubr.f32.mxu0 %v699
    %1837 = vmatmul.mubr.f32.gmra.mrb[0].mxu0 %v698
    %v1838 = vpop.f32.mrb[0].mxu0
    %v1839 = vadd.f32 %v1735, %v1838
    %v1840 = vpop.f32.mrb[0].mxu0
    %v1841 = vadd.f32 %v1739, %v1840
    %1842 = vdwg.mxu0
    %1843 = vmatprep.subr.mxu0 %v963
    %1844 = vmatpush1.msra.mxu0 %v962
    %1845 = vmatprep.subr.mxu0 %v971
    %1846 = vmatpush1.msra.mxu0 %v970
    %1847 = vmatprep.subr.mxu0 %v979
    %1848 = vmatpush1.msra.mxu0 %v978
    %1849 = vmatprep.subr.mxu0 %v987
    %1850 = vmatpush1.msra.mxu0 %v986
    %1851 = vmatprep.subr.mxu0 %v995
    %1852 = vmatpush1.msra.mxu0 %v994
    %1853 = vmatprep.subr.mxu0 %v1003
    %1854 = vmatpush1.msra.mxu0 %v1002
    %1855 = vmatprep.subr.mxu0 %v1011
    %1856 = vmatpush1.msra.mxu0 %v1010
    %1857 = vmatprep.subr.mxu0 %v1019
    %1858 = vmatpush1.msra.mxu0 %v1018
    %1859 = vmatprep.subr.mxu0 %v1027
    %1860 = vmatpush1.msra.mxu0 %v1026
    %1861 = vmatprep.subr.mxu0 %v1035
    %1862 = vmatpush1.msra.mxu0 %v1034
    %1863 = vmatprep.subr.mxu0 %v1043
    %1864 = vmatpush1.msra.mxu0 %v1042
    %1865 = vmatprep.subr.mxu0 %v1051
    %1866 = vmatpush1.msra.mxu0 %v1050
    %1867 = vmatprep.subr.mxu0 %v1059
    %1868 = vmatpush1.msra.mxu0 %v1058
    %1869 = vmatprep.subr.mxu0 %v1067
    %1870 = vmatpush1.msra.mxu0 %v1066
    %1871 = vmatprep.subr.mxu0 %v1075
    %1872 = vmatpush1.msra.mxu0 %v1074
    %1873 = vmatprep.subr.mxu0 %v1083
    %1874 = vmatpush1.msra.mxu0 %v1082
    %1875 = vmatprep.subr.mxu0 %v1091
    %1876 = vmatpush1.msra.mxu0 %v1090
    %1877 = vmatprep.subr.mxu0 %v1099
    %1878 = vmatpush1.msra.mxu0 %v1098
    %1879 = vmatprep.subr.mxu0 %v1107
    %1880 = vmatpush1.msra.mxu0 %v1106
    %1881 = vmatprep.subr.mxu0 %v1115
    %1882 = vmatpush1.msra.mxu0 %v1114
    %1883 = vmatprep.subr.mxu0 %v1123
    %1884 = vmatpush1.msra.mxu0 %v1122
    %1885 = vmatprep.subr.mxu0 %v1131
    %1886 = vmatpush1.msra.mxu0 %v1130
    %1887 = vmatprep.subr.mxu0 %v1139
    %1888 = vmatpush1.msra.mxu0 %v1138
    %1889 = vmatprep.subr.mxu0 %v1147
    %1890 = vmatpush1.msra.mxu0 %v1146
    %1891 = vmatprep.subr.mxu0 %v1155
    %1892 = vmatpush1.msra.mxu0 %v1154
    %1893 = vmatprep.subr.mxu0 %v1163
    %1894 = vmatpush1.msra.mxu0 %v1162
    %1895 = vmatprep.subr.mxu0 %v1171
    %1896 = vmatpush1.msra.mxu0 %v1170
    %1897 = vmatprep.subr.mxu0 %v1179
    %1898 = vmatpush1.msra.mxu0 %v1178
    %1899 = vmatprep.subr.mxu0 %v1187
    %1900 = vmatpush1.msra.mxu0 %v1186
    %1901 = vmatprep.subr.mxu0 %v1195
    %1902 = vmatpush1.msra.mxu0 %v1194
    %1903 = vmatprep.subr.mxu0 %v1203
    %1904 = vmatpush1.msra.mxu0 %v1202
    %1905 = vmatprep.subr.mxu0 %v1211
    %1906 = vmatpush1.msra.mxu0 %v1210
    %1907 = vmatprep.mubr.f32.mxu0 %v701
    %1908 = vmatmul.mubr.f32.gmra.mrb[0].mxu0 %v700
    %v1909 = vpop.f32.mrb[0].mxu0
    %v1910 = vadd.f32 %v1839, %v1909
    %v1911 = vpop.f32.mrb[0].mxu0
    %v1912 = vadd.f32 %v1841, %v1911
    %1913 = vdwg.mxu0
    %1914 = vmatprep.subr.mxu0 %v1219
    %1915 = vmatpush1.msra.mxu0 %v1218
    %1916 = vmatprep.subr.mxu0 %v1227
    %1917 = vmatpush1.msra.mxu0 %v1226
    %1918 = vmatprep.subr.mxu0 %v1235
    %1919 = vmatpush1.msra.mxu0 %v1234
    %1920 = vmatprep.subr.mxu0 %v1243
    %1921 = vmatpush1.msra.mxu0 %v1242
    %1922 = vmatprep.subr.mxu0 %v1251
    %1923 = vmatpush1.msra.mxu0 %v1250
    %1924 = vmatprep.subr.mxu0 %v1259
    %1925 = vmatpush1.msra.mxu0 %v1258
    %1926 = vmatprep.subr.mxu0 %v1267
    %1927 = vmatpush1.msra.mxu0 %v1266
    %1928 = vmatprep.subr.mxu0 %v1275
    %1929 = vmatpush1.msra.mxu0 %v1274
    %1930 = vmatprep.subr.mxu0 %v1283
    %1931 = vmatpush1.msra.mxu0 %v1282
    %1932 = vmatprep.subr.mxu0 %v1291
    %1933 = vmatpush1.msra.mxu0 %v1290
    %1934 = vmatprep.subr.mxu0 %v1299
    %1935 = vmatpush1.msra.mxu0 %v1298
    %1936 = vmatprep.subr.mxu0 %v1307
    %1937 = vmatpush1.msra.mxu0 %v1306
    %1938 = vmatprep.subr.mxu0 %v1315
    %1939 = vmatpush1.msra.mxu0 %v1314
    %1940 = vmatprep.subr.mxu0 %v1323
    %1941 = vmatpush1.msra.mxu0 %v1322
    %1942 = vmatprep.subr.mxu0 %v1331
    %1943 = vmatpush1.msra.mxu0 %v1330
    %1944 = vmatprep.subr.mxu0 %v1339
    %1945 = vmatpush1.msra.mxu0 %v1338
    %1946 = vmatprep.subr.mxu0 %v1347
    %1947 = vmatpush1.msra.mxu0 %v1346
    %1948 = vmatprep.subr.mxu0 %v1355
    %1949 = vmatpush1.msra.mxu0 %v1354
    %1950 = vmatprep.subr.mxu0 %v1363
    %1951 = vmatpush1.msra.mxu0 %v1362
    %1952 = vmatprep.subr.mxu0 %v1371
    %1953 = vmatpush1.msra.mxu0 %v1370
    %1954 = vmatprep.subr.mxu0 %v1379
    %1955 = vmatpush1.msra.mxu0 %v1378
    %1956 = vmatprep.subr.mxu0 %v1387
    %1957 = vmatpush1.msra.mxu0 %v1386
    %1958 = vmatprep.subr.mxu0 %v1395
    %1959 = vmatpush1.msra.mxu0 %v1394
    %1960 = vmatprep.subr.mxu0 %v1403
    %1961 = vmatpush1.msra.mxu0 %v1402
    %1962 = vmatprep.subr.mxu0 %v1411
    %1963 = vmatpush1.msra.mxu0 %v1410
    %1964 = vmatprep.subr.mxu0 %v1419
    %1965 = vmatpush1.msra.mxu0 %v1418
    %1966 = vmatprep.subr.mxu0 %v1427
    %1967 = vmatpush1.msra.mxu0 %v1426
    %1968 = vmatprep.subr.mxu0 %v1435
    %1969 = vmatpush1.msra.mxu0 %v1434
    %1970 = vmatprep.subr.mxu0 %v1443
    %1971 = vmatpush1.msra.mxu0 %v1442
    %1972 = vmatprep.subr.mxu0 %v1451
    %1973 = vmatpush1.msra.mxu0 %v1450
    %1974 = vmatprep.subr.mxu0 %v1459
    %1975 = vmatpush1.msra.mxu0 %v1458
    %1976 = vmatprep.subr.mxu0 %v1467
    %1977 = vmatpush1.msra.mxu0 %v1466
    %1978 = vmatprep.mubr.f32.mxu0 %v703
    %1979 = vmatmul.mubr.f32.gmra.mrb[0].mxu0 %v702
    %v1980 = vpop.f32.mrb[0].mxu0
    %v1981 = vadd.f32 %v1910, %v1980
    %v1982 = vpop.f32.mrb[0].mxu0
    %v1983 = vadd.f32 %v1912, %v1982
    %1984 = vdwg.mxu0
    %1985 = vmatprep.subr.mxu0 %v1475
    %1986 = vmatpush1.msra.mxu0 %v1474
    %1987 = vmatprep.subr.mxu0 %v1483
    %1988 = vmatpush1.msra.mxu0 %v1482
    %1989 = vmatprep.subr.mxu0 %v1491
    %1990 = vmatpush1.msra.mxu0 %v1490
    %1991 = vmatprep.subr.mxu0 %v1499
    %1992 = vmatpush1.msra.mxu0 %v1498
    %1993 = vmatprep.subr.mxu0 %v1507
    %1994 = vmatpush1.msra.mxu0 %v1506
    %1995 = vmatprep.subr.mxu0 %v1515
    %1996 = vmatpush1.msra.mxu0 %v1514
    %1997 = vmatprep.subr.mxu0 %v1523
    %1998 = vmatpush1.msra.mxu0 %v1522
    %1999 = vmatprep.subr.mxu0 %v1531
    %2000 = vmatpush1.msra.mxu0 %v1530
    %2001 = vmatprep.subr.mxu0 %v1539
    %2002 = vmatpush1.msra.mxu0 %v1538
    %2003 = vmatprep.subr.mxu0 %v1547
    %2004 = vmatpush1.msra.mxu0 %v1546
    %2005 = vmatprep.subr.mxu0 %v1555
    %2006 = vmatpush1.msra.mxu0 %v1554
    %2007 = vmatprep.subr.mxu0 %v1563
    %2008 = vmatpush1.msra.mxu0 %v1562
    %2009 = vmatprep.subr.mxu0 %v1571
    %2010 = vmatpush1.msra.mxu0 %v1570
    %2011 = vmatprep.subr.mxu0 %v1579
    %2012 = vmatpush1.msra.mxu0 %v1578
    %2013 = vmatprep.subr.mxu0 %v1587
    %2014 = vmatpush1.msra.mxu0 %v1586
    %2015 = vmatprep.subr.mxu0 %v1595
    %2016 = vmatpush1.msra.mxu0 %v1594
    %2017 = vmatprep.subr.mxu0 %v1603
    %2018 = vmatpush1.msra.mxu0 %v1602
    %2019 = vmatprep.subr.mxu0 %v1611
    %2020 = vmatpush1.msra.mxu0 %v1610
    %2021 = vmatprep.subr.mxu0 %v1619
    %2022 = vmatpush1.msra.mxu0 %v1618
    %2023 = vmatprep.subr.mxu0 %v1627
    %2024 = vmatpush1.msra.mxu0 %v1626
    %2025 = vmatprep.subr.mxu0 %v1635
    %2026 = vmatpush1.msra.mxu0 %v1634
    %2027 = vmatprep.subr.mxu0 %v1643
    %2028 = vmatpush1.msra.mxu0 %v1642
    %2029 = vmatprep.subr.mxu0 %v1651
    %2030 = vmatpush1.msra.mxu0 %v1650
    %2031 = vmatprep.subr.mxu0 %v1659
    %2032 = vmatpush1.msra.mxu0 %v1658
    %2033 = vmatprep.subr.mxu0 %v1667
    %2034 = vmatpush1.msra.mxu0 %v1666
    %2035 = vmatprep.subr.mxu0 %v1675
    %2036 = vmatpush1.msra.mxu0 %v1674
    %2037 = vmatprep.subr.mxu0 %v1683
    %2038 = vmatpush1.msra.mxu0 %v1682
    %2039 = vmatprep.subr.mxu0 %v1691
    %2040 = vmatpush1.msra.mxu0 %v1690
    %2041 = vmatprep.subr.mxu0 %v1699
    %2042 = vmatpush1.msra.mxu0 %v1698
    %2043 = vmatprep.subr.mxu0 %v1707
    %2044 = vmatpush1.msra.mxu0 %v1706
    %2045 = vmatprep.subr.mxu0 %v1715
    %2046 = vmatpush1.msra.mxu0 %v1714
    %2047 = vmatprep.subr.mxu0 %v1723
    %2048 = vmatpush1.msra.mxu0 %v1722
    %2049 = vmatprep.mubr.f32.mxu0 %v705
    %2050 = vmatmul.mubr.f32.gmra.mrb[0].mxu0 %v704
    %v2051 = vpop.f32.mrb[0].mxu0
    %v2052 = vadd.f32 %v1981, %v2051
    %v2053 = vpop.f32.mrb[0].mxu0
    %v2054 = vadd.f32 %v1983, %v2053
    %2055 = vdwg.mxu0
    %2056 = vmatprep.subr.mxu0 %v709
    %2057 = vmatpush1.msra.mxu0 %v708
    %2058 = vmatprep.subr.mxu0 %v717
    %2059 = vmatpush1.msra.mxu0 %v716
    %2060 = vmatprep.subr.mxu0 %v725
    %2061 = vmatpush1.msra.mxu0 %v724
    %2062 = vmatprep.subr.mxu0 %v733
    %2063 = vmatpush1.msra.mxu0 %v732
    %2064 = vmatprep.subr.mxu0 %v741
    %2065 = vmatpush1.msra.mxu0 %v740
    %2066 = vmatprep.subr.mxu0 %v749
    %2067 = vmatpush1.msra.mxu0 %v748
    %2068 = vmatprep.subr.mxu0 %v757
    %2069 = vmatpush1.msra.mxu0 %v756
    %2070 = vmatprep.subr.mxu0 %v765
    %2071 = vmatpush1.msra.mxu0 %v764
    %2072 = vmatprep.subr.mxu0 %v773
    %2073 = vmatpush1.msra.mxu0 %v772
    %2074 = vmatprep.subr.mxu0 %v781
    %2075 = vmatpush1.msra.mxu0 %v780
    %2076 = vmatprep.subr.mxu0 %v789
    %2077 = vmatpush1.msra.mxu0 %v788
    %2078 = vmatprep.subr.mxu0 %v797
    %2079 = vmatpush1.msra.mxu0 %v796
    %2080 = vmatprep.subr.mxu0 %v805
    %2081 = vmatpush1.msra.mxu0 %v804
    %2082 = vmatprep.subr.mxu0 %v813
    %2083 = vmatpush1.msra.mxu0 %v812
    %2084 = vmatprep.subr.mxu0 %v821
    %2085 = vmatpush1.msra.mxu0 %v820
    %2086 = vmatprep.subr.mxu0 %v829
    %2087 = vmatpush1.msra.mxu0 %v828
    %2088 = vmatprep.subr.mxu0 %v837
    %2089 = vmatpush1.msra.mxu0 %v836
    %2090 = vmatprep.subr.mxu0 %v845
    %2091 = vmatpush1.msra.mxu0 %v844
    %2092 = vmatprep.subr.mxu0 %v853
    %2093 = vmatpush1.msra.mxu0 %v852
    %2094 = vmatprep.subr.mxu0 %v861
    %2095 = vmatpush1.msra.mxu0 %v860
    %2096 = vmatprep.subr.mxu0 %v869
    %2097 = vmatpush1.msra.mxu0 %v868
    %2098 = vmatprep.subr.mxu0 %v877
    %2099 = vmatpush1.msra.mxu0 %v876
    %2100 = vmatprep.subr.mxu0 %v885
    %2101 = vmatpush1.msra.mxu0 %v884
    %2102 = vmatprep.subr.mxu0 %v893
    %2103 = vmatpush1.msra.mxu0 %v892
    %2104 = vmatprep.subr.mxu0 %v901
    %2105 = vmatpush1.msra.mxu0 %v900
    %2106 = vmatprep.subr.mxu0 %v909
    %2107 = vmatpush1.msra.mxu0 %v908
    %2108 = vmatprep.subr.mxu0 %v917
    %2109 = vmatpush1.msra.mxu0 %v916
    %2110 = vmatprep.subr.mxu0 %v925
    %2111 = vmatpush1.msra.mxu0 %v924
    %2112 = vmatprep.subr.mxu0 %v933
    %2113 = vmatpush1.msra.mxu0 %v932
    %2114 = vmatprep.subr.mxu0 %v941
    %2115 = vmatpush1.msra.mxu0 %v940
    %2116 = vmatprep.subr.mxu0 %v949
    %2117 = vmatpush1.msra.mxu0 %v948
    %2118 = vmatprep.subr.mxu0 %v957
    %2119 = vmatpush1.msra.mxu0 %v956
    %2120 = vmatprep.mubr.f32.mxu0 %v699
    %2121 = vmatmul.mubr.f32.gmra.mrb[0].mxu0 %v698
    %v2122 = vpop.f32.mrb[0].mxu0
    %v2123 = vadd.f32 %v1743, %v2122
    %v2124 = vpop.f32.mrb[0].mxu0
    %v2125 = vadd.f32 %v1747, %v2124
    %2126 = vdwg.mxu0
    %2127 = vmatprep.subr.mxu0 %v965
    %2128 = vmatpush1.msra.mxu0 %v964
    %2129 = vmatprep.subr.mxu0 %v973
    %2130 = vmatpush1.msra.mxu0 %v972
    %2131 = vmatprep.subr.mxu0 %v981
    %2132 = vmatpush1.msra.mxu0 %v980
    %2133 = vmatprep.subr.mxu0 %v989
    %2134 = vmatpush1.msra.mxu0 %v988
    %2135 = vmatprep.subr.mxu0 %v997
    %2136 = vmatpush1.msra.mxu0 %v996
    %2137 = vmatprep.subr.mxu0 %v1005
    %2138 = vmatpush1.msra.mxu0 %v1004
    %2139 = vmatprep.subr.mxu0 %v1013
    %2140 = vmatpush1.msra.mxu0 %v1012
    %2141 = vmatprep.subr.mxu0 %v1021
    %2142 = vmatpush1.msra.mxu0 %v1020
    %2143 = vmatprep.subr.mxu0 %v1029
    %2144 = vmatpush1.msra.mxu0 %v1028
    %2145 = vmatprep.subr.mxu0 %v1037
    %2146 = vmatpush1.msra.mxu0 %v1036
    %2147 = vmatprep.subr.mxu0 %v1045
    %2148 = vmatpush1.msra.mxu0 %v1044
    %2149 = vmatprep.subr.mxu0 %v1053
    %2150 = vmatpush1.msra.mxu0 %v1052
    %2151 = vmatprep.subr.mxu0 %v1061
    %2152 = vmatpush1.msra.mxu0 %v1060
    %2153 = vmatprep.subr.mxu0 %v1069
    %2154 = vmatpush1.msra.mxu0 %v1068
    %2155 = vmatprep.subr.mxu0 %v1077
    %2156 = vmatpush1.msra.mxu0 %v1076
    %2157 = vmatprep.subr.mxu0 %v1085
    %2158 = vmatpush1.msra.mxu0 %v1084
    %2159 = vmatprep.subr.mxu0 %v1093
    %2160 = vmatpush1.msra.mxu0 %v1092
    %2161 = vmatprep.subr.mxu0 %v1101
    %2162 = vmatpush1.msra.mxu0 %v1100
    %2163 = vmatprep.subr.mxu0 %v1109
    %2164 = vmatpush1.msra.mxu0 %v1108
    %2165 = vmatprep.subr.mxu0 %v1117
    %2166 = vmatpush1.msra.mxu0 %v1116
    %2167 = vmatprep.subr.mxu0 %v1125
    %2168 = vmatpush1.msra.mxu0 %v1124
    %2169 = vmatprep.subr.mxu0 %v1133
    %2170 = vmatpush1.msra.mxu0 %v1132
    %2171 = vmatprep.subr.mxu0 %v1141
    %2172 = vmatpush1.msra.mxu0 %v1140
    %2173 = vmatprep.subr.mxu0 %v1149
    %2174 = vmatpush1.msra.mxu0 %v1148
    %2175 = vmatprep.subr.mxu0 %v1157
    %2176 = vmatpush1.msra.mxu0 %v1156
    %2177 = vmatprep.subr.mxu0 %v1165
    %2178 = vmatpush1.msra.mxu0 %v1164
    %2179 = vmatprep.subr.mxu0 %v1173
    %2180 = vmatpush1.msra.mxu0 %v1172
    %2181 = vmatprep.subr.mxu0 %v1181
    %2182 = vmatpush1.msra.mxu0 %v1180
    %2183 = vmatprep.subr.mxu0 %v1189
    %2184 = vmatpush1.msra.mxu0 %v1188
    %2185 = vmatprep.subr.mxu0 %v1197
    %2186 = vmatpush1.msra.mxu0 %v1196
    %2187 = vmatprep.subr.mxu0 %v1205
    %2188 = vmatpush1.msra.mxu0 %v1204
    %2189 = vmatprep.subr.mxu0 %v1213
    %2190 = vmatpush1.msra.mxu0 %v1212
    %2191 = vmatprep.mubr.f32.mxu0 %v701
    %2192 = vmatmul.mubr.f32.gmra.mrb[0].mxu0 %v700
    %v2193 = vpop.f32.mrb[0].mxu0
    %v2194 = vadd.f32 %v2123, %v2193
    %v2195 = vpop.f32.mrb[0].mxu0
    %v2196 = vadd.f32 %v2125, %v2195
    %2197 = vdwg.mxu0
    %2198 = vmatprep.subr.mxu0 %v1221
    %2199 = vmatpush1.msra.mxu0 %v1220
    %2200 = vmatprep.subr.mxu0 %v1229
    %2201 = vmatpush1.msra.mxu0 %v1228
    %2202 = vmatprep.subr.mxu0 %v1237
    %2203 = vmatpush1.msra.mxu0 %v1236
    %2204 = vmatprep.subr.mxu0 %v1245
    %2205 = vmatpush1.msra.mxu0 %v1244
    %2206 = vmatprep.subr.mxu0 %v1253
    %2207 = vmatpush1.msra.mxu0 %v1252
    %2208 = vmatprep.subr.mxu0 %v1261
    %2209 = vmatpush1.msra.mxu0 %v1260
    %2210 = vmatprep.subr.mxu0 %v1269
    %2211 = vmatpush1.msra.mxu0 %v1268
    %2212 = vmatprep.subr.mxu0 %v1277
    %2213 = vmatpush1.msra.mxu0 %v1276
    %2214 = vmatprep.subr.mxu0 %v1285
    %2215 = vmatpush1.msra.mxu0 %v1284
    %2216 = vmatprep.subr.mxu0 %v1293
    %2217 = vmatpush1.msra.mxu0 %v1292
    %2218 = vmatprep.subr.mxu0 %v1301
    %2219 = vmatpush1.msra.mxu0 %v1300
    %2220 = vmatprep.subr.mxu0 %v1309
    %2221 = vmatpush1.msra.mxu0 %v1308
    %2222 = vmatprep.subr.mxu0 %v1317
    %2223 = vmatpush1.msra.mxu0 %v1316
    %2224 = vmatprep.subr.mxu0 %v1325
    %2225 = vmatpush1.msra.mxu0 %v1324
    %2226 = vmatprep.subr.mxu0 %v1333
    %2227 = vmatpush1.msra.mxu0 %v1332
    %2228 = vmatprep.subr.mxu0 %v1341
    %2229 = vmatpush1.msra.mxu0 %v1340
    %2230 = vmatprep.subr.mxu0 %v1349
    %2231 = vmatpush1.msra.mxu0 %v1348
    %2232 = vmatprep.subr.mxu0 %v1357
    %2233 = vmatpush1.msra.mxu0 %v1356
    %2234 = vmatprep.subr.mxu0 %v1365
    %2235 = vmatpush1.msra.mxu0 %v1364
    %2236 = vmatprep.subr.mxu0 %v1373
    %2237 = vmatpush1.msra.mxu0 %v1372
    %2238 = vmatprep.subr.mxu0 %v1381
    %2239 = vmatpush1.msra.mxu0 %v1380
    %2240 = vmatprep.subr.mxu0 %v1389
    %2241 = vmatpush1.msra.mxu0 %v1388
    %2242 = vmatprep.subr.mxu0 %v1397
    %2243 = vmatpush1.msra.mxu0 %v1396
    %2244 = vmatprep.subr.mxu0 %v1405
    %2245 = vmatpush1.msra.mxu0 %v1404
    %2246 = vmatprep.subr.mxu0 %v1413
    %2247 = vmatpush1.msra.mxu0 %v1412
    %2248 = vmatprep.subr.mxu0 %v1421
    %2249 = vmatpush1.msra.mxu0 %v1420
    %2250 = vmatprep.subr.mxu0 %v1429
    %2251 = vmatpush1.msra.mxu0 %v1428
    %2252 = vmatprep.subr.mxu0 %v1437
    %2253 = vmatpush1.msra.mxu0 %v1436
    %2254 = vmatprep.subr.mxu0 %v1445
    %2255 = vmatpush1.msra.mxu0 %v1444
    %2256 = vmatprep.subr.mxu0 %v1453
    %2257 = vmatpush1.msra.mxu0 %v1452
    %2258 = vmatprep.subr.mxu0 %v1461
    %2259 = vmatpush1.msra.mxu0 %v1460
    %2260 = vmatprep.subr.mxu0 %v1469
    %2261 = vmatpush1.msra.mxu0 %v1468
    %2262 = vmatprep.mubr.f32.mxu0 %v703
    %2263 = vmatmul.mubr.f32.gmra.mrb[0].mxu0 %v702
    %v2264 = vpop.f32.mrb[0].mxu0
    %v2265 = vadd.f32 %v2194, %v2264
    %v2266 = vpop.f32.mrb[0].mxu0
    %v2267 = vadd.f32 %v2196, %v2266
    %2268 = vdwg.mxu0
    %2269 = vmatprep.subr.mxu0 %v1477
    %2270 = vmatpush1.msra.mxu0 %v1476
    %2271 = vmatprep.subr.mxu0 %v1485
    %2272 = vmatpush1.msra.mxu0 %v1484
    %2273 = vmatprep.subr.mxu0 %v1493
    %2274 = vmatpush1.msra.mxu0 %v1492
    %2275 = vmatprep.subr.mxu0 %v1501
    %2276 = vmatpush1.msra.mxu0 %v1500
    %2277 = vmatprep.subr.mxu0 %v1509
    %2278 = vmatpush1.msra.mxu0 %v1508
    %2279 = vmatprep.subr.mxu0 %v1517
    %2280 = vmatpush1.msra.mxu0 %v1516
    %2281 = vmatprep.subr.mxu0 %v1525
    %2282 = vmatpush1.msra.mxu0 %v1524
    %2283 = vmatprep.subr.mxu0 %v1533
    %2284 = vmatpush1.msra.mxu0 %v1532
    %2285 = vmatprep.subr.mxu0 %v1541
    %2286 = vmatpush1.msra.mxu0 %v1540
    %2287 = vmatprep.subr.mxu0 %v1549
    %2288 = vmatpush1.msra.mxu0 %v1548
    %2289 = vmatprep.subr.mxu0 %v1557
    %2290 = vmatpush1.msra.mxu0 %v1556
    %2291 = vmatprep.subr.mxu0 %v1565
    %2292 = vmatpush1.msra.mxu0 %v1564
    %2293 = vmatprep.subr.mxu0 %v1573
    %2294 = vmatpush1.msra.mxu0 %v1572
    %2295 = vmatprep.subr.mxu0 %v1581
    %2296 = vmatpush1.msra.mxu0 %v1580
    %2297 = vmatprep.subr.mxu0 %v1589
    %2298 = vmatpush1.msra.mxu0 %v1588
    %2299 = vmatprep.subr.mxu0 %v1597
    %2300 = vmatpush1.msra.mxu0 %v1596
    %2301 = vmatprep.subr.mxu0 %v1605
    %2302 = vmatpush1.msra.mxu0 %v1604
    %2303 = vmatprep.subr.mxu0 %v1613
    %2304 = vmatpush1.msra.mxu0 %v1612
    %2305 = vmatprep.subr.mxu0 %v1621
    %2306 = vmatpush1.msra.mxu0 %v1620
    %2307 = vmatprep.subr.mxu0 %v1629
    %2308 = vmatpush1.msra.mxu0 %v1628
    %2309 = vmatprep.subr.mxu0 %v1637
    %2310 = vmatpush1.msra.mxu0 %v1636
    %2311 = vmatprep.subr.mxu0 %v1645
    %2312 = vmatpush1.msra.mxu0 %v1644
    %2313 = vmatprep.subr.mxu0 %v1653
    %2314 = vmatpush1.msra.mxu0 %v1652
    %2315 = vmatprep.subr.mxu0 %v1661
    %2316 = vmatpush1.msra.mxu0 %v1660
    %2317 = vmatprep.subr.mxu0 %v1669
    %2318 = vmatpush1.msra.mxu0 %v1668
    %2319 = vmatprep.subr.mxu0 %v1677
    %2320 = vmatpush1.msra.mxu0 %v1676
    %2321 = vmatprep.subr.mxu0 %v1685
    %2322 = vmatpush1.msra.mxu0 %v1684
    %2323 = vmatprep.subr.mxu0 %v1693
    %2324 = vmatpush1.msra.mxu0 %v1692
    %2325 = vmatprep.subr.mxu0 %v1701
    %2326 = vmatpush1.msra.mxu0 %v1700
    %2327 = vmatprep.subr.mxu0 %v1709
    %2328 = vmatpush1.msra.mxu0 %v1708
    %2329 = vmatprep.subr.mxu0 %v1717
    %2330 = vmatpush1.msra.mxu0 %v1716
    %2331 = vmatprep.subr.mxu0 %v1725
    %2332 = vmatpush1.msra.mxu0 %v1724
    %2333 = vmatprep.mubr.f32.mxu0 %v705
    %2334 = vmatmul.mubr.f32.gmra.mrb[0].mxu0 %v704
    %v2335 = vpop.f32.mrb[0].mxu0
    %v2336 = vadd.f32 %v2265, %v2335
    %v2337 = vpop.f32.mrb[0].mxu0
    %v2338 = vadd.f32 %v2267, %v2337
    %2339 = vdwg.mxu0
    %2340 = vmatprep.subr.mxu0 %v711
    %2341 = vmatpush1.msra.mxu0 %v710
    %2342 = vmatprep.subr.mxu0 %v719
    %2343 = vmatpush1.msra.mxu0 %v718
    %2344 = vmatprep.subr.mxu0 %v727
    %2345 = vmatpush1.msra.mxu0 %v726
    %2346 = vmatprep.subr.mxu0 %v735
    %2347 = vmatpush1.msra.mxu0 %v734
    %2348 = vmatprep.subr.mxu0 %v743
    %2349 = vmatpush1.msra.mxu0 %v742
    %2350 = vmatprep.subr.mxu0 %v751
    %2351 = vmatpush1.msra.mxu0 %v750
    %2352 = vmatprep.subr.mxu0 %v759
    %2353 = vmatpush1.msra.mxu0 %v758
    %2354 = vmatprep.subr.mxu0 %v767
    %2355 = vmatpush1.msra.mxu0 %v766
    %2356 = vmatprep.subr.mxu0 %v775
    %2357 = vmatpush1.msra.mxu0 %v774
    %2358 = vmatprep.subr.mxu0 %v783
    %2359 = vmatpush1.msra.mxu0 %v782
    %2360 = vmatprep.subr.mxu0 %v791
    %2361 = vmatpush1.msra.mxu0 %v790
    %2362 = vmatprep.subr.mxu0 %v799
    %2363 = vmatpush1.msra.mxu0 %v798
    %2364 = vmatprep.subr.mxu0 %v807
    %2365 = vmatpush1.msra.mxu0 %v806
    %2366 = vmatprep.subr.mxu0 %v815
    %2367 = vmatpush1.msra.mxu0 %v814
    %2368 = vmatprep.subr.mxu0 %v823
    %2369 = vmatpush1.msra.mxu0 %v822
    %2370 = vmatprep.subr.mxu0 %v831
    %2371 = vmatpush1.msra.mxu0 %v830
    %2372 = vmatprep.subr.mxu0 %v839
    %2373 = vmatpush1.msra.mxu0 %v838
    %2374 = vmatprep.subr.mxu0 %v847
    %2375 = vmatpush1.msra.mxu0 %v846
    %2376 = vmatprep.subr.mxu0 %v855
    %2377 = vmatpush1.msra.mxu0 %v854
    %2378 = vmatprep.subr.mxu0 %v863
    %2379 = vmatpush1.msra.mxu0 %v862
    %2380 = vmatprep.subr.mxu0 %v871
    %2381 = vmatpush1.msra.mxu0 %v870
    %2382 = vmatprep.subr.mxu0 %v879
    %2383 = vmatpush1.msra.mxu0 %v878
    %2384 = vmatprep.subr.mxu0 %v887
    %2385 = vmatpush1.msra.mxu0 %v886
    %2386 = vmatprep.subr.mxu0 %v895
    %2387 = vmatpush1.msra.mxu0 %v894
    %2388 = vmatprep.subr.mxu0 %v903
    %2389 = vmatpush1.msra.mxu0 %v902
    %2390 = vmatprep.subr.mxu0 %v911
    %2391 = vmatpush1.msra.mxu0 %v910
    %2392 = vmatprep.subr.mxu0 %v919
    %2393 = vmatpush1.msra.mxu0 %v918
    %2394 = vmatprep.subr.mxu0 %v927
    %2395 = vmatpush1.msra.mxu0 %v926
    %2396 = vmatprep.subr.mxu0 %v935
    %2397 = vmatpush1.msra.mxu0 %v934
    %2398 = vmatprep.subr.mxu0 %v943
    %2399 = vmatpush1.msra.mxu0 %v942
    %2400 = vmatprep.subr.mxu0 %v951
    %2401 = vmatpush1.msra.mxu0 %v950
    %2402 = vmatprep.subr.mxu0 %v959
    %2403 = vmatpush1.msra.mxu0 %v958
    %2404 = vmatprep.mubr.f32.mxu0 %v699
    %2405 = vmatmul.mubr.f32.gmra.mrb[0].mxu0 %v698
    %v2406 = vpop.f32.mrb[0].mxu0
    %v2407 = vadd.f32 %v1751, %v2406
    %v2408 = vpop.f32.mrb[0].mxu0
    %v2409 = vadd.f32 %v1755, %v2408
    %2410 = vdwg.mxu0
    %2411 = vmatprep.subr.mxu0 %v967
    %2412 = vmatpush1.msra.mxu0 %v966
    %2413 = vmatprep.subr.mxu0 %v975
    %2414 = vmatpush1.msra.mxu0 %v974
    %2415 = vmatprep.subr.mxu0 %v983
    %2416 = vmatpush1.msra.mxu0 %v982
    %2417 = vmatprep.subr.mxu0 %v991
    %2418 = vmatpush1.msra.mxu0 %v990
    %2419 = vmatprep.subr.mxu0 %v999
    %2420 = vmatpush1.msra.mxu0 %v998
    %2421 = vmatprep.subr.mxu0 %v1007
    %2422 = vmatpush1.msra.mxu0 %v1006
    %2423 = vmatprep.subr.mxu0 %v1015
    %2424 = vmatpush1.msra.mxu0 %v1014
    %2425 = vmatprep.subr.mxu0 %v1023
    %2426 = vmatpush1.msra.mxu0 %v1022
    %2427 = vmatprep.subr.mxu0 %v1031
    %2428 = vmatpush1.msra.mxu0 %v1030
    %2429 = vmatprep.subr.mxu0 %v1039
    %2430 = vmatpush1.msra.mxu0 %v1038
    %2431 = vmatprep.subr.mxu0 %v1047
    %2432 = vmatpush1.msra.mxu0 %v1046
    %2433 = vmatprep.subr.mxu0 %v1055
    %2434 = vmatpush1.msra.mxu0 %v1054
    %2435 = vmatprep.subr.mxu0 %v1063
    %2436 = vmatpush1.msra.mxu0 %v1062
    %2437 = vmatprep.subr.mxu0 %v1071
    %2438 = vmatpush1.msra.mxu0 %v1070
    %2439 = vmatprep.subr.mxu0 %v1079
    %2440 = vmatpush1.msra.mxu0 %v1078
    %2441 = vmatprep.subr.mxu0 %v1087
    %2442 = vmatpush1.msra.mxu0 %v1086
    %2443 = vmatprep.subr.mxu0 %v1095
    %2444 = vmatpush1.msra.mxu0 %v1094
    %2445 = vmatprep.subr.mxu0 %v1103
    %2446 = vmatpush1.msra.mxu0 %v1102
    %2447 = vmatprep.subr.mxu0 %v1111
    %2448 = vmatpush1.msra.mxu0 %v1110
    %2449 = vmatprep.subr.mxu0 %v1119
    %2450 = vmatpush1.msra.mxu0 %v1118
    %2451 = vmatprep.subr.mxu0 %v1127
    %2452 = vmatpush1.msra.mxu0 %v1126
    %2453 = vmatprep.subr.mxu0 %v1135
    %2454 = vmatpush1.msra.mxu0 %v1134
    %2455 = vmatprep.subr.mxu0 %v1143
    %2456 = vmatpush1.msra.mxu0 %v1142
    %2457 = vmatprep.subr.mxu0 %v1151
    %2458 = vmatpush1.msra.mxu0 %v1150
    %2459 = vmatprep.subr.mxu0 %v1159
    %2460 = vmatpush1.msra.mxu0 %v1158
    %2461 = vmatprep.subr.mxu0 %v1167
    %2462 = vmatpush1.msra.mxu0 %v1166
    %2463 = vmatprep.subr.mxu0 %v1175
    %2464 = vmatpush1.msra.mxu0 %v1174
    %2465 = vmatprep.subr.mxu0 %v1183
    %2466 = vmatpush1.msra.mxu0 %v1182
    %2467 = vmatprep.subr.mxu0 %v1191
    %2468 = vmatpush1.msra.mxu0 %v1190
    %2469 = vmatprep.subr.mxu0 %v1199
    %2470 = vmatpush1.msra.mxu0 %v1198
    %2471 = vmatprep.subr.mxu0 %v1207
    %2472 = vmatpush1.msra.mxu0 %v1206
    %2473 = vmatprep.subr.mxu0 %v1215
    %2474 = vmatpush1.msra.mxu0 %v1214
    %2475 = vmatprep.mubr.f32.mxu0 %v701
    %2476 = vmatmul.mubr.f32.gmra.mrb[0].mxu0 %v700
    %v2477 = vpop.f32.mrb[0].mxu0
    %v2478 = vadd.f32 %v2407, %v2477
    %v2479 = vpop.f32.mrb[0].mxu0
    %v2480 = vadd.f32 %v2409, %v2479
    %2481 = vdwg.mxu0
    %2482 = vmatprep.subr.mxu0 %v1223
    %2483 = vmatpush1.msra.mxu0 %v1222
    %2484 = vmatprep.subr.mxu0 %v1231
    %2485 = vmatpush1.msra.mxu0 %v1230
    %2486 = vmatprep.subr.mxu0 %v1239
    %2487 = vmatpush1.msra.mxu0 %v1238
    %2488 = vmatprep.subr.mxu0 %v1247
    %2489 = vmatpush1.msra.mxu0 %v1246
    %2490 = vmatprep.subr.mxu0 %v1255
    %2491 = vmatpush1.msra.mxu0 %v1254
    %2492 = vmatprep.subr.mxu0 %v1263
    %2493 = vmatpush1.msra.mxu0 %v1262
    %2494 = vmatprep.subr.mxu0 %v1271
    %2495 = vmatpush1.msra.mxu0 %v1270
    %2496 = vmatprep.subr.mxu0 %v1279
    %2497 = vmatpush1.msra.mxu0 %v1278
    %2498 = vmatprep.subr.mxu0 %v1287
    %2499 = vmatpush1.msra.mxu0 %v1286
    %2500 = vmatprep.subr.mxu0 %v1295
    %2501 = vmatpush1.msra.mxu0 %v1294
    %2502 = vmatprep.subr.mxu0 %v1303
    %2503 = vmatpush1.msra.mxu0 %v1302
    %2504 = vmatprep.subr.mxu0 %v1311
    %2505 = vmatpush1.msra.mxu0 %v1310
    %2506 = vmatprep.subr.mxu0 %v1319
    %2507 = vmatpush1.msra.mxu0 %v1318
    %2508 = vmatprep.subr.mxu0 %v1327
    %2509 = vmatpush1.msra.mxu0 %v1326
    %2510 = vmatprep.subr.mxu0 %v1335
    %2511 = vmatpush1.msra.mxu0 %v1334
    %2512 = vmatprep.subr.mxu0 %v1343
    %2513 = vmatpush1.msra.mxu0 %v1342
    %2514 = vmatprep.subr.mxu0 %v1351
    %2515 = vmatpush1.msra.mxu0 %v1350
    %2516 = vmatprep.subr.mxu0 %v1359
    %2517 = vmatpush1.msra.mxu0 %v1358
    %2518 = vmatprep.subr.mxu0 %v1367
    %2519 = vmatpush1.msra.mxu0 %v1366
    %2520 = vmatprep.subr.mxu0 %v1375
    %2521 = vmatpush1.msra.mxu0 %v1374
    %2522 = vmatprep.subr.mxu0 %v1383
    %2523 = vmatpush1.msra.mxu0 %v1382
    %2524 = vmatprep.subr.mxu0 %v1391
    %2525 = vmatpush1.msra.mxu0 %v1390
    %2526 = vmatprep.subr.mxu0 %v1399
    %2527 = vmatpush1.msra.mxu0 %v1398
    %2528 = vmatprep.subr.mxu0 %v1407
    %2529 = vmatpush1.msra.mxu0 %v1406
    %2530 = vmatprep.subr.mxu0 %v1415
    %2531 = vmatpush1.msra.mxu0 %v1414
    %2532 = vmatprep.subr.mxu0 %v1423
    %2533 = vmatpush1.msra.mxu0 %v1422
    %2534 = vmatprep.subr.mxu0 %v1431
    %2535 = vmatpush1.msra.mxu0 %v1430
    %2536 = vmatprep.subr.mxu0 %v1439
    %2537 = vmatpush1.msra.mxu0 %v1438
    %2538 = vmatprep.subr.mxu0 %v1447
    %2539 = vmatpush1.msra.mxu0 %v1446
    %2540 = vmatprep.subr.mxu0 %v1455
    %2541 = vmatpush1.msra.mxu0 %v1454
    %2542 = vmatprep.subr.mxu0 %v1463
    %2543 = vmatpush1.msra.mxu0 %v1462
    %2544 = vmatprep.subr.mxu0 %v1471
    %2545 = vmatpush1.msra.mxu0 %v1470
    %2546 = vmatprep.mubr.f32.mxu0 %v703
    %2547 = vmatmul.mubr.f32.gmra.mrb[0].mxu0 %v702
    %v2548 = vpop.f32.mrb[0].mxu0
    %v2549 = vadd.f32 %v2478, %v2548
    %v2550 = vpop.f32.mrb[0].mxu0
    %v2551 = vadd.f32 %v2480, %v2550
    %2552 = vdwg.mxu0
    %2553 = vmatprep.subr.mxu0 %v1479
    %2554 = vmatpush1.msra.mxu0 %v1478
    %2555 = vmatprep.subr.mxu0 %v1487
    %2556 = vmatpush1.msra.mxu0 %v1486
    %2557 = vmatprep.subr.mxu0 %v1495
    %2558 = vmatpush1.msra.mxu0 %v1494
    %2559 = vmatprep.subr.mxu0 %v1503
    %2560 = vmatpush1.msra.mxu0 %v1502
    %2561 = vmatprep.subr.mxu0 %v1511
    %2562 = vmatpush1.msra.mxu0 %v1510
    %2563 = vmatprep.subr.mxu0 %v1519
    %2564 = vmatpush1.msra.mxu0 %v1518
    %2565 = vmatprep.subr.mxu0 %v1527
    %2566 = vmatpush1.msra.mxu0 %v1526
    %2567 = vmatprep.subr.mxu0 %v1535
    %2568 = vmatpush1.msra.mxu0 %v1534
    %2569 = vmatprep.subr.mxu0 %v1543
    %2570 = vmatpush1.msra.mxu0 %v1542
    %2571 = vmatprep.subr.mxu0 %v1551
    %2572 = vmatpush1.msra.mxu0 %v1550
    %2573 = vmatprep.subr.mxu0 %v1559
    %2574 = vmatpush1.msra.mxu0 %v1558
    %2575 = vmatprep.subr.mxu0 %v1567
    %2576 = vmatpush1.msra.mxu0 %v1566
    %2577 = vmatprep.subr.mxu0 %v1575
    %2578 = vmatpush1.msra.mxu0 %v1574
    %2579 = vmatprep.subr.mxu0 %v1583
    %2580 = vmatpush1.msra.mxu0 %v1582
    %2581 = vmatprep.subr.mxu0 %v1591
    %2582 = vmatpush1.msra.mxu0 %v1590
    %2583 = vmatprep.subr.mxu0 %v1599
    %2584 = vmatpush1.msra.mxu0 %v1598
    %2585 = vmatprep.subr.mxu0 %v1607
    %2586 = vmatpush1.msra.mxu0 %v1606
    %2587 = vmatprep.subr.mxu0 %v1615
    %2588 = vmatpush1.msra.mxu0 %v1614
    %2589 = vmatprep.subr.mxu0 %v1623
    %2590 = vmatpush1.msra.mxu0 %v1622
    %2591 = vmatprep.subr.mxu0 %v1631
    %2592 = vmatpush1.msra.mxu0 %v1630
    %2593 = vmatprep.subr.mxu0 %v1639
    %2594 = vmatpush1.msra.mxu0 %v1638
    %2595 = vmatprep.subr.mxu0 %v1647
    %2596 = vmatpush1.msra.mxu0 %v1646
    %2597 = vmatprep.subr.mxu0 %v1655
    %2598 = vmatpush1.msra.mxu0 %v1654
    %2599 = vmatprep.subr.mxu0 %v1663
    %2600 = vmatpush1.msra.mxu0 %v1662
    %2601 = vmatprep.subr.mxu0 %v1671
    %2602 = vmatpush1.msra.mxu0 %v1670
    %2603 = vmatprep.subr.mxu0 %v1679
    %2604 = vmatpush1.msra.mxu0 %v1678
    %2605 = vmatprep.subr.mxu0 %v1687
    %2606 = vmatpush1.msra.mxu0 %v1686
    %2607 = vmatprep.subr.mxu0 %v1695
    %2608 = vmatpush1.msra.mxu0 %v1694
    %2609 = vmatprep.subr.mxu0 %v1703
    %2610 = vmatpush1.msra.mxu0 %v1702
    %2611 = vmatprep.subr.mxu0 %v1711
    %2612 = vmatpush1.msra.mxu0 %v1710
    %2613 = vmatprep.subr.mxu0 %v1719
    %2614 = vmatpush1.msra.mxu0 %v1718
    %2615 = vmatprep.subr.mxu0 %v1727
    %2616 = vmatpush1.msra.mxu0 %v1726
    %2617 = vmatprep.mubr.f32.mxu0 %v705
    %2618 = vmatmul.mubr.f32.gmra.mrb[0].mxu0 %v704
    %v2619 = vpop.f32.mrb[0].mxu0
    %v2620 = vadd.f32 %v2549, %v2619
    %v2621 = vpop.f32.mrb[0].mxu0
    %v2622 = vadd.f32 %v2551, %v2621
    %2623 = vdwg.mxu0
    %2624 = vmatprep.subr.mxu0 %v713
    %2625 = vmatpush1.msra.mxu0 %v712
    %2626 = vmatprep.subr.mxu0 %v721
    %2627 = vmatpush1.msra.mxu0 %v720
    %2628 = vmatprep.subr.mxu0 %v729
    %2629 = vmatpush1.msra.mxu0 %v728
    %2630 = vmatprep.subr.mxu0 %v737
    %2631 = vmatpush1.msra.mxu0 %v736
    %2632 = vmatprep.subr.mxu0 %v745
    %2633 = vmatpush1.msra.mxu0 %v744
    %2634 = vmatprep.subr.mxu0 %v753
    %2635 = vmatpush1.msra.mxu0 %v752
    %2636 = vmatprep.subr.mxu0 %v761
    %2637 = vmatpush1.msra.mxu0 %v760
    %2638 = vmatprep.subr.mxu0 %v769
    %2639 = vmatpush1.msra.mxu0 %v768
    %2640 = vmatprep.subr.mxu0 %v777
    %2641 = vmatpush1.msra.mxu0 %v776
    %2642 = vmatprep.subr.mxu0 %v785
    %2643 = vmatpush1.msra.mxu0 %v784
    %2644 = vmatprep.subr.mxu0 %v793
    %2645 = vmatpush1.msra.mxu0 %v792
    %2646 = vmatprep.subr.mxu0 %v801
    %2647 = vmatpush1.msra.mxu0 %v800
    %2648 = vmatprep.subr.mxu0 %v809
    %2649 = vmatpush1.msra.mxu0 %v808
    %2650 = vmatprep.subr.mxu0 %v817
    %2651 = vmatpush1.msra.mxu0 %v816
    %2652 = vmatprep.subr.mxu0 %v825
    %2653 = vmatpush1.msra.mxu0 %v824
    %2654 = vmatprep.subr.mxu0 %v833
    %2655 = vmatpush1.msra.mxu0 %v832
    %2656 = vmatprep.subr.mxu0 %v841
    %2657 = vmatpush1.msra.mxu0 %v840
    %2658 = vmatprep.subr.mxu0 %v849
    %2659 = vmatpush1.msra.mxu0 %v848
    %2660 = vmatprep.subr.mxu0 %v857
    %2661 = vmatpush1.msra.mxu0 %v856
    %2662 = vmatprep.subr.mxu0 %v865
    %2663 = vmatpush1.msra.mxu0 %v864
    %2664 = vmatprep.subr.mxu0 %v873
    %2665 = vmatpush1.msra.mxu0 %v872
    %2666 = vmatprep.subr.mxu0 %v881
    %2667 = vmatpush1.msra.mxu0 %v880
    %2668 = vmatprep.subr.mxu0 %v889
    %2669 = vmatpush1.msra.mxu0 %v888
    %2670 = vmatprep.subr.mxu0 %v897
    %2671 = vmatpush1.msra.mxu0 %v896
    %2672 = vmatprep.subr.mxu0 %v905
    %2673 = vmatpush1.msra.mxu0 %v904
    %2674 = vmatprep.subr.mxu0 %v913
    %2675 = vmatpush1.msra.mxu0 %v912
    %2676 = vmatprep.subr.mxu0 %v921
    %2677 = vmatpush1.msra.mxu0 %v920
    %2678 = vmatprep.subr.mxu0 %v929
    %2679 = vmatpush1.msra.mxu0 %v928
    %2680 = vmatprep.subr.mxu0 %v937
    %2681 = vmatpush1.msra.mxu0 %v936
    %2682 = vmatprep.subr.mxu0 %v945
    %2683 = vmatpush1.msra.mxu0 %v944
    %2684 = vmatprep.subr.mxu0 %v953
    %2685 = vmatpush1.msra.mxu0 %v952
    %2686 = vmatprep.subr.mxu0 %v961
    %2687 = vmatpush1.msra.mxu0 %v960
    %2688 = vmatprep.mubr.f32.mxu0 %v699
    %2689 = vmatmul.mubr.f32.gmra.mrb[0].mxu0 %v698
    %v2690 = vpop.f32.mrb[0].mxu0
    %v2691 = vadd.f32 %v1759, %v2690
    %v2692 = vpop.f32.mrb[0].mxu0
    %v2693 = vadd.f32 %v1763, %v2692
    %2694 = vdwg.mxu0
    %2695 = vmatprep.subr.mxu0 %v969
    %2696 = vmatpush1.msra.mxu0 %v968
    %2697 = vmatprep.subr.mxu0 %v977
    %2698 = vmatpush1.msra.mxu0 %v976
    %2699 = vmatprep.subr.mxu0 %v985
    %2700 = vmatpush1.msra.mxu0 %v984
    %2701 = vmatprep.subr.mxu0 %v993
    %2702 = vmatpush1.msra.mxu0 %v992
    %2703 = vmatprep.subr.mxu0 %v1001
    %2704 = vmatpush1.msra.mxu0 %v1000
    %2705 = vmatprep.subr.mxu0 %v1009
    %2706 = vmatpush1.msra.mxu0 %v1008
    %2707 = vmatprep.subr.mxu0 %v1017
    %2708 = vmatpush1.msra.mxu0 %v1016
    %2709 = vmatprep.subr.mxu0 %v1025
    %2710 = vmatpush1.msra.mxu0 %v1024
    %2711 = vmatprep.subr.mxu0 %v1033
    %2712 = vmatpush1.msra.mxu0 %v1032
    %2713 = vmatprep.subr.mxu0 %v1041
    %2714 = vmatpush1.msra.mxu0 %v1040
    %2715 = vmatprep.subr.mxu0 %v1049
    %2716 = vmatpush1.msra.mxu0 %v1048
    %2717 = vmatprep.subr.mxu0 %v1057
    %2718 = vmatpush1.msra.mxu0 %v1056
    %2719 = vmatprep.subr.mxu0 %v1065
    %2720 = vmatpush1.msra.mxu0 %v1064
    %2721 = vmatprep.subr.mxu0 %v1073
    %2722 = vmatpush1.msra.mxu0 %v1072
    %2723 = vmatprep.subr.mxu0 %v1081
    %2724 = vmatpush1.msra.mxu0 %v1080
    %2725 = vmatprep.subr.mxu0 %v1089
    %2726 = vmatpush1.msra.mxu0 %v1088
    %2727 = vmatprep.subr.mxu0 %v1097
    %2728 = vmatpush1.msra.mxu0 %v1096
    %2729 = vmatprep.subr.mxu0 %v1105
    %2730 = vmatpush1.msra.mxu0 %v1104
    %2731 = vmatprep.subr.mxu0 %v1113
    %2732 = vmatpush1.msra.mxu0 %v1112
    %2733 = vmatprep.subr.mxu0 %v1121
    %2734 = vmatpush1.msra.mxu0 %v1120
    %2735 = vmatprep.subr.mxu0 %v1129
    %2736 = vmatpush1.msra.mxu0 %v1128
    %2737 = vmatprep.subr.mxu0 %v1137
    %2738 = vmatpush1.msra.mxu0 %v1136
    %2739 = vmatprep.subr.mxu0 %v1145
    %2740 = vmatpush1.msra.mxu0 %v1144
    %2741 = vmatprep.subr.mxu0 %v1153
    %2742 = vmatpush1.msra.mxu0 %v1152
    %2743 = vmatprep.subr.mxu0 %v1161
    %2744 = vmatpush1.msra.mxu0 %v1160
    %2745 = vmatprep.subr.mxu0 %v1169
    %2746 = vmatpush1.msra.mxu0 %v1168
    %2747 = vmatprep.subr.mxu0 %v1177
    %2748 = vmatpush1.msra.mxu0 %v1176
    %2749 = vmatprep.subr.mxu0 %v1185
    %2750 = vmatpush1.msra.mxu0 %v1184
    %2751 = vmatprep.subr.mxu0 %v1193
    %2752 = vmatpush1.msra.mxu0 %v1192
    %2753 = vmatprep.subr.mxu0 %v1201
    %2754 = vmatpush1.msra.mxu0 %v1200
    %2755 = vmatprep.subr.mxu0 %v1209
    %2756 = vmatpush1.msra.mxu0 %v1208
    %2757 = vmatprep.subr.mxu0 %v1217
    %2758 = vmatpush1.msra.mxu0 %v1216
    %2759 = vmatprep.mubr.f32.mxu0 %v701
    %2760 = vmatmul.mubr.f32.gmra.mrb[0].mxu0 %v700
    %v2761 = vpop.f32.mrb[0].mxu0
    %v2762 = vadd.f32 %v2691, %v2761
    %v2763 = vpop.f32.mrb[0].mxu0
    %v2764 = vadd.f32 %v2693, %v2763
    %2765 = vdwg.mxu0
    %2766 = vmatprep.subr.mxu0 %v1225
    %2767 = vmatpush1.msra.mxu0 %v1224
    %2768 = vmatprep.subr.mxu0 %v1233
    %2769 = vmatpush1.msra.mxu0 %v1232
    %2770 = vmatprep.subr.mxu0 %v1241
    %2771 = vmatpush1.msra.mxu0 %v1240
    %2772 = vmatprep.subr.mxu0 %v1249
    %2773 = vmatpush1.msra.mxu0 %v1248
    %2774 = vmatprep.subr.mxu0 %v1257
    %2775 = vmatpush1.msra.mxu0 %v1256
    %2776 = vmatprep.subr.mxu0 %v1265
    %2777 = vmatpush1.msra.mxu0 %v1264
    %2778 = vmatprep.subr.mxu0 %v1273
    %2779 = vmatpush1.msra.mxu0 %v1272
    %2780 = vmatprep.subr.mxu0 %v1281
    %2781 = vmatpush1.msra.mxu0 %v1280
    %2782 = vmatprep.subr.mxu0 %v1289
    %2783 = vmatpush1.msra.mxu0 %v1288
    %2784 = vmatprep.subr.mxu0 %v1297
    %2785 = vmatpush1.msra.mxu0 %v1296
    %2786 = vmatprep.subr.mxu0 %v1305
    %2787 = vmatpush1.msra.mxu0 %v1304
    %2788 = vmatprep.subr.mxu0 %v1313
    %2789 = vmatpush1.msra.mxu0 %v1312
    %2790 = vmatprep.subr.mxu0 %v1321
    %2791 = vmatpush1.msra.mxu0 %v1320
    %2792 = vmatprep.subr.mxu0 %v1329
    %2793 = vmatpush1.msra.mxu0 %v1328
    %2794 = vmatprep.subr.mxu0 %v1337
    %2795 = vmatpush1.msra.mxu0 %v1336
    %2796 = vmatprep.subr.mxu0 %v1345
    %2797 = vmatpush1.msra.mxu0 %v1344
    %2798 = vmatprep.subr.mxu0 %v1353
    %2799 = vmatpush1.msra.mxu0 %v1352
    %2800 = vmatprep.subr.mxu0 %v1361
    %2801 = vmatpush1.msra.mxu0 %v1360
    %2802 = vmatprep.subr.mxu0 %v1369
    %2803 = vmatpush1.msra.mxu0 %v1368
    %2804 = vmatprep.subr.mxu0 %v1377
    %2805 = vmatpush1.msra.mxu0 %v1376
    %2806 = vmatprep.subr.mxu0 %v1385
    %2807 = vmatpush1.msra.mxu0 %v1384
    %2808 = vmatprep.subr.mxu0 %v1393
    %2809 = vmatpush1.msra.mxu0 %v1392
    %2810 = vmatprep.subr.mxu0 %v1401
    %2811 = vmatpush1.msra.mxu0 %v1400
    %2812 = vmatprep.subr.mxu0 %v1409
    %2813 = vmatpush1.msra.mxu0 %v1408
    %2814 = vmatprep.subr.mxu0 %v1417
    %2815 = vmatpush1.msra.mxu0 %v1416
    %2816 = vmatprep.subr.mxu0 %v1425
    %2817 = vmatpush1.msra.mxu0 %v1424
    %2818 = vmatprep.subr.mxu0 %v1433
    %2819 = vmatpush1.msra.mxu0 %v1432
    %2820 = vmatprep.subr.mxu0 %v1441
    %2821 = vmatpush1.msra.mxu0 %v1440
    %2822 = vmatprep.subr.mxu0 %v1449
    %2823 = vmatpush1.msra.mxu0 %v1448
    %2824 = vmatprep.subr.mxu0 %v1457
    %2825 = vmatpush1.msra.mxu0 %v1456
    %2826 = vmatprep.subr.mxu0 %v1465
    %2827 = vmatpush1.msra.mxu0 %v1464
    %2828 = vmatprep.subr.mxu0 %v1473
    %2829 = vmatpush1.msra.mxu0 %v1472
    %2830 = vmatprep.mubr.f32.mxu0 %v703
    %2831 = vmatmul.mubr.f32.gmra.mrb[0].mxu0 %v702
    %v2832 = vpop.f32.mrb[0].mxu0
    %v2833 = vadd.f32 %v2762, %v2832
    %v2834 = vpop.f32.mrb[0].mxu0
    %v2835 = vadd.f32 %v2764, %v2834
    %2836 = vdwg.mxu0
    %2837 = vmatprep.subr.mxu0 %v1481
    %2838 = vmatpush1.msra.mxu0 %v1480
    %2839 = vmatprep.subr.mxu0 %v1489
    %2840 = vmatpush1.msra.mxu0 %v1488
    %2841 = vmatprep.subr.mxu0 %v1497
    %2842 = vmatpush1.msra.mxu0 %v1496
    %2843 = vmatprep.subr.mxu0 %v1505
    %2844 = vmatpush1.msra.mxu0 %v1504
    %2845 = vmatprep.subr.mxu0 %v1513
    %2846 = vmatpush1.msra.mxu0 %v1512
    %2847 = vmatprep.subr.mxu0 %v1521
    %2848 = vmatpush1.msra.mxu0 %v1520
    %2849 = vmatprep.subr.mxu0 %v1529
    %2850 = vmatpush1.msra.mxu0 %v1528
    %2851 = vmatprep.subr.mxu0 %v1537
    %2852 = vmatpush1.msra.mxu0 %v1536
    %2853 = vmatprep.subr.mxu0 %v1545
    %2854 = vmatpush1.msra.mxu0 %v1544
    %2855 = vmatprep.subr.mxu0 %v1553
    %2856 = vmatpush1.msra.mxu0 %v1552
    %2857 = vmatprep.subr.mxu0 %v1561
    %2858 = vmatpush1.msra.mxu0 %v1560
    %2859 = vmatprep.subr.mxu0 %v1569
    %2860 = vmatpush1.msra.mxu0 %v1568
    %2861 = vmatprep.subr.mxu0 %v1577
    %2862 = vmatpush1.msra.mxu0 %v1576
    %2863 = vmatprep.subr.mxu0 %v1585
    %2864 = vmatpush1.msra.mxu0 %v1584
    %2865 = vmatprep.subr.mxu0 %v1593
    %2866 = vmatpush1.msra.mxu0 %v1592
    %2867 = vmatprep.subr.mxu0 %v1601
    %2868 = vmatpush1.msra.mxu0 %v1600
    %2869 = vmatprep.subr.mxu0 %v1609
    %2870 = vmatpush1.msra.mxu0 %v1608
    %2871 = vmatprep.subr.mxu0 %v1617
    %2872 = vmatpush1.msra.mxu0 %v1616
    %2873 = vmatprep.subr.mxu0 %v1625
    %2874 = vmatpush1.msra.mxu0 %v1624
    %2875 = vmatprep.subr.mxu0 %v1633
    %2876 = vmatpush1.msra.mxu0 %v1632
    %2877 = vmatprep.subr.mxu0 %v1641
    %2878 = vmatpush1.msra.mxu0 %v1640
    %2879 = vmatprep.subr.mxu0 %v1649
    %2880 = vmatpush1.msra.mxu0 %v1648
    %2881 = vmatprep.subr.mxu0 %v1657
    %2882 = vmatpush1.msra.mxu0 %v1656
    %2883 = vmatprep.subr.mxu0 %v1665
    %2884 = vmatpush1.msra.mxu0 %v1664
    %2885 = vmatprep.subr.mxu0 %v1673
    %2886 = vmatpush1.msra.mxu0 %v1672
    %2887 = vmatprep.subr.mxu0 %v1681
    %2888 = vmatpush1.msra.mxu0 %v1680
    %2889 = vmatprep.subr.mxu0 %v1689
    %2890 = vmatpush1.msra.mxu0 %v1688
    %2891 = vmatprep.subr.mxu0 %v1697
    %2892 = vmatpush1.msra.mxu0 %v1696
    %2893 = vmatprep.subr.mxu0 %v1705
    %2894 = vmatpush1.msra.mxu0 %v1704
    %2895 = vmatprep.subr.mxu0 %v1713
    %2896 = vmatpush1.msra.mxu0 %v1712
    %2897 = vmatprep.subr.mxu0 %v1721
    %2898 = vmatpush1.msra.mxu0 %v1720
    %2899 = vmatprep.subr.mxu0 %v1729
    %2900 = vmatpush1.msra.mxu0 %v1728
    %2901 = vmatprep.mubr.f32.mxu0 %v705
    %2902 = vmatmul.mubr.f32.gmra.mrb[0].mxu0 %v704
    %v2903 = vpop.f32.mrb[0].mxu0
    %v2904 = vadd.f32 %v2833, %v2903
    %v2905 = vpop.f32.mrb[0].mxu0
    %v2906 = vadd.f32 %v2835, %v2905
    %2907 = vdwg.mxu0
    %v2908 = vmax.f32 %v2052, 0.0
    %v2909 = vmax.f32 %v2054, 0.0
    %v2910 = vmax.f32 %v2336, 0.0
    %v2911 = vmax.f32 %v2338, 0.0
    %v2912 = vmax.f32 %v2620, 0.0
    %v2913 = vmax.f32 %v2622, 0.0
    %v2914 = vmax.f32 %v2904, 0.0
    %v2915 = vmax.f32 %v2906, 0.0
    %v2916 = vld [vmem:[#allocation11] sm:$0xff]
    %v2917 = vld [vmem:[#allocation11 + $0x8] sm:$0xff]
    %v2918 = vld [vmem:[#allocation11 + $0x10] sm:$0xff]
    %v2919 = vld [vmem:[#allocation11 + $0x18] sm:$0xff]
    %v2920 = vld [vmem:[#allocation11 + $0x20] sm:$0xff]
    %v2921 = vld [vmem:[#allocation11 + $0x28] sm:$0xff]
    %v2922 = vld [vmem:[#allocation11 + $0x30] sm:$0xff]
    %v2923 = vld [vmem:[#allocation11 + $0x38] sm:$0xff]
    %v2924 = vld [vmem:[#allocation11 + $0x40] sm:$0xff]
    %v2925 = vld [vmem:[#allocation11 + $0x48] sm:$0xff]
    %v2926 = vld [vmem:[#allocation11 + $0x50] sm:$0xff]
    %v2927 = vld [vmem:[#allocation11 + $0x58] sm:$0xff]
    %v2928 = vld [vmem:[#allocation11 + $0x60] sm:$0xff]
    %v2929 = vld [vmem:[#allocation11 + $0x68] sm:$0xff]
    %v2930 = vld [vmem:[#allocation11 + $0x70] sm:$0xff]
    %v2931 = vld [vmem:[#allocation11 + $0x78] sm:$0xff]
    %v2932 = vld [vmem:[#allocation11 + $0x80] sm:$0xff]
    %v2933 = vld [vmem:[#allocation11 + $0x88] sm:$0xff]
    %v2934 = vld [vmem:[#allocation11 + $0x90] sm:$0xff]
    %v2935 = vld [vmem:[#allocation11 + $0x98] sm:$0xff]
    %v2936 = vld [vmem:[#allocation11 + $0xa0] sm:$0xff]
    %v2937 = vld [vmem:[#allocation11 + $0xa8] sm:$0xff]
    %v2938 = vld [vmem:[#allocation11 + $0xb0] sm:$0xff]
    %v2939 = vld [vmem:[#allocation11 + $0xb8] sm:$0xff]
    %v2940 = vld [vmem:[#allocation11 + $0xc0] sm:$0xff]
    %v2941 = vld [vmem:[#allocation11 + $0xc8] sm:$0xff]
    %v2942 = vld [vmem:[#allocation11 + $0xd0] sm:$0xff]
    %v2943 = vld [vmem:[#allocation11 + $0xd8] sm:$0xff]
    %v2944 = vld [vmem:[#allocation11 + $0xe0] sm:$0xff]
    %v2945 = vld [vmem:[#allocation11 + $0xe8] sm:$0xff]
    %v2946 = vld [vmem:[#allocation11 + $0xf0] sm:$0xff]
    %v2947 = vld [vmem:[#allocation11 + $0xf8] sm:$0xff]
    %v2948 = vld [vmem:[#allocation11 + $0x100] sm:$0xff]
    %v2949 = vld [vmem:[#allocation11 + $0x108] sm:$0xff]
    %v2950 = vld [vmem:[#allocation11 + $0x110] sm:$0xff]
    %v2951 = vld [vmem:[#allocation11 + $0x118] sm:$0xff]
    %v2952 = vld [vmem:[#allocation11 + $0x120] sm:$0xff]
    %v2953 = vld [vmem:[#allocation11 + $0x128] sm:$0xff]
    %v2954 = vld [vmem:[#allocation11 + $0x130] sm:$0xff]
    %v2955 = vld [vmem:[#allocation11 + $0x138] sm:$0xff]
    %v2956 = vld [vmem:[#allocation11 + $0x140] sm:$0xff]
    %v2957 = vld [vmem:[#allocation11 + $0x148] sm:$0xff]
    %v2958 = vld [vmem:[#allocation11 + $0x150] sm:$0xff]
    %v2959 = vld [vmem:[#allocation11 + $0x158] sm:$0xff]
    %v2960 = vld [vmem:[#allocation11 + $0x160] sm:$0xff]
    %v2961 = vld [vmem:[#allocation11 + $0x168] sm:$0xff]
    %v2962 = vld [vmem:[#allocation11 + $0x170] sm:$0xff]
    %v2963 = vld [vmem:[#allocation11 + $0x178] sm:$0xff]
    %v2964 = vld [vmem:[#allocation11 + $0x180] sm:$0xff]
    %v2965 = vld [vmem:[#allocation11 + $0x188] sm:$0xff]
    %v2966 = vld [vmem:[#allocation11 + $0x190] sm:$0xff]
    %v2967 = vld [vmem:[#allocation11 + $0x198] sm:$0xff]
    %v2968 = vld [vmem:[#allocation11 + $0x1a0] sm:$0xff]
    %v2969 = vld [vmem:[#allocation11 + $0x1a8] sm:$0xff]
    %v2970 = vld [vmem:[#allocation11 + $0x1b0] sm:$0xff]
    %v2971 = vld [vmem:[#allocation11 + $0x1b8] sm:$0xff]
    %v2972 = vld [vmem:[#allocation11 + $0x1c0] sm:$0xff]
    %v2973 = vld [vmem:[#allocation11 + $0x1c8] sm:$0xff]
    %v2974 = vld [vmem:[#allocation11 + $0x1d0] sm:$0xff]
    %v2975 = vld [vmem:[#allocation11 + $0x1d8] sm:$0xff]
    %v2976 = vld [vmem:[#allocation11 + $0x1e0] sm:$0xff]
    %v2977 = vld [vmem:[#allocation11 + $0x1e8] sm:$0xff]
    %v2978 = vld [vmem:[#allocation11 + $0x1f0] sm:$0xff]
    %v2979 = vld [vmem:[#allocation11 + $0x1f8] sm:$0xff]
    %v2980 = vld [vmem:[#allocation11 + $0x200] sm:$0xff]
    %v2981 = vld [vmem:[#allocation11 + $0x208] sm:$0xff]
    %v2982 = vld [vmem:[#allocation11 + $0x210] sm:$0xff]
    %v2983 = vld [vmem:[#allocation11 + $0x218] sm:$0xff]
    %v2984 = vld [vmem:[#allocation11 + $0x220] sm:$0xff]
    %v2985 = vld [vmem:[#allocation11 + $0x228] sm:$0xff]
    %v2986 = vld [vmem:[#allocation11 + $0x230] sm:$0xff]
    %v2987 = vld [vmem:[#allocation11 + $0x238] sm:$0xff]
    %v2988 = vld [vmem:[#allocation11 + $0x240] sm:$0xff]
    %v2989 = vld [vmem:[#allocation11 + $0x248] sm:$0xff]
    %v2990 = vld [vmem:[#allocation11 + $0x250] sm:$0xff]
    %v2991 = vld [vmem:[#allocation11 + $0x258] sm:$0xff]
    %v2992 = vld [vmem:[#allocation11 + $0x260] sm:$0xff]
    %v2993 = vld [vmem:[#allocation11 + $0x268] sm:$0xff]
    %v2994 = vld [vmem:[#allocation11 + $0x270] sm:$0xff]
    %v2995 = vld [vmem:[#allocation11 + $0x278] sm:$0xff]
    %v2996 = vld [vmem:[#allocation11 + $0x280] sm:$0xff]
    %v2997 = vld [vmem:[#allocation11 + $0x288] sm:$0xff]
    %v2998 = vld [vmem:[#allocation11 + $0x290] sm:$0xff]
    %v2999 = vld [vmem:[#allocation11 + $0x298] sm:$0xff]
    %v3000 = vld [vmem:[#allocation11 + $0x2a0] sm:$0xff]
    %v3001 = vld [vmem:[#allocation11 + $0x2a8] sm:$0xff]
    %v3002 = vld [vmem:[#allocation11 + $0x2b0] sm:$0xff]
    %v3003 = vld [vmem:[#allocation11 + $0x2b8] sm:$0xff]
    %v3004 = vld [vmem:[#allocation11 + $0x2c0] sm:$0xff]
    %v3005 = vld [vmem:[#allocation11 + $0x2c8] sm:$0xff]
    %v3006 = vld [vmem:[#allocation11 + $0x2d0] sm:$0xff]
    %v3007 = vld [vmem:[#allocation11 + $0x2d8] sm:$0xff]
    %v3008 = vld [vmem:[#allocation11 + $0x2e0] sm:$0xff]
    %v3009 = vld [vmem:[#allocation11 + $0x2e8] sm:$0xff]
    %v3010 = vld [vmem:[#allocation11 + $0x2f0] sm:$0xff]
    %v3011 = vld [vmem:[#allocation11 + $0x2f8] sm:$0xff]
    %v3012 = vld [vmem:[#allocation11 + $0x300] sm:$0xff]
    %v3013 = vld [vmem:[#allocation11 + $0x308] sm:$0xff]
    %v3014 = vld [vmem:[#allocation11 + $0x310] sm:$0xff]
    %v3015 = vld [vmem:[#allocation11 + $0x318] sm:$0xff]
    %v3016 = vld [vmem:[#allocation11 + $0x320] sm:$0xff]
    %v3017 = vld [vmem:[#allocation11 + $0x328] sm:$0xff]
    %v3018 = vld [vmem:[#allocation11 + $0x330] sm:$0xff]
    %v3019 = vld [vmem:[#allocation11 + $0x338] sm:$0xff]
    %v3020 = vld [vmem:[#allocation11 + $0x340] sm:$0xff]
    %v3021 = vld [vmem:[#allocation11 + $0x348] sm:$0xff]
    %v3022 = vld [vmem:[#allocation11 + $0x350] sm:$0xff]
    %v3023 = vld [vmem:[#allocation11 + $0x358] sm:$0xff]
    %v3024 = vld [vmem:[#allocation11 + $0x360] sm:$0xff]
    %v3025 = vld [vmem:[#allocation11 + $0x368] sm:$0xff]
    %v3026 = vld [vmem:[#allocation11 + $0x370] sm:$0xff]
    %v3027 = vld [vmem:[#allocation11 + $0x378] sm:$0xff]
    %v3028 = vld [vmem:[#allocation11 + $0x380] sm:$0xff]
    %v3029 = vld [vmem:[#allocation11 + $0x388] sm:$0xff]
    %v3030 = vld [vmem:[#allocation11 + $0x390] sm:$0xff]
    %v3031 = vld [vmem:[#allocation11 + $0x398] sm:$0xff]
    %v3032 = vld [vmem:[#allocation11 + $0x3a0] sm:$0xff]
    %v3033 = vld [vmem:[#allocation11 + $0x3a8] sm:$0xff]
    %v3034 = vld [vmem:[#allocation11 + $0x3b0] sm:$0xff]
    %v3035 = vld [vmem:[#allocation11 + $0x3b8] sm:$0xff]
    %v3036 = vld [vmem:[#allocation11 + $0x3c0] sm:$0xff]
    %v3037 = vld [vmem:[#allocation11 + $0x3c8] sm:$0xff]
    %v3038 = vld [vmem:[#allocation11 + $0x3d0] sm:$0xff]
    %v3039 = vld [vmem:[#allocation11 + $0x3d8] sm:$0xff]
    %v3040 = vld [vmem:[#allocation11 + $0x3e0] sm:$0xff]
    %v3041 = vld [vmem:[#allocation11 + $0x3e8] sm:$0xff]
    %v3042 = vld [vmem:[#allocation11 + $0x3f0] sm:$0xff]
    %v3043 = vld [vmem:[#allocation11 + $0x3f8] sm:$0xff]
    %v3044 = vld [vmem:[#allocation13] sm:$0x1]
    %v3046 = vlaneseq
    %v3047 = vshrl.u32 %v3046, 7
    %v3048 = vsub.s32 0, %v3047
    %v3049 = vrot.slane %v3044, %v3048
    %3051 = vmatprep.subr.mxu0 0.0
    %3052 = vmatpush1.msra.mxu0 %v2916
    %3053 = vmatprep.subr.mxu0 0.0
    %3054 = vmatpush1.msra.mxu0 %v2917
    %3055 = vmatprep.subr.mxu0 0.0
    %3056 = vmatpush1.msra.mxu0 %v2918
    %3057 = vmatprep.subr.mxu0 0.0
    %3058 = vmatpush1.msra.mxu0 %v2919
    %3059 = vmatprep.subr.mxu0 0.0
    %3060 = vmatpush1.msra.mxu0 %v2920
    %3061 = vmatprep.subr.mxu0 0.0
    %3062 = vmatpush1.msra.mxu0 %v2921
    %3063 = vmatprep.subr.mxu0 0.0
    %3064 = vmatpush1.msra.mxu0 %v2922
    %3065 = vmatprep.subr.mxu0 0.0
    %3066 = vmatpush1.msra.mxu0 %v2923
    %3067 = vmatprep.subr.mxu0 0.0
    %3068 = vmatpush1.msra.mxu0 %v2924
    %3069 = vmatprep.subr.mxu0 0.0
    %3070 = vmatpush1.msra.mxu0 %v2925
    %3071 = vmatprep.subr.mxu0 0.0
    %3072 = vmatpush1.msra.mxu0 %v2926
    %3073 = vmatprep.subr.mxu0 0.0
    %3074 = vmatpush1.msra.mxu0 %v2927
    %3075 = vmatprep.subr.mxu0 0.0
    %3076 = vmatpush1.msra.mxu0 %v2928
    %3077 = vmatprep.subr.mxu0 0.0
    %3078 = vmatpush1.msra.mxu0 %v2929
    %3079 = vmatprep.subr.mxu0 0.0
    %3080 = vmatpush1.msra.mxu0 %v2930
    %3081 = vmatprep.subr.mxu0 0.0
    %3082 = vmatpush1.msra.mxu0 %v2931
    %3083 = vmatprep.subr.mxu0 0.0
    %3084 = vmatpush1.msra.mxu0 %v2932
    %3085 = vmatprep.subr.mxu0 0.0
    %3086 = vmatpush1.msra.mxu0 %v2933
    %3087 = vmatprep.subr.mxu0 0.0
    %3088 = vmatpush1.msra.mxu0 %v2934
    %3089 = vmatprep.subr.mxu0 0.0
    %3090 = vmatpush1.msra.mxu0 %v2935
    %3091 = vmatprep.subr.mxu0 0.0
    %3092 = vmatpush1.msra.mxu0 %v2936
    %3093 = vmatprep.subr.mxu0 0.0
    %3094 = vmatpush1.msra.mxu0 %v2937
    %3095 = vmatprep.subr.mxu0 0.0
    %3096 = vmatpush1.msra.mxu0 %v2938
    %3097 = vmatprep.subr.mxu0 0.0
    %3098 = vmatpush1.msra.mxu0 %v2939
    %3099 = vmatprep.subr.mxu0 0.0
    %3100 = vmatpush1.msra.mxu0 %v2940
    %3101 = vmatprep.subr.mxu0 0.0
    %3102 = vmatpush1.msra.mxu0 %v2941
    %3103 = vmatprep.subr.mxu0 0.0
    %3104 = vmatpush1.msra.mxu0 %v2942
    %3105 = vmatprep.subr.mxu0 0.0
    %3106 = vmatpush1.msra.mxu0 %v2943
    %3107 = vmatprep.subr.mxu0 0.0
    %3108 = vmatpush1.msra.mxu0 %v2944
    %3109 = vmatprep.subr.mxu0 0.0
    %3110 = vmatpush1.msra.mxu0 %v2945
    %3111 = vmatprep.subr.mxu0 0.0
    %3112 = vmatpush1.msra.mxu0 %v2946
    %3113 = vmatprep.subr.mxu0 0.0
    %3114 = vmatpush1.msra.mxu0 %v2947
    %3115 = vmatprep.mubr.f32.mxu0 %v2909
    %3116 = vmatmul.mubr.f32.gmra.mrb[0].mxu0 %v2908
    %v3117 = vpop.f32.mrb[0].mxu0
    %v3118 = vadd.f32 %v3049, %v3117
    %v3119 = vpop.f32.mrb[0].mxu0
    %3120 = vdwg.mxu0
    %3121 = vmatprep.subr.mxu0 0.0
    %3122 = vmatpush1.msra.mxu0 %v2948
    %3123 = vmatprep.subr.mxu0 0.0
    %3124 = vmatpush1.msra.mxu0 %v2949
    %3125 = vmatprep.subr.mxu0 0.0
    %3126 = vmatpush1.msra.mxu0 %v2950
    %3127 = vmatprep.subr.mxu0 0.0
    %3128 = vmatpush1.msra.mxu0 %v2951
    %3129 = vmatprep.subr.mxu0 0.0
    %3130 = vmatpush1.msra.mxu0 %v2952
    %3131 = vmatprep.subr.mxu0 0.0
    %3132 = vmatpush1.msra.mxu0 %v2953
    %3133 = vmatprep.subr.mxu0 0.0
    %3134 = vmatpush1.msra.mxu0 %v2954
    %3135 = vmatprep.subr.mxu0 0.0
    %3136 = vmatpush1.msra.mxu0 %v2955
    %3137 = vmatprep.subr.mxu0 0.0
    %3138 = vmatpush1.msra.mxu0 %v2956
    %3139 = vmatprep.subr.mxu0 0.0
    %3140 = vmatpush1.msra.mxu0 %v2957
    %3141 = vmatprep.subr.mxu0 0.0
    %3142 = vmatpush1.msra.mxu0 %v2958
    %3143 = vmatprep.subr.mxu0 0.0
    %3144 = vmatpush1.msra.mxu0 %v2959
    %3145 = vmatprep.subr.mxu0 0.0
    %3146 = vmatpush1.msra.mxu0 %v2960
    %3147 = vmatprep.subr.mxu0 0.0
    %3148 = vmatpush1.msra.mxu0 %v2961
    %3149 = vmatprep.subr.mxu0 0.0
    %3150 = vmatpush1.msra.mxu0 %v2962
    %3151 = vmatprep.subr.mxu0 0.0
    %3152 = vmatpush1.msra.mxu0 %v2963
    %3153 = vmatprep.subr.mxu0 0.0
    %3154 = vmatpush1.msra.mxu0 %v2964
    %3155 = vmatprep.subr.mxu0 0.0
    %3156 = vmatpush1.msra.mxu0 %v2965
    %3157 = vmatprep.subr.mxu0 0.0
    %3158 = vmatpush1.msra.mxu0 %v2966
    %3159 = vmatprep.subr.mxu0 0.0
    %3160 = vmatpush1.msra.mxu0 %v2967
    %3161 = vmatprep.subr.mxu0 0.0
    %3162 = vmatpush1.msra.mxu0 %v2968
    %3163 = vmatprep.subr.mxu0 0.0
    %3164 = vmatpush1.msra.mxu0 %v2969
    %3165 = vmatprep.subr.mxu0 0.0
    %3166 = vmatpush1.msra.mxu0 %v2970
    %3167 = vmatprep.subr.mxu0 0.0
    %3168 = vmatpush1.msra.mxu0 %v2971
    %3169 = vmatprep.subr.mxu0 0.0
    %3170 = vmatpush1.msra.mxu0 %v2972
    %3171 = vmatprep.subr.mxu0 0.0
    %3172 = vmatpush1.msra.mxu0 %v2973
    %3173 = vmatprep.subr.mxu0 0.0
    %3174 = vmatpush1.msra.mxu0 %v2974
    %3175 = vmatprep.subr.mxu0 0.0
    %3176 = vmatpush1.msra.mxu0 %v2975
    %3177 = vmatprep.subr.mxu0 0.0
    %3178 = vmatpush1.msra.mxu0 %v2976
    %3179 = vmatprep.subr.mxu0 0.0
    %3180 = vmatpush1.msra.mxu0 %v2977
    %3181 = vmatprep.subr.mxu0 0.0
    %3182 = vmatpush1.msra.mxu0 %v2978
    %3183 = vmatprep.subr.mxu0 0.0
    %3184 = vmatpush1.msra.mxu0 %v2979
    %3185 = vmatprep.mubr.f32.mxu0 %v2911
    %3186 = vmatmul.mubr.f32.gmra.mrb[0].mxu0 %v2910
    %v3187 = vpop.f32.mrb[0].mxu0
    %v3188 = vadd.f32 %v3118, %v3187
    %v3189 = vpop.f32.mrb[0].mxu0
    %3190 = vdwg.mxu0
    %3191 = vmatprep.subr.mxu0 0.0
    %3192 = vmatpush1.msra.mxu0 %v2980
    %3193 = vmatprep.subr.mxu0 0.0
    %3194 = vmatpush1.msra.mxu0 %v2981
    %3195 = vmatprep.subr.mxu0 0.0
    %3196 = vmatpush1.msra.mxu0 %v2982
    %3197 = vmatprep.subr.mxu0 0.0
    %3198 = vmatpush1.msra.mxu0 %v2983
    %3199 = vmatprep.subr.mxu0 0.0
    %3200 = vmatpush1.msra.mxu0 %v2984
    %3201 = vmatprep.subr.mxu0 0.0
    %3202 = vmatpush1.msra.mxu0 %v2985
    %3203 = vmatprep.subr.mxu0 0.0
    %3204 = vmatpush1.msra.mxu0 %v2986
    %3205 = vmatprep.subr.mxu0 0.0
    %3206 = vmatpush1.msra.mxu0 %v2987
    %3207 = vmatprep.subr.mxu0 0.0
    %3208 = vmatpush1.msra.mxu0 %v2988
    %3209 = vmatprep.subr.mxu0 0.0
    %3210 = vmatpush1.msra.mxu0 %v2989
    %3211 = vmatprep.subr.mxu0 0.0
    %3212 = vmatpush1.msra.mxu0 %v2990
    %3213 = vmatprep.subr.mxu0 0.0
    %3214 = vmatpush1.msra.mxu0 %v2991
    %3215 = vmatprep.subr.mxu0 0.0
    %3216 = vmatpush1.msra.mxu0 %v2992
    %3217 = vmatprep.subr.mxu0 0.0
    %3218 = vmatpush1.msra.mxu0 %v2993
    %3219 = vmatprep.subr.mxu0 0.0
    %3220 = vmatpush1.msra.mxu0 %v2994
    %3221 = vmatprep.subr.mxu0 0.0
    %3222 = vmatpush1.msra.mxu0 %v2995
    %3223 = vmatprep.subr.mxu0 0.0
    %3224 = vmatpush1.msra.mxu0 %v2996
    %3225 = vmatprep.subr.mxu0 0.0
    %3226 = vmatpush1.msra.mxu0 %v2997
    %3227 = vmatprep.subr.mxu0 0.0
    %3228 = vmatpush1.msra.mxu0 %v2998
    %3229 = vmatprep.subr.mxu0 0.0
    %3230 = vmatpush1.msra.mxu0 %v2999
    %3231 = vmatprep.subr.mxu0 0.0
    %3232 = vmatpush1.msra.mxu0 %v3000
    %3233 = vmatprep.subr.mxu0 0.0
    %3234 = vmatpush1.msra.mxu0 %v3001
    %3235 = vmatprep.subr.mxu0 0.0
    %3236 = vmatpush1.msra.mxu0 %v3002
    %3237 = vmatprep.subr.mxu0 0.0
    %3238 = vmatpush1.msra.mxu0 %v3003
    %3239 = vmatprep.subr.mxu0 0.0
    %3240 = vmatpush1.msra.mxu0 %v3004
    %3241 = vmatprep.subr.mxu0 0.0
    %3242 = vmatpush1.msra.mxu0 %v3005
    %3243 = vmatprep.subr.mxu0 0.0
    %3244 = vmatpush1.msra.mxu0 %v3006
    %3245 = vmatprep.subr.mxu0 0.0
    %3246 = vmatpush1.msra.mxu0 %v3007
    %3247 = vmatprep.subr.mxu0 0.0
    %3248 = vmatpush1.msra.mxu0 %v3008
    %3249 = vmatprep.subr.mxu0 0.0
    %3250 = vmatpush1.msra.mxu0 %v3009
    %3251 = vmatprep.subr.mxu0 0.0
    %3252 = vmatpush1.msra.mxu0 %v3010
    %3253 = vmatprep.subr.mxu0 0.0
    %3254 = vmatpush1.msra.mxu0 %v3011
    %3255 = vmatprep.mubr.f32.mxu0 %v2913
    %3256 = vmatmul.mubr.f32.gmra.mrb[0].mxu0 %v2912
    %v3257 = vpop.f32.mrb[0].mxu0
    %v3258 = vadd.f32 %v3188, %v3257
    %v3259 = vpop.f32.mrb[0].mxu0
    %3260 = vdwg.mxu0
    %3261 = vmatprep.subr.mxu0 0.0
    %3262 = vmatpush1.msra.mxu0 %v3012
    %3263 = vmatprep.subr.mxu0 0.0
    %3264 = vmatpush1.msra.mxu0 %v3013
    %3265 = vmatprep.subr.mxu0 0.0
    %3266 = vmatpush1.msra.mxu0 %v3014
    %3267 = vmatprep.subr.mxu0 0.0
    %3268 = vmatpush1.msra.mxu0 %v3015
    %3269 = vmatprep.subr.mxu0 0.0
    %3270 = vmatpush1.msra.mxu0 %v3016
    %3271 = vmatprep.subr.mxu0 0.0
    %3272 = vmatpush1.msra.mxu0 %v3017
    %3273 = vmatprep.subr.mxu0 0.0
    %3274 = vmatpush1.msra.mxu0 %v3018
    %3275 = vmatprep.subr.mxu0 0.0
    %3276 = vmatpush1.msra.mxu0 %v3019
    %3277 = vmatprep.subr.mxu0 0.0
    %3278 = vmatpush1.msra.mxu0 %v3020
    %3279 = vmatprep.subr.mxu0 0.0
    %3280 = vmatpush1.msra.mxu0 %v3021
    %3281 = vmatprep.subr.mxu0 0.0
    %3282 = vmatpush1.msra.mxu0 %v3022
    %3283 = vmatprep.subr.mxu0 0.0
    %3284 = vmatpush1.msra.mxu0 %v3023
    %3285 = vmatprep.subr.mxu0 0.0
    %3286 = vmatpush1.msra.mxu0 %v3024
    %3287 = vmatprep.subr.mxu0 0.0
    %3288 = vmatpush1.msra.mxu0 %v3025
    %3289 = vmatprep.subr.mxu0 0.0
    %3290 = vmatpush1.msra.mxu0 %v3026
    %3291 = vmatprep.subr.mxu0 0.0
    %3292 = vmatpush1.msra.mxu0 %v3027
    %3293 = vmatprep.subr.mxu0 0.0
    %3294 = vmatpush1.msra.mxu0 %v3028
    %3295 = vmatprep.subr.mxu0 0.0
    %3296 = vmatpush1.msra.mxu0 %v3029
    %3297 = vmatprep.subr.mxu0 0.0
    %3298 = vmatpush1.msra.mxu0 %v3030
    %3299 = vmatprep.subr.mxu0 0.0
    %3300 = vmatpush1.msra.mxu0 %v3031
    %3301 = vmatprep.subr.mxu0 0.0
    %3302 = vmatpush1.msra.mxu0 %v3032
    %3303 = vmatprep.subr.mxu0 0.0
    %3304 = vmatpush1.msra.mxu0 %v3033
    %3305 = vmatprep.subr.mxu0 0.0
    %3306 = vmatpush1.msra.mxu0 %v3034
    %3307 = vmatprep.subr.mxu0 0.0
    %3308 = vmatpush1.msra.mxu0 %v3035
    %3309 = vmatprep.subr.mxu0 0.0
    %3310 = vmatpush1.msra.mxu0 %v3036
    %3311 = vmatprep.subr.mxu0 0.0
    %3312 = vmatpush1.msra.mxu0 %v3037
    %3313 = vmatprep.subr.mxu0 0.0
    %3314 = vmatpush1.msra.mxu0 %v3038
    %3315 = vmatprep.subr.mxu0 0.0
    %3316 = vmatpush1.msra.mxu0 %v3039
    %3317 = vmatprep.subr.mxu0 0.0
    %3318 = vmatpush1.msra.mxu0 %v3040
    %3319 = vmatprep.subr.mxu0 0.0
    %3320 = vmatpush1.msra.mxu0 %v3041
    %3321 = vmatprep.subr.mxu0 0.0
    %3322 = vmatpush1.msra.mxu0 %v3042
    %3323 = vmatprep.subr.mxu0 0.0
    %3324 = vmatpush1.msra.mxu0 %v3043
    %3325 = vmatprep.mubr.f32.mxu0 %v2915
    %3326 = vmatmul.mubr.f32.gmra.mrb[0].mxu0 %v2914
    %v3327 = vpop.f32.mrb[0].mxu0
    %v3328 = vadd.f32 %v3258, %v3327
    %v3329 = vpop.f32.mrb[0].mxu0
    %3330 = vdwg.mxu0
    %3331 = vst [vmem:[#allocation14] sm:$0xff] %v3328
    // Predicated region
    $region58: #{_forward_impl.1} parent=1 // pred_check
      _
    $region59: #{_forward_impl.1} parent=1 // pred_check_branch
      %3333 = sbr.rel (0) target = $region61
    $region60: #{_forward_impl.1} parent=1 // pred_region
      %s3335 = ssub.s32 128, 128
      %3336 = vsyncadd [#allocation4], %s3335
      %s3338 = sshll.u32 [#allocation14], 4
      %s3339 = int_to_ptr.vmem [resolvable:$true] %s3338
      %3341 = dma.vmem_to_hbm [thread:$0]  %s3339, 128, %s7, [#allocation4]
    $region61: #{_forward_impl.1} parent=1 // pred_fallthru
      _
    // Predicated region
    $region62: #{_forward_impl.1} parent=1 // pred_check
      _
    $region63: #{_forward_impl.1} parent=1 // pred_check_branch
      %3343 = sbr.rel (0) target = $region65
    $region64: #{_forward_impl.1} parent=1 // pred_region
      %3344 = dma.done [#allocation4], 128
    $region65: #{_forward_impl.1} parent=1 // pred_fallthru
      _
    %3345 = vsyncpa [#allocation3], 1
    %3346 = vsyncpa [#allocation6], 1
    %3347 = vsyncpa [#allocation9], 1
    %3348 = vsyncpa [#allocation12], 1
    %3349 = vsyncpa [#allocation4], 1

</llo_original>
